<compile_context>
chip_gen: v7x
topology: tpu7x:2x2x1
jax: 0.10.0
libtpu: 0.0.40
codegen_flags: <defaults>
</compile_context>

<pallas_src>
import math

import numpy as np
import jax
import jax.numpy as jnp
from jax.experimental import pallas as pl
from jax.experimental.pallas import tpu as pltpu

# --------------------------------------------------------------------------
# Deterministic "model plan" (stand-in for the .json file).
# --------------------------------------------------------------------------
ARCH = {
    "input_size": [16, 16],
    "convolutional_layers": [
        {"out_channels": 8, "conv_kernel_size": 3, "conv_stride": 1,
         "padding": 1, "pool_kernel_size": 2, "pool_stride": 2,
         "dropout_rate": 0.1},
        {"out_channels": 16, "conv_kernel_size": 3, "conv_stride": 1,
         "padding": 1, "pool_kernel_size": 2, "pool_stride": 2,
         "dropout_rate": 0.1},
    ],
    "linear_layers": [
        {"out_channels": 32, "dropout_rate": 0.2},
    ],
}
NUM_CLASSES = 102
HEAD_PAD = ((NUM_CLASSES + 127) // 128) * 128      # 102 -> 128 (lane-dense)
BN_EPS = 1e-5

_ROW_TILE_CAP = 256                  # images (rows) per grid step
_VMEM_LIMIT_BYTES = 48 * 1024 * 1024  # > v5e 16MB default; < v7x 64MB physical


def _pick_batch_tile(B):
    """Images per grid step: multiple of 8, <= cap, >=2 grid steps for B>=16
    (keeps both v7x TensorCores busy); tiny batches run as one step."""
    if B < 16:
        return B
    if B >= 2 * _ROW_TILE_CAP:
        return _ROW_TILE_CAP
    half = (B + 1) // 2
    return max(8, ((half + 7) // 8) * 8)


# --------------------------------------------------------------------------
# Init-time folding: Conv2d (stride 1, zero padding) + 2x2/2 MaxPool parity
# grouping as ONE dense matrix.
# --------------------------------------------------------------------------
def _conv_as_matmul(w, H, W, pad, input_chw):
    """w: (ks, ks, cin, cout).  Returns M of shape (H*W*cin, 4*HP*WP*cout)
    such that for a flattened image x (CHW order if input_chw else HWC),
        (x @ M)[p*S + (hp*WP + wp)*cout + c]   with S = HP*WP*cout
    equals conv(x)[2*hp + p//2, 2*wp + p%2, c] (no bias).  The 2x2 max pool
    is then an elementwise max over the four 128-aligned slabs p = 0..3."""
    ks, _, cin, cout = w.shape
    Ho = H + 2 * pad - ks + 1
    Wo = W + 2 * pad - ks + 1
    assert Ho % 2 == 0 and Wo % 2 == 0, "conv output must be even for 2x2 pool"
    HP, WP = Ho // 2, Wo // 2
    S = HP * WP * cout
    M = np.zeros((H * W * cin, 4 * S), np.float32)
    for oh in range(Ho):
        for ow in range(Wo):
            p = 2 * (oh % 2) + (ow % 2)
            col = p * S + ((oh // 2) * WP + (ow // 2)) * cout
            for kh in range(ks):
                ih = oh - pad + kh
                if ih < 0 or ih >= H:
                    continue
                for kw in range(ks):
                    iw = ow - pad + kw
                    if iw < 0 or iw >= W:
                        continue
                    if input_chw:
                        for ci in range(cin):
                            M[ci * H * W + ih * W + iw,
                              col:col + cout] += w[kh, kw, ci]
                    else:
                        r0 = (ih * W + iw) * cin
                        M[r0:r0 + cin, col:col + cout] += w[kh, kw]
    return M


def _fold_bn(gamma, beta, mean, var):
    scale = gamma / np.sqrt(var + BN_EPS)
    shift = beta - mean * scale
    return scale, shift


def init_params(seed=0):
    rng = np.random.default_rng(seed)
    params = {"conv": [], "linear": [], "head": None}

    cin = 3
    H, W = ARCH["input_size"]
    input_chw = True      # first conv consumes the NCHW tensor flattened as-is
    for d in ARCH["convolutional_layers"]:
        assert d["conv_stride"] == 1
        assert d["pool_kernel_size"] == 2 and d["pool_stride"] == 2
        cout, ks, pad = d["out_channels"], d["conv_kernel_size"], d["padding"]
        fan_in = cin * ks * ks
        w = rng.standard_normal((ks, ks, cin, cout), np.float32) / math.sqrt(fan_in)
        b = 0.01 * rng.standard_normal((cout,), np.float32)
        gamma = 1.0 + 0.1 * rng.standard_normal((cout,), np.float32)
        beta = 0.1 * rng.standard_normal((cout,), np.float32)
        scale, shift = _fold_bn(gamma, beta, np.zeros(cout, np.float32),
                                np.ones(cout, np.float32))
        M = _conv_as_matmul(w, H, W, pad, input_chw)
        Ho = H + 2 * pad - ks + 1
        Wo = W + 2 * pad - ks + 1
        HP, WP = Ho // 2, Wo // 2
        # Per-column (hp, wp, c) affine applied AFTER the max; conv bias folded
        # into the shift (valid: per-channel constant commutes with max).
        s_vec = np.tile(scale, HP * WP)[None, :].astype(np.float32)
        t_vec = np.tile(b * scale + shift, HP * WP)[None, :].astype(np.float32)
        params["conv"].append((jnp.asarray(M), jnp.asarray(s_vec),
                               jnp.asarray(t_vec)))
        cin, H, W, input_chw = cout, HP, WP, False

    feat = cin * H * W
    first_linear = True
    for d in ARCH["linear_layers"]:
        out_dim = d["out_channels"]
        w = rng.standard_normal((feat, out_dim), np.float32) / math.sqrt(feat)
        if first_linear:
            # torch.nn.Flatten flattens NCHW in (C,H,W) order; our activation
            # is HWC-flattened, so fold the CHW->HWC permutation into the rows.
            w = (w.reshape(cin, H, W, out_dim)
                   .transpose(1, 2, 0, 3).reshape(feat, out_dim))
            first_linear = False
        b = 0.01 * rng.standard_normal((out_dim,), np.float32)
        gamma = 1.0 + 0.1 * rng.standard_normal((out_dim,), np.float32)
        beta = 0.1 * rng.standard_normal((out_dim,), np.float32)
        scale, shift = _fold_bn(gamma, beta, np.zeros(out_dim, np.float32),
                                np.ones(out_dim, np.float32))
        w_f = (w * scale[None, :]).astype(np.float32)          # BN folded in
        b_f = ((b * scale + shift)[None, :]).astype(np.float32)
        params["linear"].append((jnp.asarray(w_f), jnp.asarray(b_f)))
        feat = out_dim

    wh = rng.standard_normal((feat, NUM_CLASSES), np.float32) / math.sqrt(feat)
    bh = 0.01 * rng.standard_normal((NUM_CLASSES,), np.float32)
    wh_p = np.zeros((feat, HEAD_PAD), np.float32)
    wh_p[:, :NUM_CLASSES] = wh
    bh_p = np.zeros((1, HEAD_PAD), np.float32)
    bh_p[0, :NUM_CLASSES] = bh
    params["head"] = (jnp.asarray(wh_p), jnp.asarray(bh_p))
    return params


# --------------------------------------------------------------------------
# Single fused kernel: [conv+pool+BN+ReLU]* -> [linear+BN+ReLU]* -> head.
# --------------------------------------------------------------------------
def _make_fused_kernel(pool_slab_sizes, n_linear):
    """pool_slab_sizes[i] = HP*WP*Cout of conv block i (multiple of 128)."""

    def kernel(*refs):
        o_ref = refs[-1]
        h = refs[0][...]                                   # (TB, feat_in) f32
        idx = 1
        for S in pool_slab_sizes:
            m_ref, s_ref, t_ref = refs[idx:idx + 3]
            idx += 3
            # Conv2d (+implicit zero padding) as one lane-dense matmul whose
            # columns are grouped by 2x2 pooling parity.
            c = jnp.dot(h, m_ref[...], preferred_element_type=jnp.float32)
            # MaxPool2d(2,2): elementwise max over four 128-aligned lane slabs.
            m = jnp.maximum(jnp.maximum(c[:, 0:S], c[:, S:2 * S]),
                            jnp.maximum(c[:, 2 * S:3 * S], c[:, 3 * S:4 * S]))
            # BatchNorm2d (eval, bias folded) + ReLU.  Dropout2d: identity.
            h = jnp.maximum(m * s_ref[...] + t_ref[...], 0.0)
        for _ in range(n_linear):
            w_ref, b_ref = refs[idx:idx + 2]
            idx += 2
            # Linear + BatchNorm1d (eval, folded) + ReLU.  Dropout: identity.
            h = jnp.maximum(
                jnp.dot(h, w_ref[...], preferred_element_type=jnp.float32)
                + b_ref[...], 0.0)
        wh_ref, bh_ref = refs[idx:idx + 2]
        o_ref[...] = (jnp.dot(h, wh_ref[...],
                              preferred_element_type=jnp.float32)
                      + bh_ref[...])

    return kernel


# --------------------------------------------------------------------------
# Forward pass (mirrors Model.forward, eval mode).
# --------------------------------------------------------------------------
def forward(params, x_nchw):
    B = x_nchw.shape[0]
    # CHW flattening matches the first conv matrix's row order -> free reshape.
    x = x_nchw.reshape(B, -1).astype(jnp.float32)
    feat_in = x.shape[1]

    tb = _pick_batch_tile(B)
    Bp = ((B + tb - 1) // tb) * tb
    if Bp != B:
        x = jnp.pad(x, ((0, Bp - B), (0, 0)))
    grid = (Bp // tb,)

    def full(a):
        return pl.BlockSpec(a.shape, lambda i: (0, 0))

    args = [x]
    in_specs = [pl.BlockSpec((tb, feat_in), lambda i: (i, 0))]
    pool_slabs = []
    for (M, s, t) in params["conv"]:
        args += [M, s, t]
        in_specs += [full(M), full(s), full(t)]
        pool_slabs.append(s.shape[1])
    for (w, b) in params["linear"]:
        args += [w, b]
        in_specs += [full(w), full(b)]
    wh, bh = params["head"]
    args += [wh, bh]
    in_specs += [full(wh), full(bh)]

    out = pl.pallas_call(
        _make_fused_kernel(tuple(pool_slabs), len(params["linear"])),
        out_shape=jax.ShapeDtypeStruct((Bp, HEAD_PAD), jnp.float32),
        grid=grid,
        in_specs=in_specs,
        out_specs=pl.BlockSpec((tb, HEAD_PAD), lambda i: (i, 0)),
        compiler_params=pltpu.CompilerParams(
            dimension_semantics=("parallel",),
            vmem_limit_bytes=_VMEM_LIMIT_BYTES),
    )(*args)

    return out[:B, :NUM_CLASSES]


forward_jit = jax.jit(forward)


if __name__ == "__main__":
    params = init_params(0)
    x = jax.random.normal(jax.random.PRNGKey(0),
                          (2, 3, *ARCH["input_size"]), jnp.float32)
    out = jax.block_until_ready(forward_jit(params, x))
    assert out.shape == (2, NUM_CLASSES), out.shape
    assert out.dtype == jnp.float32
    assert bool(jnp.all(jnp.isfinite(out)))
    print("KERNEL_OK")
</pallas_src>

<mosaic_0001>
module attributes {stable_mosaic.version = 11 : i64} {
  func.func @kernel(%arg0: i32, %arg1: memref<2x768xf32, #tpu.memory_space<vmem>>, %arg2: memref<768x2048xf32, #tpu.memory_space<vmem>>, %arg3: memref<1x512xf32, #tpu.memory_space<vmem>>, %arg4: memref<1x512xf32, #tpu.memory_space<vmem>>, %arg5: memref<512x1024xf32, #tpu.memory_space<vmem>>, %arg6: memref<1x256xf32, #tpu.memory_space<vmem>>, %arg7: memref<1x256xf32, #tpu.memory_space<vmem>>, %arg8: memref<256x32xf32, #tpu.memory_space<vmem>>, %arg9: memref<1x32xf32, #tpu.memory_space<vmem>>, %arg10: memref<32x128xf32, #tpu.memory_space<vmem>>, %arg11: memref<1x128xf32, #tpu.memory_space<vmem>>, %arg12: memref<2x128xf32, #tpu.memory_space<vmem>>) attributes {dimension_semantics = [#tpu.dimension_semantics<parallel>], iteration_bounds = array<i64: 1>, scalar_prefetch = 0 : i64, scratch_operands = 0 : i64, tpu.core_type = #tpu.core_type<tc>, window_params = [{transform_indices = @transform_0, window_bounds = array<i64: 2, 768>}, {pipeline_mode = #tpu.pipeline_mode<synchronous>, transform_indices = @transform_1, window_bounds = array<i64: 768, 2048>}, {pipeline_mode = #tpu.pipeline_mode<synchronous>, transform_indices = @transform_2, window_bounds = array<i64: 1, 512>}, {pipeline_mode = #tpu.pipeline_mode<synchronous>, transform_indices = @transform_3, window_bounds = array<i64: 1, 512>}, {pipeline_mode = #tpu.pipeline_mode<synchronous>, transform_indices = @transform_4, window_bounds = array<i64: 512, 1024>}, {pipeline_mode = #tpu.pipeline_mode<synchronous>, transform_indices = @transform_5, window_bounds = array<i64: 1, 256>}, {pipeline_mode = #tpu.pipeline_mode<synchronous>, transform_indices = @transform_6, window_bounds = array<i64: 1, 256>}, {pipeline_mode = #tpu.pipeline_mode<synchronous>, transform_indices = @transform_7, window_bounds = array<i64: 256, 32>}, {pipeline_mode = #tpu.pipeline_mode<synchronous>, transform_indices = @transform_8, window_bounds = array<i64: 1, 32>}, {pipeline_mode = #tpu.pipeline_mode<synchronous>, transform_indices = @transform_9, window_bounds = array<i64: 32, 128>}, {pipeline_mode = #tpu.pipeline_mode<synchronous>, transform_indices = @transform_10, window_bounds = array<i64: 1, 128>}, {transform_indices = @transform_11, window_bounds = array<i64: 2, 128>}]} {
    %c0 = arith.constant 0 : index
    %c0_0 = arith.constant 0 : index
    %0 = vector.load %arg1[%c0, %c0_0] : memref<2x768xf32, #tpu.memory_space<vmem>>, vector<2x768xf32>
    %c0_1 = arith.constant 0 : index
    %c0_2 = arith.constant 0 : index
    %1 = vector.load %arg2[%c0_1, %c0_2] : memref<768x2048xf32, #tpu.memory_space<vmem>>, vector<768x2048xf32>
    %cst = arith.constant dense<0.000000e+00> : vector<2x2048xf32>
    %2 = tpu.matmul %0, %1, %cst {dimension_numbers = #tpu.dot_dimension_numbers<[1], [0], [0], [1], [0, 0, 1, 1], [], []>} : vector<2x768xf32>, vector<768x2048xf32>, vector<2x2048xf32> -> vector<2x2048xf32>
    %3 = vector.extract_strided_slice %2 {offsets = [0, 0], sizes = [2, 512], strides = [1, 1]} : vector<2x2048xf32> to vector<2x512xf32>
    %4 = vector.extract_strided_slice %2 {offsets = [0, 512], sizes = [2, 512], strides = [1, 1]} : vector<2x2048xf32> to vector<2x512xf32>
    %5 = arith.maximumf %3, %4 : vector<2x512xf32>
    %6 = vector.extract_strided_slice %2 {offsets = [0, 1024], sizes = [2, 512], strides = [1, 1]} : vector<2x2048xf32> to vector<2x512xf32>
    %7 = vector.extract_strided_slice %2 {offsets = [0, 1536], sizes = [2, 512], strides = [1, 1]} : vector<2x2048xf32> to vector<2x512xf32>
    %8 = arith.maximumf %6, %7 : vector<2x512xf32>
    %9 = arith.maximumf %5, %8 : vector<2x512xf32>
    %c0_3 = arith.constant 0 : index
    %c0_4 = arith.constant 0 : index
    %10 = vector.load %arg3[%c0_3, %c0_4] : memref<1x512xf32, #tpu.memory_space<vmem>>, vector<1x512xf32>
    %11 = vector.broadcast %10 : vector<1x512xf32> to vector<2x512xf32>
    %12 = arith.mulf %9, %11 : vector<2x512xf32>
    %c0_5 = arith.constant 0 : index
    %c0_6 = arith.constant 0 : index
    %13 = vector.load %arg4[%c0_5, %c0_6] : memref<1x512xf32, #tpu.memory_space<vmem>>, vector<1x512xf32>
    %14 = vector.broadcast %13 : vector<1x512xf32> to vector<2x512xf32>
    %15 = arith.addf %12, %14 : vector<2x512xf32>
    %cst_7 = arith.constant 0.000000e+00 : f32
    %16 = vector.broadcast %cst_7 : f32 to vector<2x512xf32>
    %17 = arith.maximumf %15, %16 : vector<2x512xf32>
    %c0_8 = arith.constant 0 : index
    %c0_9 = arith.constant 0 : index
    %18 = vector.load %arg5[%c0_8, %c0_9] : memref<512x1024xf32, #tpu.memory_space<vmem>>, vector<512x1024xf32>
    %cst_10 = arith.constant dense<0.000000e+00> : vector<2x1024xf32>
    %19 = tpu.matmul %17, %18, %cst_10 {dimension_numbers = #tpu.dot_dimension_numbers<[1], [0], [0], [1], [0, 0, 1, 1], [], []>} : vector<2x512xf32>, vector<512x1024xf32>, vector<2x1024xf32> -> vector<2x1024xf32>
    %20 = vector.extract_strided_slice %19 {offsets = [0, 0], sizes = [2, 256], strides = [1, 1]} : vector<2x1024xf32> to vector<2x256xf32>
    %21 = vector.extract_strided_slice %19 {offsets = [0, 256], sizes = [2, 256], strides = [1, 1]} : vector<2x1024xf32> to vector<2x256xf32>
    %22 = arith.maximumf %20, %21 : vector<2x256xf32>
    %23 = vector.extract_strided_slice %19 {offsets = [0, 512], sizes = [2, 256], strides = [1, 1]} : vector<2x1024xf32> to vector<2x256xf32>
    %24 = vector.extract_strided_slice %19 {offsets = [0, 768], sizes = [2, 256], strides = [1, 1]} : vector<2x1024xf32> to vector<2x256xf32>
    %25 = arith.maximumf %23, %24 : vector<2x256xf32>
    %26 = arith.maximumf %22, %25 : vector<2x256xf32>
    %c0_11 = arith.constant 0 : index
    %c0_12 = arith.constant 0 : index
    %27 = vector.load %arg6[%c0_11, %c0_12] : memref<1x256xf32, #tpu.memory_space<vmem>>, vector<1x256xf32>
    %28 = vector.broadcast %27 : vector<1x256xf32> to vector<2x256xf32>
    %29 = arith.mulf %26, %28 : vector<2x256xf32>
    %c0_13 = arith.constant 0 : index
    %c0_14 = arith.constant 0 : index
    %30 = vector.load %arg7[%c0_13, %c0_14] : memref<1x256xf32, #tpu.memory_space<vmem>>, vector<1x256xf32>
    %31 = vector.broadcast %30 : vector<1x256xf32> to vector<2x256xf32>
    %32 = arith.addf %29, %31 : vector<2x256xf32>
    %cst_15 = arith.constant 0.000000e+00 : f32
    %33 = vector.broadcast %cst_15 : f32 to vector<2x256xf32>
    %34 = arith.maximumf %32, %33 : vector<2x256xf32>
    %c0_16 = arith.constant 0 : index
    %c0_17 = arith.constant 0 : index
    %35 = vector.load %arg8[%c0_16, %c0_17] : memref<256x32xf32, #tpu.memory_space<vmem>>, vector<256x32xf32>
    %cst_18 = arith.constant dense<0.000000e+00> : vector<2x32xf32>
    %36 = tpu.matmul %34, %35, %cst_18 {dimension_numbers = #tpu.dot_dimension_numbers<[1], [0], [0], [1], [0, 0, 1, 1], [], []>} : vector<2x256xf32>, vector<256x32xf32>, vector<2x32xf32> -> vector<2x32xf32>
    %c0_19 = arith.constant 0 : index
    %c0_20 = arith.constant 0 : index
    %37 = vector.load %arg9[%c0_19, %c0_20] : memref<1x32xf32, #tpu.memory_space<vmem>>, vector<1x32xf32>
    %38 = vector.broadcast %37 : vector<1x32xf32> to vector<2x32xf32>
    %39 = arith.addf %36, %38 : vector<2x32xf32>
    %cst_21 = arith.constant 0.000000e+00 : f32
    %40 = vector.broadcast %cst_21 : f32 to vector<2x32xf32>
    %41 = arith.maximumf %39, %40 : vector<2x32xf32>
    %c0_22 = arith.constant 0 : index
    %c0_23 = arith.constant 0 : index
    %42 = vector.load %arg10[%c0_22, %c0_23] : memref<32x128xf32, #tpu.memory_space<vmem>>, vector<32x128xf32>
    %cst_24 = arith.constant dense<0.000000e+00> : vector<2x128xf32>
    %43 = tpu.matmul %41, %42, %cst_24 {dimension_numbers = #tpu.dot_dimension_numbers<[1], [0], [0], [1], [0, 0, 1, 1], [], []>} : vector<2x32xf32>, vector<32x128xf32>, vector<2x128xf32> -> vector<2x128xf32>
    %c0_25 = arith.constant 0 : index
    %c0_26 = arith.constant 0 : index
    %44 = vector.load %arg11[%c0_25, %c0_26] : memref<1x128xf32, #tpu.memory_space<vmem>>, vector<1x128xf32>
    %45 = vector.broadcast %44 : vector<1x128xf32> to vector<2x128xf32>
    %46 = arith.addf %43, %45 : vector<2x128xf32>
    %c0_27 = arith.constant 0 : index
    %c0_28 = arith.constant 0 : index
    %47 = vector.load %arg12[%c0_27, %c0_28] : memref<2x128xf32, #tpu.memory_space<vmem>>, vector<2x128xf32>
    tpu.vector_store %arg12[%c0_27, %c0_28], %46 {strides = array<i32>} : memref<2x128xf32, #tpu.memory_space<vmem>>, vector<2x128xf32>,
    return
  }
  func.func @transform_0(%arg0: i32) -> (i32, i32) {
    %c0_i32 = arith.constant 0 : i32
    %c0_i32_0 = arith.constant 0 : i32
    return %arg0, %c0_i32 : i32, i32
  }
  func.func @transform_1(%arg0: i32) -> (i32, i32) {
    %c0_i32 = arith.constant 0 : i32
    %c0_i32_0 = arith.constant 0 : i32
    %c0_i32_1 = arith.constant 0 : i32
    return %c0_i32, %c0_i32_0 : i32, i32
  }
  func.func @transform_2(%arg0: i32) -> (i32, i32) {
    %c0_i32 = arith.constant 0 : i32
    %c0_i32_0 = arith.constant 0 : i32
    %c0_i32_1 = arith.constant 0 : i32
    return %c0_i32, %c0_i32_0 : i32, i32
  }
  func.func @transform_3(%arg0: i32) -> (i32, i32) {
    %c0_i32 = arith.constant 0 : i32
    %c0_i32_0 = arith.constant 0 : i32
    %c0_i32_1 = arith.constant 0 : i32
    return %c0_i32, %c0_i32_0 : i32, i32
  }
  func.func @transform_4(%arg0: i32) -> (i32, i32) {
    %c0_i32 = arith.constant 0 : i32
    %c0_i32_0 = arith.constant 0 : i32
    %c0_i32_1 = arith.constant 0 : i32
    return %c0_i32, %c0_i32_0 : i32, i32
  }
  func.func @transform_5(%arg0: i32) -> (i32, i32) {
    %c0_i32 = arith.constant 0 : i32
    %c0_i32_0 = arith.constant 0 : i32
    %c0_i32_1 = arith.constant 0 : i32
    return %c0_i32, %c0_i32_0 : i32, i32
  }
  func.func @transform_6(%arg0: i32) -> (i32, i32) {
    %c0_i32 = arith.constant 0 : i32
    %c0_i32_0 = arith.constant 0 : i32
    %c0_i32_1 = arith.constant 0 : i32
    return %c0_i32, %c0_i32_0 : i32, i32
  }
  func.func @transform_7(%arg0: i32) -> (i32, i32) {
    %c0_i32 = arith.constant 0 : i32
    %c0_i32_0 = arith.constant 0 : i32
    %c0_i32_1 = arith.constant 0 : i32
    return %c0_i32, %c0_i32_0 : i32, i32
  }
  func.func @transform_8(%arg0: i32) -> (i32, i32) {
    %c0_i32 = arith.constant 0 : i32
    %c0_i32_0 = arith.constant 0 : i32
    %c0_i32_1 = arith.constant 0 : i32
    return %c0_i32, %c0_i32_0 : i32, i32
  }
  func.func @transform_9(%arg0: i32) -> (i32, i32) {
    %c0_i32 = arith.constant 0 : i32
    %c0_i32_0 = arith.constant 0 : i32
    %c0_i32_1 = arith.constant 0 : i32
    return %c0_i32, %c0_i32_0 : i32, i32
  }
  func.func @transform_10(%arg0: i32) -> (i32, i32) {
    %c0_i32 = arith.constant 0 : i32
    %c0_i32_0 = arith.constant 0 : i32
    %c0_i32_1 = arith.constant 0 : i32
    return %c0_i32, %c0_i32_0 : i32, i32
  }
  func.func @transform_11(%arg0: i32) -> (i32, i32) {
    %c0_i32 = arith.constant 0 : i32
    %c0_i32_0 = arith.constant 0 : i32
    return %arg0, %c0_i32 : i32, i32
  }
}

</mosaic_0001>

<llo_original>
// kernel: forward.1
$region0: #{forward.1}
  #allocation0 [shape = 'u32[]', space=smem, size = 0x4, offset = 0x4, fixed_abs, tag = 'smem constant byte address 0x4 - core index']
  #allocation1 [shape = 'u32[144,128]{1,0:T(1,128)}', space=vmem, size = 0x12000, scoped, tag = 'internal scratch']
  %s0 = inlined_call_operand.vmem [shape: f32[2,768], index: 0, kind: input, shape index: {}]
  %s1 = inlined_call_operand.hbm [shape: f32[768,2048], index: 1, kind: input, shape index: {}]
  %s2 = inlined_call_operand.hbm [shape: f32[1,512], index: 2, kind: input, shape index: {}]
  %s3 = inlined_call_operand.hbm [shape: f32[1,512], index: 3, kind: input, shape index: {}]
  %s4 = inlined_call_operand.hbm [shape: f32[512,1024], index: 4, kind: input, shape index: {}]
  %s5 = inlined_call_operand.hbm [shape: f32[1,256], index: 5, kind: input, shape index: {}]
  %s6 = inlined_call_operand.hbm [shape: f32[1,256], index: 6, kind: input, shape index: {}]
  %s7 = inlined_call_operand.vmem [shape: f32[256,32], index: 7, kind: input, shape index: {}]
  %s8 = inlined_call_operand.hbm [shape: f32[1,32], index: 8, kind: input, shape index: {}]
  %s9 = inlined_call_operand.hbm [shape: f32[32,128], index: 9, kind: input, shape index: {}]
  %s10 = inlined_call_operand.hbm [shape: f32[1,128], index: 10, kind: input, shape index: {}]
  %s11 = inlined_call_operand.hbm [shape: f32[2,128], index: 11, kind: output, shape index: {}]
  %s12 = sld [smem:[#allocation0]]
  $region90: #{forward.1} parent=0
    _
  %s14 = ssub.s32 1, %s12
  %s15 = scalar_select 0, %s14, %s12
  $region1: #{forward.1} parent=0
    #allocation2 [shape = 'u8[6291456]{0}', space=vmem, size = 0x600000, scoped, tag = 'input window, operand 1, single buffered']
    #allocation3 [shape = 's32[1]{0}', space=sflag, size = 0x4, scoped, tag = 'scoped memory for forward.1']
    #allocation4 [shape = 's32[1]{0}', space=sflag, size = 0x4, scoped, tag = 'scoped memory for forward.1']
    #allocation5 [shape = 'u8[2048]{0}', space=vmem, size = 0x800, scoped, tag = 'input window, operand 2, single buffered']
    #allocation6 [shape = 's32[1]{0}', space=sflag, size = 0x4, scoped, tag = 'scoped memory for forward.1']
    #allocation7 [shape = 'u8[2048]{0}', space=vmem, size = 0x800, scoped, tag = 'input window, operand 3, single buffered']
    #allocation8 [shape = 'u8[2097152]{0}', space=vmem, size = 0x200000, scoped, tag = 'input window, operand 4, single buffered']
    #allocation9 [shape = 's32[1]{0}', space=sflag, size = 0x4, scoped, tag = 'scoped memory for forward.1']
    #allocation10 [shape = 'u8[1024]{0}', space=vmem, size = 0x400, scoped, tag = 'input window, operand 5, single buffered']
    #allocation11 [shape = 'u8[1024]{0}', space=vmem, size = 0x400, scoped, tag = 'input window, operand 6, single buffered']
    #allocation12 [shape = 's32[1]{0}', space=sflag, size = 0x4, scoped, tag = 'scoped memory for forward.1']
    #allocation13 [shape = 'u8[512]{0}', space=vmem, size = 0x400, scoped, tag = 'input window, operand 8, single buffered']
    #allocation14 [shape = 'u8[16384]{0}', space=vmem, size = 0x4000, scoped, tag = 'input window, operand 9, single buffered']
    #allocation15 [shape = 's32[1]{0}', space=sflag, size = 0x4, scoped, tag = 'scoped memory for forward.1']
    #allocation16 [shape = 'u8[512]{0}', space=vmem, size = 0x400, scoped, tag = 'input window, operand 10, single buffered']
    #allocation17 [shape = 'u8[1024]{0}', space=vmem, size = 0x400, scoped, tag = 'output window, operand 0, single buffered']
    %16 = vsyncpa [#allocation3], 0
    %17 = vsyncpa [#allocation6], 0
    %18 = vsyncpa [#allocation9], 0
    %19 = vsyncpa [#allocation12], 0
    %20 = vsyncpa [#allocation15], 0
    %21 = vsyncpa [#allocation4], 0
    // Predicated region
    $region2: #{forward.1} parent=1 // pred_check
      _
    $region3: #{forward.1} parent=1 // pred_check_branch
      %23 = sbr.rel (0) target = $region5
    $region4: #{forward.1} parent=1 // pred_region
      _
    $region5: #{forward.1} parent=1 // pred_fallthru
      _
    // Predicated region
    $region6: #{forward.1} parent=1 // pred_check
      _
    $region7: #{forward.1} parent=1 // pred_check_branch
      %25 = sbr.rel (0) target = $region9
    $region8: #{forward.1} parent=1 // pred_region
      %s27 = ssub.s32 196608, 196608
      %28 = vsyncadd [#allocation3], %s27
      %s29 = sshll.u32 [#allocation2], 4
      %s30 = int_to_ptr.vmem [resolvable:$true] %s29
      %35 = dma.hbm_to_vmem [thread:$0]  %s1, 196608, %s30, [#allocation3], 2048, 2048, 128
    $region9: #{forward.1} parent=1 // pred_fallthru
      _
    // Predicated region
    $region10: #{forward.1} parent=1 // pred_check
      _
    $region11: #{forward.1} parent=1 // pred_check_branch
      %37 = sbr.rel (0) target = $region13
    $region12: #{forward.1} parent=1 // pred_region
      %s39 = ssub.s32 64, 64
      %40 = vsyncadd [#allocation6], %s39
      %s42 = sshll.u32 [#allocation5], 4
      %s43 = int_to_ptr.vmem [resolvable:$true] %s42
      %45 = dma.hbm_to_vmem [thread:$0]  %s2, 64, %s43, [#allocation6]
    $region13: #{forward.1} parent=1 // pred_fallthru
      _
    // Predicated region
    $region14: #{forward.1} parent=1 // pred_check
      _
    $region15: #{forward.1} parent=1 // pred_check_branch
      %47 = sbr.rel (0) target = $region17
    $region16: #{forward.1} parent=1 // pred_region
      %s49 = ssub.s32 64, 64
      %50 = vsyncadd [#allocation6], %s49
      %s52 = sshll.u32 [#allocation7], 4
      %s53 = int_to_ptr.vmem [resolvable:$true] %s52
      %55 = dma.hbm_to_vmem [thread:$0]  %s3, 64, %s53, [#allocation6]
    $region17: #{forward.1} parent=1 // pred_fallthru
      _
    // Predicated region
    $region18: #{forward.1} parent=1 // pred_check
      _
    $region19: #{forward.1} parent=1 // pred_check_branch
      %57 = sbr.rel (0) target = $region21
    $region20: #{forward.1} parent=1 // pred_region
      %s59 = ssub.s32 65536, 65536
      %60 = vsyncadd [#allocation9], %s59
      %s61 = sshll.u32 [#allocation8], 4
      %s62 = int_to_ptr.vmem [resolvable:$true] %s61
      %67 = dma.hbm_to_vmem [thread:$0]  %s4, 65536, %s62, [#allocation9], 1024, 1024, 64
    $region21: #{forward.1} parent=1 // pred_fallthru
      _
    // Predicated region
    $region22: #{forward.1} parent=1 // pred_check
      _
    $region23: #{forward.1} parent=1 // pred_check_branch
      %69 = sbr.rel (0) target = $region25
    $region24: #{forward.1} parent=1 // pred_region
      %s71 = ssub.s32 32, 32
      %72 = vsyncadd [#allocation9], %s71
      %s74 = sshll.u32 [#allocation10], 4
      %s75 = int_to_ptr.vmem [resolvable:$true] %s74
      %77 = dma.hbm_to_vmem [thread:$0]  %s5, 32, %s75, [#allocation9]
    $region25: #{forward.1} parent=1 // pred_fallthru
      _
    // Predicated region
    $region26: #{forward.1} parent=1 // pred_check
      _
    $region27: #{forward.1} parent=1 // pred_check_branch
      %79 = sbr.rel (0) target = $region29
    $region28: #{forward.1} parent=1 // pred_region
      %s81 = ssub.s32 32, 32
      %82 = vsyncadd [#allocation12], %s81
      %s84 = sshll.u32 [#allocation11], 4
      %s85 = int_to_ptr.vmem [resolvable:$true] %s84
      %87 = dma.hbm_to_vmem [thread:$0]  %s6, 32, %s85, [#allocation12]
    $region29: #{forward.1} parent=1 // pred_fallthru
      _
    // Predicated region
    $region30: #{forward.1} parent=1 // pred_check
      _
    $region31: #{forward.1} parent=1 // pred_check_branch
      %89 = sbr.rel (0) target = $region33
    $region32: #{forward.1} parent=1 // pred_region
      _
    $region33: #{forward.1} parent=1 // pred_fallthru
      _
    // Predicated region
    $region34: #{forward.1} parent=1 // pred_check
      _
    $region35: #{forward.1} parent=1 // pred_check_branch
      %91 = sbr.rel (0) target = $region37
    $region36: #{forward.1} parent=1 // pred_region
      %s93 = ssub.s32 16, 16
      %94 = vsyncadd [#allocation12], %s93
      %s96 = sshll.u32 [#allocation13], 4
      %s97 = int_to_ptr.vmem [resolvable:$true] %s96
      %99 = dma.hbm_to_vmem [thread:$0]  %s8, 16, %s97, [#allocation12]
    $region37: #{forward.1} parent=1 // pred_fallthru
      _
    // Predicated region
    $region38: #{forward.1} parent=1 // pred_check
      _
    $region39: #{forward.1} parent=1 // pred_check_branch
      %101 = sbr.rel (0) target = $region41
    $region40: #{forward.1} parent=1 // pred_region
      %s103 = ssub.s32 512, 512
      %104 = vsyncadd [#allocation15], %s103
      %s105 = sshll.u32 [#allocation14], 4
      %s106 = int_to_ptr.vmem [resolvable:$true] %s105
      %111 = dma.hbm_to_vmem [thread:$0]  %s9, 512, %s106, [#allocation15], 128, 128, 8
    $region41: #{forward.1} parent=1 // pred_fallthru
      _
    // Predicated region
    $region42: #{forward.1} parent=1 // pred_check
      _
    $region43: #{forward.1} parent=1 // pred_check_branch
      %113 = sbr.rel (0) target = $region45
    $region44: #{forward.1} parent=1 // pred_region
      %s115 = ssub.s32 16, 16
      %116 = vsyncadd [#allocation15], %s115
      %s118 = sshll.u32 [#allocation16], 4
      %s119 = int_to_ptr.vmem [resolvable:$true] %s118
      %121 = dma.hbm_to_vmem [thread:$0]  %s10, 16, %s119, [#allocation15]
    $region45: #{forward.1} parent=1 // pred_fallthru
      _
    // Predicated region
    $region46: #{forward.1} parent=1 // pred_check
      _
    $region47: #{forward.1} parent=1 // pred_check_branch
      %123 = sbr.rel (0) target = $region49
    $region48: #{forward.1} parent=1 // pred_region
      %124 = dma.done [#allocation3], 196608
    $region49: #{forward.1} parent=1 // pred_fallthru
      _
    // Predicated region
    $region50: #{forward.1} parent=1 // pred_check
      _
    $region51: #{forward.1} parent=1 // pred_check_branch
      %126 = sbr.rel (0) target = $region53
    $region52: #{forward.1} parent=1 // pred_region
      %127 = dma.done [#allocation6], 64
    $region53: #{forward.1} parent=1 // pred_fallthru
      _
    // Predicated region
    $region54: #{forward.1} parent=1 // pred_check
      _
    $region55: #{forward.1} parent=1 // pred_check_branch
      %129 = sbr.rel (0) target = $region57
    $region56: #{forward.1} parent=1 // pred_region
      %130 = dma.done [#allocation6], 64
    $region57: #{forward.1} parent=1 // pred_fallthru
      _
    // Predicated region
    $region58: #{forward.1} parent=1 // pred_check
      _
    $region59: #{forward.1} parent=1 // pred_check_branch
      %132 = sbr.rel (0) target = $region61
    $region60: #{forward.1} parent=1 // pred_region
      %133 = dma.done [#allocation9], 65536
    $region61: #{forward.1} parent=1 // pred_fallthru
      _
    // Predicated region
    $region62: #{forward.1} parent=1 // pred_check
      _
    $region63: #{forward.1} parent=1 // pred_check_branch
      %135 = sbr.rel (0) target = $region65
    $region64: #{forward.1} parent=1 // pred_region
      %136 = dma.done [#allocation9], 32
    $region65: #{forward.1} parent=1 // pred_fallthru
      _
    // Predicated region
    $region66: #{forward.1} parent=1 // pred_check
      _
    $region67: #{forward.1} parent=1 // pred_check_branch
      %138 = sbr.rel (0) target = $region69
    $region68: #{forward.1} parent=1 // pred_region
      %139 = dma.done [#allocation12], 32
    $region69: #{forward.1} parent=1 // pred_fallthru
      _
    // Predicated region
    $region70: #{forward.1} parent=1 // pred_check
      _
    $region71: #{forward.1} parent=1 // pred_check_branch
      %141 = sbr.rel (0) target = $region73
    $region72: #{forward.1} parent=1 // pred_region
      %142 = dma.done [#allocation12], 16
    $region73: #{forward.1} parent=1 // pred_fallthru
      _
    // Predicated region
    $region74: #{forward.1} parent=1 // pred_check
      _
    $region75: #{forward.1} parent=1 // pred_check_branch
      %144 = sbr.rel (0) target = $region77
    $region76: #{forward.1} parent=1 // pred_region
      %145 = dma.done [#allocation15], 512
    $region77: #{forward.1} parent=1 // pred_fallthru
      _
    // Predicated region
    $region78: #{forward.1} parent=1 // pred_check
      _
    $region79: #{forward.1} parent=1 // pred_check_branch
      %147 = sbr.rel (0) target = $region81
    $region80: #{forward.1} parent=1 // pred_region
      %148 = dma.done [#allocation15], 16
    $region81: #{forward.1} parent=1 // pred_fallthru
      _
    %v149 = vld [vmem:[%s0] sm:$0xff]
    %v150 = vld [vmem:[%s0 + $0x8] sm:$0xf]
    %v151 = vld [vmem:[#allocation2] sm:$0xff]
    %v152 = vld [vmem:[#allocation2 + $0x8] sm:$0xff]
    %v153 = vld [vmem:[#allocation2 + $0x10] sm:$0xff]
    %v154 = vld [vmem:[#allocation2 + $0x18] sm:$0xff]
    %v155 = vld [vmem:[#allocation2 + $0x20] sm:$0xff]
    %v156 = vld [vmem:[#allocation2 + $0x28] sm:$0xff]
    %v157 = vld [vmem:[#allocation2 + $0x30] sm:$0xff]
    %v158 = vld [vmem:[#allocation2 + $0x38] sm:$0xff]
    %v159 = vld [vmem:[#allocation2 + $0x40] sm:$0xff]
    %v160 = vld [vmem:[#allocation2 + $0x48] sm:$0xff]
    %v161 = vld [vmem:[#allocation2 + $0x50] sm:$0xff]
    %v162 = vld [vmem:[#allocation2 + $0x58] sm:$0xff]
    %v163 = vld [vmem:[#allocation2 + $0x60] sm:$0xff]
    %v164 = vld [vmem:[#allocation2 + $0x68] sm:$0xff]
    %v165 = vld [vmem:[#allocation2 + $0x70] sm:$0xff]
    %v166 = vld [vmem:[#allocation2 + $0x78] sm:$0xff]
    %v167 = vld [vmem:[#allocation2 + $0x80] sm:$0xff]
    %v168 = vld [vmem:[#allocation2 + $0x88] sm:$0xff]
    %v169 = vld [vmem:[#allocation2 + $0x90] sm:$0xff]
    %v170 = vld [vmem:[#allocation2 + $0x98] sm:$0xff]
    %v171 = vld [vmem:[#allocation2 + $0xa0] sm:$0xff]
    %v172 = vld [vmem:[#allocation2 + $0xa8] sm:$0xff]
    %v173 = vld [vmem:[#allocation2 + $0xb0] sm:$0xff]
    %v174 = vld [vmem:[#allocation2 + $0xb8] sm:$0xff]
    %v175 = vld [vmem:[#allocation2 + $0xc0] sm:$0xff]
    %v176 = vld [vmem:[#allocation2 + $0xc8] sm:$0xff]
    %v177 = vld [vmem:[#allocation2 + $0xd0] sm:$0xff]
    %v178 = vld [vmem:[#allocation2 + $0xd8] sm:$0xff]
    %v179 = vld [vmem:[#allocation2 + $0xe0] sm:$0xff]
    %v180 = vld [vmem:[#allocation2 + $0xe8] sm:$0xff]
    %v181 = vld [vmem:[#allocation2 + $0xf0] sm:$0xff]
    %v182 = vld [vmem:[#allocation2 + $0xf8] sm:$0xff]
    %v183 = vld [vmem:[#allocation2 + $0x100] sm:$0xff]
    %v184 = vld [vmem:[#allocation2 + $0x108] sm:$0xff]
    %v185 = vld [vmem:[#allocation2 + $0x110] sm:$0xff]
    %v186 = vld [vmem:[#allocation2 + $0x118] sm:$0xff]
    %v187 = vld [vmem:[#allocation2 + $0x120] sm:$0xff]
    %v188 = vld [vmem:[#allocation2 + $0x128] sm:$0xff]
    %v189 = vld [vmem:[#allocation2 + $0x130] sm:$0xff]
    %v190 = vld [vmem:[#allocation2 + $0x138] sm:$0xff]
    %v191 = vld [vmem:[#allocation2 + $0x140] sm:$0xff]
    %v192 = vld [vmem:[#allocation2 + $0x148] sm:$0xff]
    %v193 = vld [vmem:[#allocation2 + $0x150] sm:$0xff]
    %v194 = vld [vmem:[#allocation2 + $0x158] sm:$0xff]
    %v195 = vld [vmem:[#allocation2 + $0x160] sm:$0xff]
    %v196 = vld [vmem:[#allocation2 + $0x168] sm:$0xff]
    %v197 = vld [vmem:[#allocation2 + $0x170] sm:$0xff]
    %v198 = vld [vmem:[#allocation2 + $0x178] sm:$0xff]
    %v199 = vld [vmem:[#allocation2 + $0x180] sm:$0xff]
    %v200 = vld [vmem:[#allocation2 + $0x188] sm:$0xff]
    %v201 = vld [vmem:[#allocation2 + $0x190] sm:$0xff]
    %v202 = vld [vmem:[#allocation2 + $0x198] sm:$0xff]
    %v203 = vld [vmem:[#allocation2 + $0x1a0] sm:$0xff]
    %v204 = vld [vmem:[#allocation2 + $0x1a8] sm:$0xff]
    %v205 = vld [vmem:[#allocation2 + $0x1b0] sm:$0xff]
    %v206 = vld [vmem:[#allocation2 + $0x1b8] sm:$0xff]
    %v207 = vld [vmem:[#allocation2 + $0x1c0] sm:$0xff]
    %v208 = vld [vmem:[#allocation2 + $0x1c8] sm:$0xff]
    %v209 = vld [vmem:[#allocation2 + $0x1d0] sm:$0xff]
    %v210 = vld [vmem:[#allocation2 + $0x1d8] sm:$0xff]
    %v211 = vld [vmem:[#allocation2 + $0x1e0] sm:$0xff]
    %v212 = vld [vmem:[#allocation2 + $0x1e8] sm:$0xff]
    %v213 = vld [vmem:[#allocation2 + $0x1f0] sm:$0xff]
    %v214 = vld [vmem:[#allocation2 + $0x1f8] sm:$0xff]
    %v215 = vld [vmem:[#allocation2 + $0x200] sm:$0xff]
    %v216 = vld [vmem:[#allocation2 + $0x208] sm:$0xff]
    %v217 = vld [vmem:[#allocation2 + $0x210] sm:$0xff]
    %v218 = vld [vmem:[#allocation2 + $0x218] sm:$0xff]
    %v219 = vld [vmem:[#allocation2 + $0x220] sm:$0xff]
    %v220 = vld [vmem:[#allocation2 + $0x228] sm:$0xff]
    %v221 = vld [vmem:[#allocation2 + $0x230] sm:$0xff]
    %v222 = vld [vmem:[#allocation2 + $0x238] sm:$0xff]
    %v223 = vld [vmem:[#allocation2 + $0x240] sm:$0xff]
    %v224 = vld [vmem:[#allocation2 + $0x248] sm:$0xff]
    %v225 = vld [vmem:[#allocation2 + $0x250] sm:$0xff]
    %v226 = vld [vmem:[#allocation2 + $0x258] sm:$0xff]
    %v227 = vld [vmem:[#allocation2 + $0x260] sm:$0xff]
    %v228 = vld [vmem:[#allocation2 + $0x268] sm:$0xff]
    %v229 = vld [vmem:[#allocation2 + $0x270] sm:$0xff]
    %v230 = vld [vmem:[#allocation2 + $0x278] sm:$0xff]
    %v231 = vld [vmem:[#allocation2 + $0x280] sm:$0xff]
    %v232 = vld [vmem:[#allocation2 + $0x288] sm:$0xff]
    %v233 = vld [vmem:[#allocation2 + $0x290] sm:$0xff]
    %v234 = vld [vmem:[#allocation2 + $0x298] sm:$0xff]
    %v235 = vld [vmem:[#allocation2 + $0x2a0] sm:$0xff]
    %v236 = vld [vmem:[#allocation2 + $0x2a8] sm:$0xff]
    %v237 = vld [vmem:[#allocation2 + $0x2b0] sm:$0xff]
    %v238 = vld [vmem:[#allocation2 + $0x2b8] sm:$0xff]
    %v239 = vld [vmem:[#allocation2 + $0x2c0] sm:$0xff]
    %v240 = vld [vmem:[#allocation2 + $0x2c8] sm:$0xff]
    %v241 = vld [vmem:[#allocation2 + $0x2d0] sm:$0xff]
    %v242 = vld [vmem:[#allocation2 + $0x2d8] sm:$0xff]
    %v243 = vld [vmem:[#allocation2 + $0x2e0] sm:$0xff]
    %v244 = vld [vmem:[#allocation2 + $0x2e8] sm:$0xff]
    %v245 = vld [vmem:[#allocation2 + $0x2f0] sm:$0xff]
    %v246 = vld [vmem:[#allocation2 + $0x2f8] sm:$0xff]
    %v247 = vld [vmem:[#allocation2 + $0x300] sm:$0xff]
    %v248 = vld [vmem:[#allocation2 + $0x308] sm:$0xff]
    %v249 = vld [vmem:[#allocation2 + $0x310] sm:$0xff]
    %v250 = vld [vmem:[#allocation2 + $0x318] sm:$0xff]
    %v251 = vld [vmem:[#allocation2 + $0x320] sm:$0xff]
    %v252 = vld [vmem:[#allocation2 + $0x328] sm:$0xff]
    %v253 = vld [vmem:[#allocation2 + $0x330] sm:$0xff]
    %v254 = vld [vmem:[#allocation2 + $0x338] sm:$0xff]
    %v255 = vld [vmem:[#allocation2 + $0x340] sm:$0xff]
    %v256 = vld [vmem:[#allocation2 + $0x348] sm:$0xff]
    %v257 = vld [vmem:[#allocation2 + $0x350] sm:$0xff]
    %v258 = vld [vmem:[#allocation2 + $0x358] sm:$0xff]
    %v259 = vld [vmem:[#allocation2 + $0x360] sm:$0xff]
    %v260 = vld [vmem:[#allocation2 + $0x368] sm:$0xff]
    %v261 = vld [vmem:[#allocation2 + $0x370] sm:$0xff]
    %v262 = vld [vmem:[#allocation2 + $0x378] sm:$0xff]
    %v263 = vld [vmem:[#allocation2 + $0x380] sm:$0xff]
    %v264 = vld [vmem:[#allocation2 + $0x388] sm:$0xff]
    %v265 = vld [vmem:[#allocation2 + $0x390] sm:$0xff]
    %v266 = vld [vmem:[#allocation2 + $0x398] sm:$0xff]
    %v267 = vld [vmem:[#allocation2 + $0x3a0] sm:$0xff]
    %v268 = vld [vmem:[#allocation2 + $0x3a8] sm:$0xff]
    %v269 = vld [vmem:[#allocation2 + $0x3b0] sm:$0xff]
    %v270 = vld [vmem:[#allocation2 + $0x3b8] sm:$0xff]
    %v271 = vld [vmem:[#allocation2 + $0x3c0] sm:$0xff]
    %v272 = vld [vmem:[#allocation2 + $0x3c8] sm:$0xff]
    %v273 = vld [vmem:[#allocation2 + $0x3d0] sm:$0xff]
    %v274 = vld [vmem:[#allocation2 + $0x3d8] sm:$0xff]
    %v275 = vld [vmem:[#allocation2 + $0x3e0] sm:$0xff]
    %v276 = vld [vmem:[#allocation2 + $0x3e8] sm:$0xff]
    %v277 = vld [vmem:[#allocation2 + $0x3f0] sm:$0xff]
    %v278 = vld [vmem:[#allocation2 + $0x3f8] sm:$0xff]
    %v279 = vld [vmem:[#allocation2 + $0x400] sm:$0xff]
    %v280 = vld [vmem:[#allocation2 + $0x408] sm:$0xff]
    %v281 = vld [vmem:[#allocation2 + $0x410] sm:$0xff]
    %v282 = vld [vmem:[#allocation2 + $0x418] sm:$0xff]
    %v283 = vld [vmem:[#allocation2 + $0x420] sm:$0xff]
    %v284 = vld [vmem:[#allocation2 + $0x428] sm:$0xff]
    %v285 = vld [vmem:[#allocation2 + $0x430] sm:$0xff]
    %v286 = vld [vmem:[#allocation2 + $0x438] sm:$0xff]
    %v287 = vld [vmem:[#allocation2 + $0x440] sm:$0xff]
    %v288 = vld [vmem:[#allocation2 + $0x448] sm:$0xff]
    %v289 = vld [vmem:[#allocation2 + $0x450] sm:$0xff]
    %v290 = vld [vmem:[#allocation2 + $0x458] sm:$0xff]
    %v291 = vld [vmem:[#allocation2 + $0x460] sm:$0xff]
    %v292 = vld [vmem:[#allocation2 + $0x468] sm:$0xff]
    %v293 = vld [vmem:[#allocation2 + $0x470] sm:$0xff]
    %v294 = vld [vmem:[#allocation2 + $0x478] sm:$0xff]
    %v295 = vld [vmem:[#allocation2 + $0x480] sm:$0xff]
    %v296 = vld [vmem:[#allocation2 + $0x488] sm:$0xff]
    %v297 = vld [vmem:[#allocation2 + $0x490] sm:$0xff]
    %v298 = vld [vmem:[#allocation2 + $0x498] sm:$0xff]
    %v299 = vld [vmem:[#allocation2 + $0x4a0] sm:$0xff]
    %v300 = vld [vmem:[#allocation2 + $0x4a8] sm:$0xff]
    %v301 = vld [vmem:[#allocation2 + $0x4b0] sm:$0xff]
    %v302 = vld [vmem:[#allocation2 + $0x4b8] sm:$0xff]
    %v303 = vld [vmem:[#allocation2 + $0x4c0] sm:$0xff]
    %v304 = vld [vmem:[#allocation2 + $0x4c8] sm:$0xff]
    %v305 = vld [vmem:[#allocation2 + $0x4d0] sm:$0xff]
    %v306 = vld [vmem:[#allocation2 + $0x4d8] sm:$0xff]
    %v307 = vld [vmem:[#allocation2 + $0x4e0] sm:$0xff]
    %v308 = vld [vmem:[#allocation2 + $0x4e8] sm:$0xff]
    %v309 = vld [vmem:[#allocation2 + $0x4f0] sm:$0xff]
    %v310 = vld [vmem:[#allocation2 + $0x4f8] sm:$0xff]
    %v311 = vld [vmem:[#allocation2 + $0x500] sm:$0xff]
    %v312 = vld [vmem:[#allocation2 + $0x508] sm:$0xff]
    %v313 = vld [vmem:[#allocation2 + $0x510] sm:$0xff]
    %v314 = vld [vmem:[#allocation2 + $0x518] sm:$0xff]
    %v315 = vld [vmem:[#allocation2 + $0x520] sm:$0xff]
    %v316 = vld [vmem:[#allocation2 + $0x528] sm:$0xff]
    %v317 = vld [vmem:[#allocation2 + $0x530] sm:$0xff]
    %v318 = vld [vmem:[#allocation2 + $0x538] sm:$0xff]
    %v319 = vld [vmem:[#allocation2 + $0x540] sm:$0xff]
    %v320 = vld [vmem:[#allocation2 + $0x548] sm:$0xff]
    %v321 = vld [vmem:[#allocation2 + $0x550] sm:$0xff]
    %v322 = vld [vmem:[#allocation2 + $0x558] sm:$0xff]
    %v323 = vld [vmem:[#allocation2 + $0x560] sm:$0xff]
    %v324 = vld [vmem:[#allocation2 + $0x568] sm:$0xff]
    %v325 = vld [vmem:[#allocation2 + $0x570] sm:$0xff]
    %v326 = vld [vmem:[#allocation2 + $0x578] sm:$0xff]
    %v327 = vld [vmem:[#allocation2 + $0x580] sm:$0xff]
    %v328 = vld [vmem:[#allocation2 + $0x588] sm:$0xff]
    %v329 = vld [vmem:[#allocation2 + $0x590] sm:$0xff]
    %v330 = vld [vmem:[#allocation2 + $0x598] sm:$0xff]
    %v331 = vld [vmem:[#allocation2 + $0x5a0] sm:$0xff]
    %v332 = vld [vmem:[#allocation2 + $0x5a8] sm:$0xff]
    %v333 = vld [vmem:[#allocation2 + $0x5b0] sm:$0xff]
    %v334 = vld [vmem:[#allocation2 + $0x5b8] sm:$0xff]
    %v335 = vld [vmem:[#allocation2 + $0x5c0] sm:$0xff]
    %v336 = vld [vmem:[#allocation2 + $0x5c8] sm:$0xff]
    %v337 = vld [vmem:[#allocation2 + $0x5d0] sm:$0xff]
    %v338 = vld [vmem:[#allocation2 + $0x5d8] sm:$0xff]
    %v339 = vld [vmem:[#allocation2 + $0x5e0] sm:$0xff]
    %v340 = vld [vmem:[#allocation2 + $0x5e8] sm:$0xff]
    %v341 = vld [vmem:[#allocation2 + $0x5f0] sm:$0xff]
    %v342 = vld [vmem:[#allocation2 + $0x5f8] sm:$0xff]
    %v343 = vld [vmem:[#allocation2 + $0x600] sm:$0xff]
    %v344 = vld [vmem:[#allocation2 + $0x608] sm:$0xff]
    %v345 = vld [vmem:[#allocation2 + $0x610] sm:$0xff]
    %v346 = vld [vmem:[#allocation2 + $0x618] sm:$0xff]
    %v347 = vld [vmem:[#allocation2 + $0x620] sm:$0xff]
    %v348 = vld [vmem:[#allocation2 + $0x628] sm:$0xff]
    %v349 = vld [vmem:[#allocation2 + $0x630] sm:$0xff]
    %v350 = vld [vmem:[#allocation2 + $0x638] sm:$0xff]
    %v351 = vld [vmem:[#allocation2 + $0x640] sm:$0xff]
    %v352 = vld [vmem:[#allocation2 + $0x648] sm:$0xff]
    %v353 = vld [vmem:[#allocation2 + $0x650] sm:$0xff]
    %v354 = vld [vmem:[#allocation2 + $0x658] sm:$0xff]
    %v355 = vld [vmem:[#allocation2 + $0x660] sm:$0xff]
    %v356 = vld [vmem:[#allocation2 + $0x668] sm:$0xff]
    %v357 = vld [vmem:[#allocation2 + $0x670] sm:$0xff]
    %v358 = vld [vmem:[#allocation2 + $0x678] sm:$0xff]
    %v359 = vld [vmem:[#allocation2 + $0x680] sm:$0xff]
    %v360 = vld [vmem:[#allocation2 + $0x688] sm:$0xff]
    %v361 = vld [vmem:[#allocation2 + $0x690] sm:$0xff]
    %v362 = vld [vmem:[#allocation2 + $0x698] sm:$0xff]
    %v363 = vld [vmem:[#allocation2 + $0x6a0] sm:$0xff]
    %v364 = vld [vmem:[#allocation2 + $0x6a8] sm:$0xff]
    %v365 = vld [vmem:[#allocation2 + $0x6b0] sm:$0xff]
    %v366 = vld [vmem:[#allocation2 + $0x6b8] sm:$0xff]
    %v367 = vld [vmem:[#allocation2 + $0x6c0] sm:$0xff]
    %v368 = vld [vmem:[#allocation2 + $0x6c8] sm:$0xff]
    %v369 = vld [vmem:[#allocation2 + $0x6d0] sm:$0xff]
    %v370 = vld [vmem:[#allocation2 + $0x6d8] sm:$0xff]
    %v371 = vld [vmem:[#allocation2 + $0x6e0] sm:$0xff]
    %v372 = vld [vmem:[#allocation2 + $0x6e8] sm:$0xff]
    %v373 = vld [vmem:[#allocation2 + $0x6f0] sm:$0xff]
    %v374 = vld [vmem:[#allocation2 + $0x6f8] sm:$0xff]
    %v375 = vld [vmem:[#allocation2 + $0x700] sm:$0xff]
    %v376 = vld [vmem:[#allocation2 + $0x708] sm:$0xff]
    %v377 = vld [vmem:[#allocation2 + $0x710] sm:$0xff]
    %v378 = vld [vmem:[#allocation2 + $0x718] sm:$0xff]
    %v379 = vld [vmem:[#allocation2 + $0x720] sm:$0xff]
    %v380 = vld [vmem:[#allocation2 + $0x728] sm:$0xff]
    %v381 = vld [vmem:[#allocation2 + $0x730] sm:$0xff]
    %v382 = vld [vmem:[#allocation2 + $0x738] sm:$0xff]
    %v383 = vld [vmem:[#allocation2 + $0x740] sm:$0xff]
    %v384 = vld [vmem:[#allocation2 + $0x748] sm:$0xff]
    %v385 = vld [vmem:[#allocation2 + $0x750] sm:$0xff]
    %v386 = vld [vmem:[#allocation2 + $0x758] sm:$0xff]
    %v387 = vld [vmem:[#allocation2 + $0x760] sm:$0xff]
    %v388 = vld [vmem:[#allocation2 + $0x768] sm:$0xff]
    %v389 = vld [vmem:[#allocation2 + $0x770] sm:$0xff]
    %v390 = vld [vmem:[#allocation2 + $0x778] sm:$0xff]
    %v391 = vld [vmem:[#allocation2 + $0x780] sm:$0xff]
    %v392 = vld [vmem:[#allocation2 + $0x788] sm:$0xff]
    %v393 = vld [vmem:[#allocation2 + $0x790] sm:$0xff]
    %v394 = vld [vmem:[#allocation2 + $0x798] sm:$0xff]
    %v395 = vld [vmem:[#allocation2 + $0x7a0] sm:$0xff]
    %v396 = vld [vmem:[#allocation2 + $0x7a8] sm:$0xff]
    %v397 = vld [vmem:[#allocation2 + $0x7b0] sm:$0xff]
    %v398 = vld [vmem:[#allocation2 + $0x7b8] sm:$0xff]
    %v399 = vld [vmem:[#allocation2 + $0x7c0] sm:$0xff]
    %v400 = vld [vmem:[#allocation2 + $0x7c8] sm:$0xff]
    %v401 = vld [vmem:[#allocation2 + $0x7d0] sm:$0xff]
    %v402 = vld [vmem:[#allocation2 + $0x7d8] sm:$0xff]
    %v403 = vld [vmem:[#allocation2 + $0x7e0] sm:$0xff]
    %v404 = vld [vmem:[#allocation2 + $0x7e8] sm:$0xff]
    %v405 = vld [vmem:[#allocation2 + $0x7f0] sm:$0xff]
    %v406 = vld [vmem:[#allocation2 + $0x7f8] sm:$0xff]
    %v407 = vld [vmem:[#allocation2 + $0x800] sm:$0xff]
    %v408 = vld [vmem:[#allocation2 + $0x808] sm:$0xff]
    %v409 = vld [vmem:[#allocation2 + $0x810] sm:$0xff]
    %v410 = vld [vmem:[#allocation2 + $0x818] sm:$0xff]
    %v411 = vld [vmem:[#allocation2 + $0x820] sm:$0xff]
    %v412 = vld [vmem:[#allocation2 + $0x828] sm:$0xff]
    %v413 = vld [vmem:[#allocation2 + $0x830] sm:$0xff]
    %v414 = vld [vmem:[#allocation2 + $0x838] sm:$0xff]
    %v415 = vld [vmem:[#allocation2 + $0x840] sm:$0xff]
    %v416 = vld [vmem:[#allocation2 + $0x848] sm:$0xff]
    %v417 = vld [vmem:[#allocation2 + $0x850] sm:$0xff]
    %v418 = vld [vmem:[#allocation2 + $0x858] sm:$0xff]
    %v419 = vld [vmem:[#allocation2 + $0x860] sm:$0xff]
    %v420 = vld [vmem:[#allocation2 + $0x868] sm:$0xff]
    %v421 = vld [vmem:[#allocation2 + $0x870] sm:$0xff]
    %v422 = vld [vmem:[#allocation2 + $0x878] sm:$0xff]
    %v423 = vld [vmem:[#allocation2 + $0x880] sm:$0xff]
    %v424 = vld [vmem:[#allocation2 + $0x888] sm:$0xff]
    %v425 = vld [vmem:[#allocation2 + $0x890] sm:$0xff]
    %v426 = vld [vmem:[#allocation2 + $0x898] sm:$0xff]
    %v427 = vld [vmem:[#allocation2 + $0x8a0] sm:$0xff]
    %v428 = vld [vmem:[#allocation2 + $0x8a8] sm:$0xff]
    %v429 = vld [vmem:[#allocation2 + $0x8b0] sm:$0xff]
    %v430 = vld [vmem:[#allocation2 + $0x8b8] sm:$0xff]
    %v431 = vld [vmem:[#allocation2 + $0x8c0] sm:$0xff]
    %v432 = vld [vmem:[#allocation2 + $0x8c8] sm:$0xff]
    %v433 = vld [vmem:[#allocation2 + $0x8d0] sm:$0xff]
    %v434 = vld [vmem:[#allocation2 + $0x8d8] sm:$0xff]
    %v435 = vld [vmem:[#allocation2 + $0x8e0] sm:$0xff]
    %v436 = vld [vmem:[#allocation2 + $0x8e8] sm:$0xff]
    %v437 = vld [vmem:[#allocation2 + $0x8f0] sm:$0xff]
    %v438 = vld [vmem:[#allocation2 + $0x8f8] sm:$0xff]
    %v439 = vld [vmem:[#allocation2 + $0x900] sm:$0xff]
    %v440 = vld [vmem:[#allocation2 + $0x908] sm:$0xff]
    %v441 = vld [vmem:[#allocation2 + $0x910] sm:$0xff]
    %v442 = vld [vmem:[#allocation2 + $0x918] sm:$0xff]
    %v443 = vld [vmem:[#allocation2 + $0x920] sm:$0xff]
    %v444 = vld [vmem:[#allocation2 + $0x928] sm:$0xff]
    %v445 = vld [vmem:[#allocation2 + $0x930] sm:$0xff]
    %v446 = vld [vmem:[#allocation2 + $0x938] sm:$0xff]
    %v447 = vld [vmem:[#allocation2 + $0x940] sm:$0xff]
    %v448 = vld [vmem:[#allocation2 + $0x948] sm:$0xff]
    %v449 = vld [vmem:[#allocation2 + $0x950] sm:$0xff]
    %v450 = vld [vmem:[#allocation2 + $0x958] sm:$0xff]
    %v451 = vld [vmem:[#allocation2 + $0x960] sm:$0xff]
    %v452 = vld [vmem:[#allocation2 + $0x968] sm:$0xff]
    %v453 = vld [vmem:[#allocation2 + $0x970] sm:$0xff]
    %v454 = vld [vmem:[#allocation2 + $0x978] sm:$0xff]
    %v455 = vld [vmem:[#allocation2 + $0x980] sm:$0xff]
    %v456 = vld [vmem:[#allocation2 + $0x988] sm:$0xff]
    %v457 = vld [vmem:[#allocation2 + $0x990] sm:$0xff]
    %v458 = vld [vmem:[#allocation2 + $0x998] sm:$0xff]
    %v459 = vld [vmem:[#allocation2 + $0x9a0] sm:$0xff]
    %v460 = vld [vmem:[#allocation2 + $0x9a8] sm:$0xff]
    %v461 = vld [vmem:[#allocation2 + $0x9b0] sm:$0xff]
    %v462 = vld [vmem:[#allocation2 + $0x9b8] sm:$0xff]
    %v463 = vld [vmem:[#allocation2 + $0x9c0] sm:$0xff]
    %v464 = vld [vmem:[#allocation2 + $0x9c8] sm:$0xff]
    %v465 = vld [vmem:[#allocation2 + $0x9d0] sm:$0xff]
    %v466 = vld [vmem:[#allocation2 + $0x9d8] sm:$0xff]
    %v467 = vld [vmem:[#allocation2 + $0x9e0] sm:$0xff]
    %v468 = vld [vmem:[#allocation2 + $0x9e8] sm:$0xff]
    %v469 = vld [vmem:[#allocation2 + $0x9f0] sm:$0xff]
    %v470 = vld [vmem:[#allocation2 + $0x9f8] sm:$0xff]
    %v471 = vld [vmem:[#allocation2 + $0xa00] sm:$0xff]
    %v472 = vld [vmem:[#allocation2 + $0xa08] sm:$0xff]
    %v473 = vld [vmem:[#allocation2 + $0xa10] sm:$0xff]
    %v474 = vld [vmem:[#allocation2 + $0xa18] sm:$0xff]
    %v475 = vld [vmem:[#allocation2 + $0xa20] sm:$0xff]
    %v476 = vld [vmem:[#allocation2 + $0xa28] sm:$0xff]
    %v477 = vld [vmem:[#allocation2 + $0xa30] sm:$0xff]
    %v478 = vld [vmem:[#allocation2 + $0xa38] sm:$0xff]
    %v479 = vld [vmem:[#allocation2 + $0xa40] sm:$0xff]
    %v480 = vld [vmem:[#allocation2 + $0xa48] sm:$0xff]
    %v481 = vld [vmem:[#allocation2 + $0xa50] sm:$0xff]
    %v482 = vld [vmem:[#allocation2 + $0xa58] sm:$0xff]
    %v483 = vld [vmem:[#allocation2 + $0xa60] sm:$0xff]
    %v484 = vld [vmem:[#allocation2 + $0xa68] sm:$0xff]
    %v485 = vld [vmem:[#allocation2 + $0xa70] sm:$0xff]
    %v486 = vld [vmem:[#allocation2 + $0xa78] sm:$0xff]
    %v487 = vld [vmem:[#allocation2 + $0xa80] sm:$0xff]
    %v488 = vld [vmem:[#allocation2 + $0xa88] sm:$0xff]
    %v489 = vld [vmem:[#allocation2 + $0xa90] sm:$0xff]
    %v490 = vld [vmem:[#allocation2 + $0xa98] sm:$0xff]
    %v491 = vld [vmem:[#allocation2 + $0xaa0] sm:$0xff]
    %v492 = vld [vmem:[#allocation2 + $0xaa8] sm:$0xff]
    %v493 = vld [vmem:[#allocation2 + $0xab0] sm:$0xff]
    %v494 = vld [vmem:[#allocation2 + $0xab8] sm:$0xff]
    %v495 = vld [vmem:[#allocation2 + $0xac0] sm:$0xff]
    %v496 = vld [vmem:[#allocation2 + $0xac8] sm:$0xff]
    %v497 = vld [vmem:[#allocation2 + $0xad0] sm:$0xff]
    %v498 = vld [vmem:[#allocation2 + $0xad8] sm:$0xff]
    %v499 = vld [vmem:[#allocation2 + $0xae0] sm:$0xff]
    %v500 = vld [vmem:[#allocation2 + $0xae8] sm:$0xff]
    %v501 = vld [vmem:[#allocation2 + $0xaf0] sm:$0xff]
    %v502 = vld [vmem:[#allocation2 + $0xaf8] sm:$0xff]
    %v503 = vld [vmem:[#allocation2 + $0xb00] sm:$0xff]
    %v504 = vld [vmem:[#allocation2 + $0xb08] sm:$0xff]
    %v505 = vld [vmem:[#allocation2 + $0xb10] sm:$0xff]
    %v506 = vld [vmem:[#allocation2 + $0xb18] sm:$0xff]
    %v507 = vld [vmem:[#allocation2 + $0xb20] sm:$0xff]
    %v508 = vld [vmem:[#allocation2 + $0xb28] sm:$0xff]
    %v509 = vld [vmem:[#allocation2 + $0xb30] sm:$0xff]
    %v510 = vld [vmem:[#allocation2 + $0xb38] sm:$0xff]
    %v511 = vld [vmem:[#allocation2 + $0xb40] sm:$0xff]
    %v512 = vld [vmem:[#allocation2 + $0xb48] sm:$0xff]
    %v513 = vld [vmem:[#allocation2 + $0xb50] sm:$0xff]
    %v514 = vld [vmem:[#allocation2 + $0xb58] sm:$0xff]
    %v515 = vld [vmem:[#allocation2 + $0xb60] sm:$0xff]
    %v516 = vld [vmem:[#allocation2 + $0xb68] sm:$0xff]
    %v517 = vld [vmem:[#allocation2 + $0xb70] sm:$0xff]
    %v518 = vld [vmem:[#allocation2 + $0xb78] sm:$0xff]
    %v519 = vld [vmem:[#allocation2 + $0xb80] sm:$0xff]
    %v520 = vld [vmem:[#allocation2 + $0xb88] sm:$0xff]
    %v521 = vld [vmem:[#allocation2 + $0xb90] sm:$0xff]
    %v522 = vld [vmem:[#allocation2 + $0xb98] sm:$0xff]
    %v523 = vld [vmem:[#allocation2 + $0xba0] sm:$0xff]
    %v524 = vld [vmem:[#allocation2 + $0xba8] sm:$0xff]
    %v525 = vld [vmem:[#allocation2 + $0xbb0] sm:$0xff]
    %v526 = vld [vmem:[#allocation2 + $0xbb8] sm:$0xff]
    %v527 = vld [vmem:[#allocation2 + $0xbc0] sm:$0xff]
    %v528 = vld [vmem:[#allocation2 + $0xbc8] sm:$0xff]
    %v529 = vld [vmem:[#allocation2 + $0xbd0] sm:$0xff]
    %v530 = vld [vmem:[#allocation2 + $0xbd8] sm:$0xff]
    %v531 = vld [vmem:[#allocation2 + $0xbe0] sm:$0xff]
    %v532 = vld [vmem:[#allocation2 + $0xbe8] sm:$0xff]
    %v533 = vld [vmem:[#allocation2 + $0xbf0] sm:$0xff]
    %v534 = vld [vmem:[#allocation2 + $0xbf8] sm:$0xff]
    %v535 = vld [vmem:[#allocation2 + $0xc00] sm:$0xff]
    %v536 = vld [vmem:[#allocation2 + $0xc08] sm:$0xff]
    %v537 = vld [vmem:[#allocation2 + $0xc10] sm:$0xff]
    %v538 = vld [vmem:[#allocation2 + $0xc18] sm:$0xff]
    %v539 = vld [vmem:[#allocation2 + $0xc20] sm:$0xff]
    %v540 = vld [vmem:[#allocation2 + $0xc28] sm:$0xff]
    %v541 = vld [vmem:[#allocation2 + $0xc30] sm:$0xff]
    %v542 = vld [vmem:[#allocation2 + $0xc38] sm:$0xff]
    %v543 = vld [vmem:[#allocation2 + $0xc40] sm:$0xff]
    %v544 = vld [vmem:[#allocation2 + $0xc48] sm:$0xff]
    %v545 = vld [vmem:[#allocation2 + $0xc50] sm:$0xff]
    %v546 = vld [vmem:[#allocation2 + $0xc58] sm:$0xff]
    %v547 = vld [vmem:[#allocation2 + $0xc60] sm:$0xff]
    %v548 = vld [vmem:[#allocation2 + $0xc68] sm:$0xff]
    %v549 = vld [vmem:[#allocation2 + $0xc70] sm:$0xff]
    %v550 = vld [vmem:[#allocation2 + $0xc78] sm:$0xff]
    %v551 = vld [vmem:[#allocation2 + $0xc80] sm:$0xff]
    %v552 = vld [vmem:[#allocation2 + $0xc88] sm:$0xff]
    %v553 = vld [vmem:[#allocation2 + $0xc90] sm:$0xff]
    %v554 = vld [vmem:[#allocation2 + $0xc98] sm:$0xff]
    %v555 = vld [vmem:[#allocation2 + $0xca0] sm:$0xff]
    %v556 = vld [vmem:[#allocation2 + $0xca8] sm:$0xff]
    %v557 = vld [vmem:[#allocation2 + $0xcb0] sm:$0xff]
    %v558 = vld [vmem:[#allocation2 + $0xcb8] sm:$0xff]
    %v559 = vld [vmem:[#allocation2 + $0xcc0] sm:$0xff]
    %v560 = vld [vmem:[#allocation2 + $0xcc8] sm:$0xff]
    %v561 = vld [vmem:[#allocation2 + $0xcd0] sm:$0xff]
    %v562 = vld [vmem:[#allocation2 + $0xcd8] sm:$0xff]
    %v563 = vld [vmem:[#allocation2 + $0xce0] sm:$0xff]
    %v564 = vld [vmem:[#allocation2 + $0xce8] sm:$0xff]
    %v565 = vld [vmem:[#allocation2 + $0xcf0] sm:$0xff]
    %v566 = vld [vmem:[#allocation2 + $0xcf8] sm:$0xff]
    %v567 = vld [vmem:[#allocation2 + $0xd00] sm:$0xff]
    %v568 = vld [vmem:[#allocation2 + $0xd08] sm:$0xff]
    %v569 = vld [vmem:[#allocation2 + $0xd10] sm:$0xff]
    %v570 = vld [vmem:[#allocation2 + $0xd18] sm:$0xff]
    %v571 = vld [vmem:[#allocation2 + $0xd20] sm:$0xff]
    %v572 = vld [vmem:[#allocation2 + $0xd28] sm:$0xff]
    %v573 = vld [vmem:[#allocation2 + $0xd30] sm:$0xff]
    %v574 = vld [vmem:[#allocation2 + $0xd38] sm:$0xff]
    %v575 = vld [vmem:[#allocation2 + $0xd40] sm:$0xff]
    %v576 = vld [vmem:[#allocation2 + $0xd48] sm:$0xff]
    %v577 = vld [vmem:[#allocation2 + $0xd50] sm:$0xff]
    %v578 = vld [vmem:[#allocation2 + $0xd58] sm:$0xff]
    %v579 = vld [vmem:[#allocation2 + $0xd60] sm:$0xff]
    %v580 = vld [vmem:[#allocation2 + $0xd68] sm:$0xff]
    %v581 = vld [vmem:[#allocation2 + $0xd70] sm:$0xff]
    %v582 = vld [vmem:[#allocation2 + $0xd78] sm:$0xff]
    %v583 = vld [vmem:[#allocation2 + $0xd80] sm:$0xff]
    %v584 = vld [vmem:[#allocation2 + $0xd88] sm:$0xff]
    %v585 = vld [vmem:[#allocation2 + $0xd90] sm:$0xff]
    %v586 = vld [vmem:[#allocation2 + $0xd98] sm:$0xff]
    %v587 = vld [vmem:[#allocation2 + $0xda0] sm:$0xff]
    %v588 = vld [vmem:[#allocation2 + $0xda8] sm:$0xff]
    %v589 = vld [vmem:[#allocation2 + $0xdb0] sm:$0xff]
    %v590 = vld [vmem:[#allocation2 + $0xdb8] sm:$0xff]
    %v591 = vld [vmem:[#allocation2 + $0xdc0] sm:$0xff]
    %v592 = vld [vmem:[#allocation2 + $0xdc8] sm:$0xff]
    %v593 = vld [vmem:[#allocation2 + $0xdd0] sm:$0xff]
    %v594 = vld [vmem:[#allocation2 + $0xdd8] sm:$0xff]
    %v595 = vld [vmem:[#allocation2 + $0xde0] sm:$0xff]
    %v596 = vld [vmem:[#allocation2 + $0xde8] sm:$0xff]
    %v597 = vld [vmem:[#allocation2 + $0xdf0] sm:$0xff]
    %v598 = vld [vmem:[#allocation2 + $0xdf8] sm:$0xff]
    %v599 = vld [vmem:[#allocation2 + $0xe00] sm:$0xff]
    %v600 = vld [vmem:[#allocation2 + $0xe08] sm:$0xff]
    %v601 = vld [vmem:[#allocation2 + $0xe10] sm:$0xff]
    %v602 = vld [vmem:[#allocation2 + $0xe18] sm:$0xff]
    %v603 = vld [vmem:[#allocation2 + $0xe20] sm:$0xff]
    %v604 = vld [vmem:[#allocation2 + $0xe28] sm:$0xff]
    %v605 = vld [vmem:[#allocation2 + $0xe30] sm:$0xff]
    %v606 = vld [vmem:[#allocation2 + $0xe38] sm:$0xff]
    %v607 = vld [vmem:[#allocation2 + $0xe40] sm:$0xff]
    %v608 = vld [vmem:[#allocation2 + $0xe48] sm:$0xff]
    %v609 = vld [vmem:[#allocation2 + $0xe50] sm:$0xff]
    %v610 = vld [vmem:[#allocation2 + $0xe58] sm:$0xff]
    %v611 = vld [vmem:[#allocation2 + $0xe60] sm:$0xff]
    %v612 = vld [vmem:[#allocation2 + $0xe68] sm:$0xff]
    %v613 = vld [vmem:[#allocation2 + $0xe70] sm:$0xff]
    %v614 = vld [vmem:[#allocation2 + $0xe78] sm:$0xff]
    %v615 = vld [vmem:[#allocation2 + $0xe80] sm:$0xff]
    %v616 = vld [vmem:[#allocation2 + $0xe88] sm:$0xff]
    %v617 = vld [vmem:[#allocation2 + $0xe90] sm:$0xff]
    %v618 = vld [vmem:[#allocation2 + $0xe98] sm:$0xff]
    %v619 = vld [vmem:[#allocation2 + $0xea0] sm:$0xff]
    %v620 = vld [vmem:[#allocation2 + $0xea8] sm:$0xff]
    %v621 = vld [vmem:[#allocation2 + $0xeb0] sm:$0xff]
    %v622 = vld [vmem:[#allocation2 + $0xeb8] sm:$0xff]
    %v623 = vld [vmem:[#allocation2 + $0xec0] sm:$0xff]
    %v624 = vld [vmem:[#allocation2 + $0xec8] sm:$0xff]
    %v625 = vld [vmem:[#allocation2 + $0xed0] sm:$0xff]
    %v626 = vld [vmem:[#allocation2 + $0xed8] sm:$0xff]
    %v627 = vld [vmem:[#allocation2 + $0xee0] sm:$0xff]
    %v628 = vld [vmem:[#allocation2 + $0xee8] sm:$0xff]
    %v629 = vld [vmem:[#allocation2 + $0xef0] sm:$0xff]
    %v630 = vld [vmem:[#allocation2 + $0xef8] sm:$0xff]
    %v631 = vld [vmem:[#allocation2 + $0xf00] sm:$0xff]
    %v632 = vld [vmem:[#allocation2 + $0xf08] sm:$0xff]
    %v633 = vld [vmem:[#allocation2 + $0xf10] sm:$0xff]
    %v634 = vld [vmem:[#allocation2 + $0xf18] sm:$0xff]
    %v635 = vld [vmem:[#allocation2 + $0xf20] sm:$0xff]
    %v636 = vld [vmem:[#allocation2 + $0xf28] sm:$0xff]
    %v637 = vld [vmem:[#allocation2 + $0xf30] sm:$0xff]
    %v638 = vld [vmem:[#allocation2 + $0xf38] sm:$0xff]
    %v639 = vld [vmem:[#allocation2 + $0xf40] sm:$0xff]
    %v640 = vld [vmem:[#allocation2 + $0xf48] sm:$0xff]
    %v641 = vld [vmem:[#allocation2 + $0xf50] sm:$0xff]
    %v642 = vld [vmem:[#allocation2 + $0xf58] sm:$0xff]
    %v643 = vld [vmem:[#allocation2 + $0xf60] sm:$0xff]
    %v644 = vld [vmem:[#allocation2 + $0xf68] sm:$0xff]
    %v645 = vld [vmem:[#allocation2 + $0xf70] sm:$0xff]
    %v646 = vld [vmem:[#allocation2 + $0xf78] sm:$0xff]
    %v647 = vld [vmem:[#allocation2 + $0xf80] sm:$0xff]
    %v648 = vld [vmem:[#allocation2 + $0xf88] sm:$0xff]
    %v649 = vld [vmem:[#allocation2 + $0xf90] sm:$0xff]
    %v650 = vld [vmem:[#allocation2 + $0xf98] sm:$0xff]
    %v651 = vld [vmem:[#allocation2 + $0xfa0] sm:$0xff]
    %v652 = vld [vmem:[#allocation2 + $0xfa8] sm:$0xff]
    %v653 = vld [vmem:[#allocation2 + $0xfb0] sm:$0xff]
    %v654 = vld [vmem:[#allocation2 + $0xfb8] sm:$0xff]
    %v655 = vld [vmem:[#allocation2 + $0xfc0] sm:$0xff]
    %v656 = vld [vmem:[#allocation2 + $0xfc8] sm:$0xff]
    %v657 = vld [vmem:[#allocation2 + $0xfd0] sm:$0xff]
    %v658 = vld [vmem:[#allocation2 + $0xfd8] sm:$0xff]
    %v659 = vld [vmem:[#allocation2 + $0xfe0] sm:$0xff]
    %v660 = vld [vmem:[#allocation2 + $0xfe8] sm:$0xff]
    %v661 = vld [vmem:[#allocation2 + $0xff0] sm:$0xff]
    %v662 = vld [vmem:[#allocation2 + $0xff8] sm:$0xff]
    %v663 = vld [vmem:[#allocation2 + $0x1000] sm:$0xff]
    %v664 = vld [vmem:[#allocation2 + $0x1008] sm:$0xff]
    %v665 = vld [vmem:[#allocation2 + $0x1010] sm:$0xff]
    %v666 = vld [vmem:[#allocation2 + $0x1018] sm:$0xff]
    %v667 = vld [vmem:[#allocation2 + $0x1020] sm:$0xff]
    %v668 = vld [vmem:[#allocation2 + $0x1028] sm:$0xff]
    %v669 = vld [vmem:[#allocation2 + $0x1030] sm:$0xff]
    %v670 = vld [vmem:[#allocation2 + $0x1038] sm:$0xff]
    %v671 = vld [vmem:[#allocation2 + $0x1040] sm:$0xff]
    %v672 = vld [vmem:[#allocation2 + $0x1048] sm:$0xff]
    %v673 = vld [vmem:[#allocation2 + $0x1050] sm:$0xff]
    %v674 = vld [vmem:[#allocation2 + $0x1058] sm:$0xff]
    %v675 = vld [vmem:[#allocation2 + $0x1060] sm:$0xff]
    %v676 = vld [vmem:[#allocation2 + $0x1068] sm:$0xff]
    %v677 = vld [vmem:[#allocation2 + $0x1070] sm:$0xff]
    %v678 = vld [vmem:[#allocation2 + $0x1078] sm:$0xff]
    %v679 = vld [vmem:[#allocation2 + $0x1080] sm:$0xff]
    %v680 = vld [vmem:[#allocation2 + $0x1088] sm:$0xff]
    %v681 = vld [vmem:[#allocation2 + $0x1090] sm:$0xff]
    %v682 = vld [vmem:[#allocation2 + $0x1098] sm:$0xff]
    %v683 = vld [vmem:[#allocation2 + $0x10a0] sm:$0xff]
    %v684 = vld [vmem:[#allocation2 + $0x10a8] sm:$0xff]
    %v685 = vld [vmem:[#allocation2 + $0x10b0] sm:$0xff]
    %v686 = vld [vmem:[#allocation2 + $0x10b8] sm:$0xff]
    %v687 = vld [vmem:[#allocation2 + $0x10c0] sm:$0xff]
    %v688 = vld [vmem:[#allocation2 + $0x10c8] sm:$0xff]
    %v689 = vld [vmem:[#allocation2 + $0x10d0] sm:$0xff]
    %v690 = vld [vmem:[#allocation2 + $0x10d8] sm:$0xff]
    %v691 = vld [vmem:[#allocation2 + $0x10e0] sm:$0xff]
    %v692 = vld [vmem:[#allocation2 + $0x10e8] sm:$0xff]
    %v693 = vld [vmem:[#allocation2 + $0x10f0] sm:$0xff]
    %v694 = vld [vmem:[#allocation2 + $0x10f8] sm:$0xff]
    %v695 = vld [vmem:[#allocation2 + $0x1100] sm:$0xff]
    %v696 = vld [vmem:[#allocation2 + $0x1108] sm:$0xff]
    %v697 = vld [vmem:[#allocation2 + $0x1110] sm:$0xff]
    %v698 = vld [vmem:[#allocation2 + $0x1118] sm:$0xff]
    %v699 = vld [vmem:[#allocation2 + $0x1120] sm:$0xff]
    %v700 = vld [vmem:[#allocation2 + $0x1128] sm:$0xff]
    %v701 = vld [vmem:[#allocation2 + $0x1130] sm:$0xff]
    %v702 = vld [vmem:[#allocation2 + $0x1138] sm:$0xff]
    %v703 = vld [vmem:[#allocation2 + $0x1140] sm:$0xff]
    %v704 = vld [vmem:[#allocation2 + $0x1148] sm:$0xff]
    %v705 = vld [vmem:[#allocation2 + $0x1150] sm:$0xff]
    %v706 = vld [vmem:[#allocation2 + $0x1158] sm:$0xff]
    %v707 = vld [vmem:[#allocation2 + $0x1160] sm:$0xff]
    %v708 = vld [vmem:[#allocation2 + $0x1168] sm:$0xff]
    %v709 = vld [vmem:[#allocation2 + $0x1170] sm:$0xff]
    %v710 = vld [vmem:[#allocation2 + $0x1178] sm:$0xff]
    %v711 = vld [vmem:[#allocation2 + $0x1180] sm:$0xff]
    %v712 = vld [vmem:[#allocation2 + $0x1188] sm:$0xff]
    %v713 = vld [vmem:[#allocation2 + $0x1190] sm:$0xff]
    %v714 = vld [vmem:[#allocation2 + $0x1198] sm:$0xff]
    %v715 = vld [vmem:[#allocation2 + $0x11a0] sm:$0xff]
    %v716 = vld [vmem:[#allocation2 + $0x11a8] sm:$0xff]
    %v717 = vld [vmem:[#allocation2 + $0x11b0] sm:$0xff]
    %v718 = vld [vmem:[#allocation2 + $0x11b8] sm:$0xff]
    %v719 = vld [vmem:[#allocation2 + $0x11c0] sm:$0xff]
    %v720 = vld [vmem:[#allocation2 + $0x11c8] sm:$0xff]
    %v721 = vld [vmem:[#allocation2 + $0x11d0] sm:$0xff]
    %v722 = vld [vmem:[#allocation2 + $0x11d8] sm:$0xff]
    %v723 = vld [vmem:[#allocation2 + $0x11e0] sm:$0xff]
    %v724 = vld [vmem:[#allocation2 + $0x11e8] sm:$0xff]
    %v725 = vld [vmem:[#allocation2 + $0x11f0] sm:$0xff]
    %v726 = vld [vmem:[#allocation2 + $0x11f8] sm:$0xff]
    %v727 = vld [vmem:[#allocation2 + $0x1200] sm:$0xff]
    %v728 = vld [vmem:[#allocation2 + $0x1208] sm:$0xff]
    %v729 = vld [vmem:[#allocation2 + $0x1210] sm:$0xff]
    %v730 = vld [vmem:[#allocation2 + $0x1218] sm:$0xff]
    %v731 = vld [vmem:[#allocation2 + $0x1220] sm:$0xff]
    %v732 = vld [vmem:[#allocation2 + $0x1228] sm:$0xff]
    %v733 = vld [vmem:[#allocation2 + $0x1230] sm:$0xff]
    %v734 = vld [vmem:[#allocation2 + $0x1238] sm:$0xff]
    %v735 = vld [vmem:[#allocation2 + $0x1240] sm:$0xff]
    %v736 = vld [vmem:[#allocation2 + $0x1248] sm:$0xff]
    %v737 = vld [vmem:[#allocation2 + $0x1250] sm:$0xff]
    %v738 = vld [vmem:[#allocation2 + $0x1258] sm:$0xff]
    %v739 = vld [vmem:[#allocation2 + $0x1260] sm:$0xff]
    %v740 = vld [vmem:[#allocation2 + $0x1268] sm:$0xff]
    %v741 = vld [vmem:[#allocation2 + $0x1270] sm:$0xff]
    %v742 = vld [vmem:[#allocation2 + $0x1278] sm:$0xff]
    %v743 = vld [vmem:[#allocation2 + $0x1280] sm:$0xff]
    %v744 = vld [vmem:[#allocation2 + $0x1288] sm:$0xff]
    %v745 = vld [vmem:[#allocation2 + $0x1290] sm:$0xff]
    %v746 = vld [vmem:[#allocation2 + $0x1298] sm:$0xff]
    %v747 = vld [vmem:[#allocation2 + $0x12a0] sm:$0xff]
    %v748 = vld [vmem:[#allocation2 + $0x12a8] sm:$0xff]
    %v749 = vld [vmem:[#allocation2 + $0x12b0] sm:$0xff]
    %v750 = vld [vmem:[#allocation2 + $0x12b8] sm:$0xff]
    %v751 = vld [vmem:[#allocation2 + $0x12c0] sm:$0xff]
    %v752 = vld [vmem:[#allocation2 + $0x12c8] sm:$0xff]
    %v753 = vld [vmem:[#allocation2 + $0x12d0] sm:$0xff]
    %v754 = vld [vmem:[#allocation2 + $0x12d8] sm:$0xff]
    %v755 = vld [vmem:[#allocation2 + $0x12e0] sm:$0xff]
    %v756 = vld [vmem:[#allocation2 + $0x12e8] sm:$0xff]
    %v757 = vld [vmem:[#allocation2 + $0x12f0] sm:$0xff]
    %v758 = vld [vmem:[#allocation2 + $0x12f8] sm:$0xff]
    %v759 = vld [vmem:[#allocation2 + $0x1300] sm:$0xff]
    %v760 = vld [vmem:[#allocation2 + $0x1308] sm:$0xff]
    %v761 = vld [vmem:[#allocation2 + $0x1310] sm:$0xff]
    %v762 = vld [vmem:[#allocation2 + $0x1318] sm:$0xff]
    %v763 = vld [vmem:[#allocation2 + $0x1320] sm:$0xff]
    %v764 = vld [vmem:[#allocation2 + $0x1328] sm:$0xff]
    %v765 = vld [vmem:[#allocation2 + $0x1330] sm:$0xff]
    %v766 = vld [vmem:[#allocation2 + $0x1338] sm:$0xff]
    %v767 = vld [vmem:[#allocation2 + $0x1340] sm:$0xff]
    %v768 = vld [vmem:[#allocation2 + $0x1348] sm:$0xff]
    %v769 = vld [vmem:[#allocation2 + $0x1350] sm:$0xff]
    %v770 = vld [vmem:[#allocation2 + $0x1358] sm:$0xff]
    %v771 = vld [vmem:[#allocation2 + $0x1360] sm:$0xff]
    %v772 = vld [vmem:[#allocation2 + $0x1368] sm:$0xff]
    %v773 = vld [vmem:[#allocation2 + $0x1370] sm:$0xff]
    %v774 = vld [vmem:[#allocation2 + $0x1378] sm:$0xff]
    %v775 = vld [vmem:[#allocation2 + $0x1380] sm:$0xff]
    %v776 = vld [vmem:[#allocation2 + $0x1388] sm:$0xff]
    %v777 = vld [vmem:[#allocation2 + $0x1390] sm:$0xff]
    %v778 = vld [vmem:[#allocation2 + $0x1398] sm:$0xff]
    %v779 = vld [vmem:[#allocation2 + $0x13a0] sm:$0xff]
    %v780 = vld [vmem:[#allocation2 + $0x13a8] sm:$0xff]
    %v781 = vld [vmem:[#allocation2 + $0x13b0] sm:$0xff]
    %v782 = vld [vmem:[#allocation2 + $0x13b8] sm:$0xff]
    %v783 = vld [vmem:[#allocation2 + $0x13c0] sm:$0xff]
    %v784 = vld [vmem:[#allocation2 + $0x13c8] sm:$0xff]
    %v785 = vld [vmem:[#allocation2 + $0x13d0] sm:$0xff]
    %v786 = vld [vmem:[#allocation2 + $0x13d8] sm:$0xff]
    %v787 = vld [vmem:[#allocation2 + $0x13e0] sm:$0xff]
    %v788 = vld [vmem:[#allocation2 + $0x13e8] sm:$0xff]
    %v789 = vld [vmem:[#allocation2 + $0x13f0] sm:$0xff]
    %v790 = vld [vmem:[#allocation2 + $0x13f8] sm:$0xff]
    %v791 = vld [vmem:[#allocation2 + $0x1400] sm:$0xff]
    %v792 = vld [vmem:[#allocation2 + $0x1408] sm:$0xff]
    %v793 = vld [vmem:[#allocation2 + $0x1410] sm:$0xff]
    %v794 = vld [vmem:[#allocation2 + $0x1418] sm:$0xff]
    %v795 = vld [vmem:[#allocation2 + $0x1420] sm:$0xff]
    %v796 = vld [vmem:[#allocation2 + $0x1428] sm:$0xff]
    %v797 = vld [vmem:[#allocation2 + $0x1430] sm:$0xff]
    %v798 = vld [vmem:[#allocation2 + $0x1438] sm:$0xff]
    %v799 = vld [vmem:[#allocation2 + $0x1440] sm:$0xff]
    %v800 = vld [vmem:[#allocation2 + $0x1448] sm:$0xff]
    %v801 = vld [vmem:[#allocation2 + $0x1450] sm:$0xff]
    %v802 = vld [vmem:[#allocation2 + $0x1458] sm:$0xff]
    %v803 = vld [vmem:[#allocation2 + $0x1460] sm:$0xff]
    %v804 = vld [vmem:[#allocation2 + $0x1468] sm:$0xff]
    %v805 = vld [vmem:[#allocation2 + $0x1470] sm:$0xff]
    %v806 = vld [vmem:[#allocation2 + $0x1478] sm:$0xff]
    %v807 = vld [vmem:[#allocation2 + $0x1480] sm:$0xff]
    %v808 = vld [vmem:[#allocation2 + $0x1488] sm:$0xff]
    %v809 = vld [vmem:[#allocation2 + $0x1490] sm:$0xff]
    %v810 = vld [vmem:[#allocation2 + $0x1498] sm:$0xff]
    %v811 = vld [vmem:[#allocation2 + $0x14a0] sm:$0xff]
    %v812 = vld [vmem:[#allocation2 + $0x14a8] sm:$0xff]
    %v813 = vld [vmem:[#allocation2 + $0x14b0] sm:$0xff]
    %v814 = vld [vmem:[#allocation2 + $0x14b8] sm:$0xff]
    %v815 = vld [vmem:[#allocation2 + $0x14c0] sm:$0xff]
    %v816 = vld [vmem:[#allocation2 + $0x14c8] sm:$0xff]
    %v817 = vld [vmem:[#allocation2 + $0x14d0] sm:$0xff]
    %v818 = vld [vmem:[#allocation2 + $0x14d8] sm:$0xff]
    %v819 = vld [vmem:[#allocation2 + $0x14e0] sm:$0xff]
    %v820 = vld [vmem:[#allocation2 + $0x14e8] sm:$0xff]
    %v821 = vld [vmem:[#allocation2 + $0x14f0] sm:$0xff]
    %v822 = vld [vmem:[#allocation2 + $0x14f8] sm:$0xff]
    %v823 = vld [vmem:[#allocation2 + $0x1500] sm:$0xff]
    %v824 = vld [vmem:[#allocation2 + $0x1508] sm:$0xff]
    %v825 = vld [vmem:[#allocation2 + $0x1510] sm:$0xff]
    %v826 = vld [vmem:[#allocation2 + $0x1518] sm:$0xff]
    %v827 = vld [vmem:[#allocation2 + $0x1520] sm:$0xff]
    %v828 = vld [vmem:[#allocation2 + $0x1528] sm:$0xff]
    %v829 = vld [vmem:[#allocation2 + $0x1530] sm:$0xff]
    %v830 = vld [vmem:[#allocation2 + $0x1538] sm:$0xff]
    %v831 = vld [vmem:[#allocation2 + $0x1540] sm:$0xff]
    %v832 = vld [vmem:[#allocation2 + $0x1548] sm:$0xff]
    %v833 = vld [vmem:[#allocation2 + $0x1550] sm:$0xff]
    %v834 = vld [vmem:[#allocation2 + $0x1558] sm:$0xff]
    %v835 = vld [vmem:[#allocation2 + $0x1560] sm:$0xff]
    %v836 = vld [vmem:[#allocation2 + $0x1568] sm:$0xff]
    %v837 = vld [vmem:[#allocation2 + $0x1570] sm:$0xff]
    %v838 = vld [vmem:[#allocation2 + $0x1578] sm:$0xff]
    %v839 = vld [vmem:[#allocation2 + $0x1580] sm:$0xff]
    %v840 = vld [vmem:[#allocation2 + $0x1588] sm:$0xff]
    %v841 = vld [vmem:[#allocation2 + $0x1590] sm:$0xff]
    %v842 = vld [vmem:[#allocation2 + $0x1598] sm:$0xff]
    %v843 = vld [vmem:[#allocation2 + $0x15a0] sm:$0xff]
    %v844 = vld [vmem:[#allocation2 + $0x15a8] sm:$0xff]
    %v845 = vld [vmem:[#allocation2 + $0x15b0] sm:$0xff]
    %v846 = vld [vmem:[#allocation2 + $0x15b8] sm:$0xff]
    %v847 = vld [vmem:[#allocation2 + $0x15c0] sm:$0xff]
    %v848 = vld [vmem:[#allocation2 + $0x15c8] sm:$0xff]
    %v849 = vld [vmem:[#allocation2 + $0x15d0] sm:$0xff]
    %v850 = vld [vmem:[#allocation2 + $0x15d8] sm:$0xff]
    %v851 = vld [vmem:[#allocation2 + $0x15e0] sm:$0xff]
    %v852 = vld [vmem:[#allocation2 + $0x15e8] sm:$0xff]
    %v853 = vld [vmem:[#allocation2 + $0x15f0] sm:$0xff]
    %v854 = vld [vmem:[#allocation2 + $0x15f8] sm:$0xff]
    %v855 = vld [vmem:[#allocation2 + $0x1600] sm:$0xff]
    %v856 = vld [vmem:[#allocation2 + $0x1608] sm:$0xff]
    %v857 = vld [vmem:[#allocation2 + $0x1610] sm:$0xff]
    %v858 = vld [vmem:[#allocation2 + $0x1618] sm:$0xff]
    %v859 = vld [vmem:[#allocation2 + $0x1620] sm:$0xff]
    %v860 = vld [vmem:[#allocation2 + $0x1628] sm:$0xff]
    %v861 = vld [vmem:[#allocation2 + $0x1630] sm:$0xff]
    %v862 = vld [vmem:[#allocation2 + $0x1638] sm:$0xff]
    %v863 = vld [vmem:[#allocation2 + $0x1640] sm:$0xff]
    %v864 = vld [vmem:[#allocation2 + $0x1648] sm:$0xff]
    %v865 = vld [vmem:[#allocation2 + $0x1650] sm:$0xff]
    %v866 = vld [vmem:[#allocation2 + $0x1658] sm:$0xff]
    %v867 = vld [vmem:[#allocation2 + $0x1660] sm:$0xff]
    %v868 = vld [vmem:[#allocation2 + $0x1668] sm:$0xff]
    %v869 = vld [vmem:[#allocation2 + $0x1670] sm:$0xff]
    %v870 = vld [vmem:[#allocation2 + $0x1678] sm:$0xff]
    %v871 = vld [vmem:[#allocation2 + $0x1680] sm:$0xff]
    %v872 = vld [vmem:[#allocation2 + $0x1688] sm:$0xff]
    %v873 = vld [vmem:[#allocation2 + $0x1690] sm:$0xff]
    %v874 = vld [vmem:[#allocation2 + $0x1698] sm:$0xff]
    %v875 = vld [vmem:[#allocation2 + $0x16a0] sm:$0xff]
    %v876 = vld [vmem:[#allocation2 + $0x16a8] sm:$0xff]
    %v877 = vld [vmem:[#allocation2 + $0x16b0] sm:$0xff]
    %v878 = vld [vmem:[#allocation2 + $0x16b8] sm:$0xff]
    %v879 = vld [vmem:[#allocation2 + $0x16c0] sm:$0xff]
    %v880 = vld [vmem:[#allocation2 + $0x16c8] sm:$0xff]
    %v881 = vld [vmem:[#allocation2 + $0x16d0] sm:$0xff]
    %v882 = vld [vmem:[#allocation2 + $0x16d8] sm:$0xff]
    %v883 = vld [vmem:[#allocation2 + $0x16e0] sm:$0xff]
    %v884 = vld [vmem:[#allocation2 + $0x16e8] sm:$0xff]
    %v885 = vld [vmem:[#allocation2 + $0x16f0] sm:$0xff]
    %v886 = vld [vmem:[#allocation2 + $0x16f8] sm:$0xff]
    %v887 = vld [vmem:[#allocation2 + $0x1700] sm:$0xff]
    %v888 = vld [vmem:[#allocation2 + $0x1708] sm:$0xff]
    %v889 = vld [vmem:[#allocation2 + $0x1710] sm:$0xff]
    %v890 = vld [vmem:[#allocation2 + $0x1718] sm:$0xff]
    %v891 = vld [vmem:[#allocation2 + $0x1720] sm:$0xff]
    %v892 = vld [vmem:[#allocation2 + $0x1728] sm:$0xff]
    %v893 = vld [vmem:[#allocation2 + $0x1730] sm:$0xff]
    %v894 = vld [vmem:[#allocation2 + $0x1738] sm:$0xff]
    %v895 = vld [vmem:[#allocation2 + $0x1740] sm:$0xff]
    %v896 = vld [vmem:[#allocation2 + $0x1748] sm:$0xff]
    %v897 = vld [vmem:[#allocation2 + $0x1750] sm:$0xff]
    %v898 = vld [vmem:[#allocation2 + $0x1758] sm:$0xff]
    %v899 = vld [vmem:[#allocation2 + $0x1760] sm:$0xff]
    %v900 = vld [vmem:[#allocation2 + $0x1768] sm:$0xff]
    %v901 = vld [vmem:[#allocation2 + $0x1770] sm:$0xff]
    %v902 = vld [vmem:[#allocation2 + $0x1778] sm:$0xff]
    %v903 = vld [vmem:[#allocation2 + $0x1780] sm:$0xff]
    %v904 = vld [vmem:[#allocation2 + $0x1788] sm:$0xff]
    %v905 = vld [vmem:[#allocation2 + $0x1790] sm:$0xff]
    %v906 = vld [vmem:[#allocation2 + $0x1798] sm:$0xff]
    %v907 = vld [vmem:[#allocation2 + $0x17a0] sm:$0xff]
    %v908 = vld [vmem:[#allocation2 + $0x17a8] sm:$0xff]
    %v909 = vld [vmem:[#allocation2 + $0x17b0] sm:$0xff]
    %v910 = vld [vmem:[#allocation2 + $0x17b8] sm:$0xff]
    %v911 = vld [vmem:[#allocation2 + $0x17c0] sm:$0xff]
    %v912 = vld [vmem:[#allocation2 + $0x17c8] sm:$0xff]
    %v913 = vld [vmem:[#allocation2 + $0x17d0] sm:$0xff]
    %v914 = vld [vmem:[#allocation2 + $0x17d8] sm:$0xff]
    %v915 = vld [vmem:[#allocation2 + $0x17e0] sm:$0xff]
    %v916 = vld [vmem:[#allocation2 + $0x17e8] sm:$0xff]
    %v917 = vld [vmem:[#allocation2 + $0x17f0] sm:$0xff]
    %v918 = vld [vmem:[#allocation2 + $0x17f8] sm:$0xff]
    %v919 = vld [vmem:[#allocation2 + $0x1800] sm:$0xff]
    %v920 = vld [vmem:[#allocation2 + $0x1808] sm:$0xff]
    %v921 = vld [vmem:[#allocation2 + $0x1810] sm:$0xff]
    %v922 = vld [vmem:[#allocation2 + $0x1818] sm:$0xff]
    %v923 = vld [vmem:[#allocation2 + $0x1820] sm:$0xff]
    %v924 = vld [vmem:[#allocation2 + $0x1828] sm:$0xff]
    %v925 = vld [vmem:[#allocation2 + $0x1830] sm:$0xff]
    %v926 = vld [vmem:[#allocation2 + $0x1838] sm:$0xff]
    %v927 = vld [vmem:[#allocation2 + $0x1840] sm:$0xff]
    %v928 = vld [vmem:[#allocation2 + $0x1848] sm:$0xff]
    %v929 = vld [vmem:[#allocation2 + $0x1850] sm:$0xff]
    %v930 = vld [vmem:[#allocation2 + $0x1858] sm:$0xff]
    %v931 = vld [vmem:[#allocation2 + $0x1860] sm:$0xff]
    %v932 = vld [vmem:[#allocation2 + $0x1868] sm:$0xff]
    %v933 = vld [vmem:[#allocation2 + $0x1870] sm:$0xff]
    %v934 = vld [vmem:[#allocation2 + $0x1878] sm:$0xff]
    %v935 = vld [vmem:[#allocation2 + $0x1880] sm:$0xff]
    %v936 = vld [vmem:[#allocation2 + $0x1888] sm:$0xff]
    %v937 = vld [vmem:[#allocation2 + $0x1890] sm:$0xff]
    %v938 = vld [vmem:[#allocation2 + $0x1898] sm:$0xff]
    %v939 = vld [vmem:[#allocation2 + $0x18a0] sm:$0xff]
    %v940 = vld [vmem:[#allocation2 + $0x18a8] sm:$0xff]
    %v941 = vld [vmem:[#allocation2 + $0x18b0] sm:$0xff]
    %v942 = vld [vmem:[#allocation2 + $0x18b8] sm:$0xff]
    %v943 = vld [vmem:[#allocation2 + $0x18c0] sm:$0xff]
    %v944 = vld [vmem:[#allocation2 + $0x18c8] sm:$0xff]
    %v945 = vld [vmem:[#allocation2 + $0x18d0] sm:$0xff]
    %v946 = vld [vmem:[#allocation2 + $0x18d8] sm:$0xff]
    %v947 = vld [vmem:[#allocation2 + $0x18e0] sm:$0xff]
    %v948 = vld [vmem:[#allocation2 + $0x18e8] sm:$0xff]
    %v949 = vld [vmem:[#allocation2 + $0x18f0] sm:$0xff]
    %v950 = vld [vmem:[#allocation2 + $0x18f8] sm:$0xff]
    %v951 = vld [vmem:[#allocation2 + $0x1900] sm:$0xff]
    %v952 = vld [vmem:[#allocation2 + $0x1908] sm:$0xff]
    %v953 = vld [vmem:[#allocation2 + $0x1910] sm:$0xff]
    %v954 = vld [vmem:[#allocation2 + $0x1918] sm:$0xff]
    %v955 = vld [vmem:[#allocation2 + $0x1920] sm:$0xff]
    %v956 = vld [vmem:[#allocation2 + $0x1928] sm:$0xff]
    %v957 = vld [vmem:[#allocation2 + $0x1930] sm:$0xff]
    %v958 = vld [vmem:[#allocation2 + $0x1938] sm:$0xff]
    %v959 = vld [vmem:[#allocation2 + $0x1940] sm:$0xff]
    %v960 = vld [vmem:[#allocation2 + $0x1948] sm:$0xff]
    %v961 = vld [vmem:[#allocation2 + $0x1950] sm:$0xff]
    %v962 = vld [vmem:[#allocation2 + $0x1958] sm:$0xff]
    %v963 = vld [vmem:[#allocation2 + $0x1960] sm:$0xff]
    %v964 = vld [vmem:[#allocation2 + $0x1968] sm:$0xff]
    %v965 = vld [vmem:[#allocation2 + $0x1970] sm:$0xff]
    %v966 = vld [vmem:[#allocation2 + $0x1978] sm:$0xff]
    %v967 = vld [vmem:[#allocation2 + $0x1980] sm:$0xff]
    %v968 = vld [vmem:[#allocation2 + $0x1988] sm:$0xff]
    %v969 = vld [vmem:[#allocation2 + $0x1990] sm:$0xff]
    %v970 = vld [vmem:[#allocation2 + $0x1998] sm:$0xff]
    %v971 = vld [vmem:[#allocation2 + $0x19a0] sm:$0xff]
    %v972 = vld [vmem:[#allocation2 + $0x19a8] sm:$0xff]
    %v973 = vld [vmem:[#allocation2 + $0x19b0] sm:$0xff]
    %v974 = vld [vmem:[#allocation2 + $0x19b8] sm:$0xff]
    %v975 = vld [vmem:[#allocation2 + $0x19c0] sm:$0xff]
    %v976 = vld [vmem:[#allocation2 + $0x19c8] sm:$0xff]
    %v977 = vld [vmem:[#allocation2 + $0x19d0] sm:$0xff]
    %v978 = vld [vmem:[#allocation2 + $0x19d8] sm:$0xff]
    %v979 = vld [vmem:[#allocation2 + $0x19e0] sm:$0xff]
    %v980 = vld [vmem:[#allocation2 + $0x19e8] sm:$0xff]
    %v981 = vld [vmem:[#allocation2 + $0x19f0] sm:$0xff]
    %v982 = vld [vmem:[#allocation2 + $0x19f8] sm:$0xff]
    %v983 = vld [vmem:[#allocation2 + $0x1a00] sm:$0xff]
    %v984 = vld [vmem:[#allocation2 + $0x1a08] sm:$0xff]
    %v985 = vld [vmem:[#allocation2 + $0x1a10] sm:$0xff]
    %v986 = vld [vmem:[#allocation2 + $0x1a18] sm:$0xff]
    %v987 = vld [vmem:[#allocation2 + $0x1a20] sm:$0xff]
    %v988 = vld [vmem:[#allocation2 + $0x1a28] sm:$0xff]
    %v989 = vld [vmem:[#allocation2 + $0x1a30] sm:$0xff]
    %v990 = vld [vmem:[#allocation2 + $0x1a38] sm:$0xff]
    %v991 = vld [vmem:[#allocation2 + $0x1a40] sm:$0xff]
    %v992 = vld [vmem:[#allocation2 + $0x1a48] sm:$0xff]
    %v993 = vld [vmem:[#allocation2 + $0x1a50] sm:$0xff]
    %v994 = vld [vmem:[#allocation2 + $0x1a58] sm:$0xff]
    %v995 = vld [vmem:[#allocation2 + $0x1a60] sm:$0xff]
    %v996 = vld [vmem:[#allocation2 + $0x1a68] sm:$0xff]
    %v997 = vld [vmem:[#allocation2 + $0x1a70] sm:$0xff]
    %v998 = vld [vmem:[#allocation2 + $0x1a78] sm:$0xff]
    %v999 = vld [vmem:[#allocation2 + $0x1a80] sm:$0xff]
    %v1000 = vld [vmem:[#allocation2 + $0x1a88] sm:$0xff]
    %v1001 = vld [vmem:[#allocation2 + $0x1a90] sm:$0xff]
    %v1002 = vld [vmem:[#allocation2 + $0x1a98] sm:$0xff]
    %v1003 = vld [vmem:[#allocation2 + $0x1aa0] sm:$0xff]
    %v1004 = vld [vmem:[#allocation2 + $0x1aa8] sm:$0xff]
    %v1005 = vld [vmem:[#allocation2 + $0x1ab0] sm:$0xff]
    %v1006 = vld [vmem:[#allocation2 + $0x1ab8] sm:$0xff]
    %v1007 = vld [vmem:[#allocation2 + $0x1ac0] sm:$0xff]
    %v1008 = vld [vmem:[#allocation2 + $0x1ac8] sm:$0xff]
    %v1009 = vld [vmem:[#allocation2 + $0x1ad0] sm:$0xff]
    %v1010 = vld [vmem:[#allocation2 + $0x1ad8] sm:$0xff]
    %v1011 = vld [vmem:[#allocation2 + $0x1ae0] sm:$0xff]
    %v1012 = vld [vmem:[#allocation2 + $0x1ae8] sm:$0xff]
    %v1013 = vld [vmem:[#allocation2 + $0x1af0] sm:$0xff]
    %v1014 = vld [vmem:[#allocation2 + $0x1af8] sm:$0xff]
    %v1015 = vld [vmem:[#allocation2 + $0x1b00] sm:$0xff]
    %v1016 = vld [vmem:[#allocation2 + $0x1b08] sm:$0xff]
    %v1017 = vld [vmem:[#allocation2 + $0x1b10] sm:$0xff]
    %v1018 = vld [vmem:[#allocation2 + $0x1b18] sm:$0xff]
    %v1019 = vld [vmem:[#allocation2 + $0x1b20] sm:$0xff]
    %v1020 = vld [vmem:[#allocation2 + $0x1b28] sm:$0xff]
    %v1021 = vld [vmem:[#allocation2 + $0x1b30] sm:$0xff]
    %v1022 = vld [vmem:[#allocation2 + $0x1b38] sm:$0xff]
    %v1023 = vld [vmem:[#allocation2 + $0x1b40] sm:$0xff]
    %v1024 = vld [vmem:[#allocation2 + $0x1b48] sm:$0xff]
    %v1025 = vld [vmem:[#allocation2 + $0x1b50] sm:$0xff]
    %v1026 = vld [vmem:[#allocation2 + $0x1b58] sm:$0xff]
    %v1027 = vld [vmem:[#allocation2 + $0x1b60] sm:$0xff]
    %v1028 = vld [vmem:[#allocation2 + $0x1b68] sm:$0xff]
    %v1029 = vld [vmem:[#allocation2 + $0x1b70] sm:$0xff]
    %v1030 = vld [vmem:[#allocation2 + $0x1b78] sm:$0xff]
    %v1031 = vld [vmem:[#allocation2 + $0x1b80] sm:$0xff]
    %v1032 = vld [vmem:[#allocation2 + $0x1b88] sm:$0xff]
    %v1033 = vld [vmem:[#allocation2 + $0x1b90] sm:$0xff]
    %v1034 = vld [vmem:[#allocation2 + $0x1b98] sm:$0xff]
    %v1035 = vld [vmem:[#allocation2 + $0x1ba0] sm:$0xff]
    %v1036 = vld [vmem:[#allocation2 + $0x1ba8] sm:$0xff]
    %v1037 = vld [vmem:[#allocation2 + $0x1bb0] sm:$0xff]
    %v1038 = vld [vmem:[#allocation2 + $0x1bb8] sm:$0xff]
    %v1039 = vld [vmem:[#allocation2 + $0x1bc0] sm:$0xff]
    %v1040 = vld [vmem:[#allocation2 + $0x1bc8] sm:$0xff]
    %v1041 = vld [vmem:[#allocation2 + $0x1bd0] sm:$0xff]
    %v1042 = vld [vmem:[#allocation2 + $0x1bd8] sm:$0xff]
    %v1043 = vld [vmem:[#allocation2 + $0x1be0] sm:$0xff]
    %v1044 = vld [vmem:[#allocation2 + $0x1be8] sm:$0xff]
    %v1045 = vld [vmem:[#allocation2 + $0x1bf0] sm:$0xff]
    %v1046 = vld [vmem:[#allocation2 + $0x1bf8] sm:$0xff]
    %v1047 = vld [vmem:[#allocation2 + $0x1c00] sm:$0xff]
    %v1048 = vld [vmem:[#allocation2 + $0x1c08] sm:$0xff]
    %v1049 = vld [vmem:[#allocation2 + $0x1c10] sm:$0xff]
    %v1050 = vld [vmem:[#allocation2 + $0x1c18] sm:$0xff]
    %v1051 = vld [vmem:[#allocation2 + $0x1c20] sm:$0xff]
    %v1052 = vld [vmem:[#allocation2 + $0x1c28] sm:$0xff]
    %v1053 = vld [vmem:[#allocation2 + $0x1c30] sm:$0xff]
    %v1054 = vld [vmem:[#allocation2 + $0x1c38] sm:$0xff]
    %v1055 = vld [vmem:[#allocation2 + $0x1c40] sm:$0xff]
    %v1056 = vld [vmem:[#allocation2 + $0x1c48] sm:$0xff]
    %v1057 = vld [vmem:[#allocation2 + $0x1c50] sm:$0xff]
    %v1058 = vld [vmem:[#allocation2 + $0x1c58] sm:$0xff]
    %v1059 = vld [vmem:[#allocation2 + $0x1c60] sm:$0xff]
    %v1060 = vld [vmem:[#allocation2 + $0x1c68] sm:$0xff]
    %v1061 = vld [vmem:[#allocation2 + $0x1c70] sm:$0xff]
    %v1062 = vld [vmem:[#allocation2 + $0x1c78] sm:$0xff]
    %v1063 = vld [vmem:[#allocation2 + $0x1c80] sm:$0xff]
    %v1064 = vld [vmem:[#allocation2 + $0x1c88] sm:$0xff]
    %v1065 = vld [vmem:[#allocation2 + $0x1c90] sm:$0xff]
    %v1066 = vld [vmem:[#allocation2 + $0x1c98] sm:$0xff]
    %v1067 = vld [vmem:[#allocation2 + $0x1ca0] sm:$0xff]
    %v1068 = vld [vmem:[#allocation2 + $0x1ca8] sm:$0xff]
    %v1069 = vld [vmem:[#allocation2 + $0x1cb0] sm:$0xff]
    %v1070 = vld [vmem:[#allocation2 + $0x1cb8] sm:$0xff]
    %v1071 = vld [vmem:[#allocation2 + $0x1cc0] sm:$0xff]
    %v1072 = vld [vmem:[#allocation2 + $0x1cc8] sm:$0xff]
    %v1073 = vld [vmem:[#allocation2 + $0x1cd0] sm:$0xff]
    %v1074 = vld [vmem:[#allocation2 + $0x1cd8] sm:$0xff]
    %v1075 = vld [vmem:[#allocation2 + $0x1ce0] sm:$0xff]
    %v1076 = vld [vmem:[#allocation2 + $0x1ce8] sm:$0xff]
    %v1077 = vld [vmem:[#allocation2 + $0x1cf0] sm:$0xff]
    %v1078 = vld [vmem:[#allocation2 + $0x1cf8] sm:$0xff]
    %v1079 = vld [vmem:[#allocation2 + $0x1d00] sm:$0xff]
    %v1080 = vld [vmem:[#allocation2 + $0x1d08] sm:$0xff]
    %v1081 = vld [vmem:[#allocation2 + $0x1d10] sm:$0xff]
    %v1082 = vld [vmem:[#allocation2 + $0x1d18] sm:$0xff]
    %v1083 = vld [vmem:[#allocation2 + $0x1d20] sm:$0xff]
    %v1084 = vld [vmem:[#allocation2 + $0x1d28] sm:$0xff]
    %v1085 = vld [vmem:[#allocation2 + $0x1d30] sm:$0xff]
    %v1086 = vld [vmem:[#allocation2 + $0x1d38] sm:$0xff]
    %v1087 = vld [vmem:[#allocation2 + $0x1d40] sm:$0xff]
    %v1088 = vld [vmem:[#allocation2 + $0x1d48] sm:$0xff]
    %v1089 = vld [vmem:[#allocation2 + $0x1d50] sm:$0xff]
    %v1090 = vld [vmem:[#allocation2 + $0x1d58] sm:$0xff]
    %v1091 = vld [vmem:[#allocation2 + $0x1d60] sm:$0xff]
    %v1092 = vld [vmem:[#allocation2 + $0x1d68] sm:$0xff]
    %v1093 = vld [vmem:[#allocation2 + $0x1d70] sm:$0xff]
    %v1094 = vld [vmem:[#allocation2 + $0x1d78] sm:$0xff]
    %v1095 = vld [vmem:[#allocation2 + $0x1d80] sm:$0xff]
    %v1096 = vld [vmem:[#allocation2 + $0x1d88] sm:$0xff]
    %v1097 = vld [vmem:[#allocation2 + $0x1d90] sm:$0xff]
    %v1098 = vld [vmem:[#allocation2 + $0x1d98] sm:$0xff]
    %v1099 = vld [vmem:[#allocation2 + $0x1da0] sm:$0xff]
    %v1100 = vld [vmem:[#allocation2 + $0x1da8] sm:$0xff]
    %v1101 = vld [vmem:[#allocation2 + $0x1db0] sm:$0xff]
    %v1102 = vld [vmem:[#allocation2 + $0x1db8] sm:$0xff]
    %v1103 = vld [vmem:[#allocation2 + $0x1dc0] sm:$0xff]
    %v1104 = vld [vmem:[#allocation2 + $0x1dc8] sm:$0xff]
    %v1105 = vld [vmem:[#allocation2 + $0x1dd0] sm:$0xff]
    %v1106 = vld [vmem:[#allocation2 + $0x1dd8] sm:$0xff]
    %v1107 = vld [vmem:[#allocation2 + $0x1de0] sm:$0xff]
    %v1108 = vld [vmem:[#allocation2 + $0x1de8] sm:$0xff]
    %v1109 = vld [vmem:[#allocation2 + $0x1df0] sm:$0xff]
    %v1110 = vld [vmem:[#allocation2 + $0x1df8] sm:$0xff]
    %v1111 = vld [vmem:[#allocation2 + $0x1e00] sm:$0xff]
    %v1112 = vld [vmem:[#allocation2 + $0x1e08] sm:$0xff]
    %v1113 = vld [vmem:[#allocation2 + $0x1e10] sm:$0xff]
    %v1114 = vld [vmem:[#allocation2 + $0x1e18] sm:$0xff]
    %v1115 = vld [vmem:[#allocation2 + $0x1e20] sm:$0xff]
    %v1116 = vld [vmem:[#allocation2 + $0x1e28] sm:$0xff]
    %v1117 = vld [vmem:[#allocation2 + $0x1e30] sm:$0xff]
    %v1118 = vld [vmem:[#allocation2 + $0x1e38] sm:$0xff]
    %v1119 = vld [vmem:[#allocation2 + $0x1e40] sm:$0xff]
    %v1120 = vld [vmem:[#allocation2 + $0x1e48] sm:$0xff]
    %v1121 = vld [vmem:[#allocation2 + $0x1e50] sm:$0xff]
    %v1122 = vld [vmem:[#allocation2 + $0x1e58] sm:$0xff]
    %v1123 = vld [vmem:[#allocation2 + $0x1e60] sm:$0xff]
    %v1124 = vld [vmem:[#allocation2 + $0x1e68] sm:$0xff]
    %v1125 = vld [vmem:[#allocation2 + $0x1e70] sm:$0xff]
    %v1126 = vld [vmem:[#allocation2 + $0x1e78] sm:$0xff]
    %v1127 = vld [vmem:[#allocation2 + $0x1e80] sm:$0xff]
    %v1128 = vld [vmem:[#allocation2 + $0x1e88] sm:$0xff]
    %v1129 = vld [vmem:[#allocation2 + $0x1e90] sm:$0xff]
    %v1130 = vld [vmem:[#allocation2 + $0x1e98] sm:$0xff]
    %v1131 = vld [vmem:[#allocation2 + $0x1ea0] sm:$0xff]
    %v1132 = vld [vmem:[#allocation2 + $0x1ea8] sm:$0xff]
    %v1133 = vld [vmem:[#allocation2 + $0x1eb0] sm:$0xff]
    %v1134 = vld [vmem:[#allocation2 + $0x1eb8] sm:$0xff]
    %v1135 = vld [vmem:[#allocation2 + $0x1ec0] sm:$0xff]
    %v1136 = vld [vmem:[#allocation2 + $0x1ec8] sm:$0xff]
    %v1137 = vld [vmem:[#allocation2 + $0x1ed0] sm:$0xff]
    %v1138 = vld [vmem:[#allocation2 + $0x1ed8] sm:$0xff]
    %v1139 = vld [vmem:[#allocation2 + $0x1ee0] sm:$0xff]
    %v1140 = vld [vmem:[#allocation2 + $0x1ee8] sm:$0xff]
    %v1141 = vld [vmem:[#allocation2 + $0x1ef0] sm:$0xff]
    %v1142 = vld [vmem:[#allocation2 + $0x1ef8] sm:$0xff]
    %v1143 = vld [vmem:[#allocation2 + $0x1f00] sm:$0xff]
    %v1144 = vld [vmem:[#allocation2 + $0x1f08] sm:$0xff]
    %v1145 = vld [vmem:[#allocation2 + $0x1f10] sm:$0xff]
    %v1146 = vld [vmem:[#allocation2 + $0x1f18] sm:$0xff]
    %v1147 = vld [vmem:[#allocation2 + $0x1f20] sm:$0xff]
    %v1148 = vld [vmem:[#allocation2 + $0x1f28] sm:$0xff]
    %v1149 = vld [vmem:[#allocation2 + $0x1f30] sm:$0xff]
    %v1150 = vld [vmem:[#allocation2 + $0x1f38] sm:$0xff]
    %v1151 = vld [vmem:[#allocation2 + $0x1f40] sm:$0xff]
    %v1152 = vld [vmem:[#allocation2 + $0x1f48] sm:$0xff]
    %v1153 = vld [vmem:[#allocation2 + $0x1f50] sm:$0xff]
    %v1154 = vld [vmem:[#allocation2 + $0x1f58] sm:$0xff]
    %v1155 = vld [vmem:[#allocation2 + $0x1f60] sm:$0xff]
    %v1156 = vld [vmem:[#allocation2 + $0x1f68] sm:$0xff]
    %v1157 = vld [vmem:[#allocation2 + $0x1f70] sm:$0xff]
    %v1158 = vld [vmem:[#allocation2 + $0x1f78] sm:$0xff]
    %v1159 = vld [vmem:[#allocation2 + $0x1f80] sm:$0xff]
    %v1160 = vld [vmem:[#allocation2 + $0x1f88] sm:$0xff]
    %v1161 = vld [vmem:[#allocation2 + $0x1f90] sm:$0xff]
    %v1162 = vld [vmem:[#allocation2 + $0x1f98] sm:$0xff]
    %v1163 = vld [vmem:[#allocation2 + $0x1fa0] sm:$0xff]
    %v1164 = vld [vmem:[#allocation2 + $0x1fa8] sm:$0xff]
    %v1165 = vld [vmem:[#allocation2 + $0x1fb0] sm:$0xff]
    %v1166 = vld [vmem:[#allocation2 + $0x1fb8] sm:$0xff]
    %v1167 = vld [vmem:[#allocation2 + $0x1fc0] sm:$0xff]
    %v1168 = vld [vmem:[#allocation2 + $0x1fc8] sm:$0xff]
    %v1169 = vld [vmem:[#allocation2 + $0x1fd0] sm:$0xff]
    %v1170 = vld [vmem:[#allocation2 + $0x1fd8] sm:$0xff]
    %v1171 = vld [vmem:[#allocation2 + $0x1fe0] sm:$0xff]
    %v1172 = vld [vmem:[#allocation2 + $0x1fe8] sm:$0xff]
    %v1173 = vld [vmem:[#allocation2 + $0x1ff0] sm:$0xff]
    %v1174 = vld [vmem:[#allocation2 + $0x1ff8] sm:$0xff]
    %v1175 = vld [vmem:[#allocation2 + $0x2000] sm:$0xff]
    %v1176 = vld [vmem:[#allocation2 + $0x2008] sm:$0xff]
    %v1177 = vld [vmem:[#allocation2 + $0x2010] sm:$0xff]
    %v1178 = vld [vmem:[#allocation2 + $0x2018] sm:$0xff]
    %v1179 = vld [vmem:[#allocation2 + $0x2020] sm:$0xff]
    %v1180 = vld [vmem:[#allocation2 + $0x2028] sm:$0xff]
    %v1181 = vld [vmem:[#allocation2 + $0x2030] sm:$0xff]
    %v1182 = vld [vmem:[#allocation2 + $0x2038] sm:$0xff]
    %v1183 = vld [vmem:[#allocation2 + $0x2040] sm:$0xff]
    %v1184 = vld [vmem:[#allocation2 + $0x2048] sm:$0xff]
    %v1185 = vld [vmem:[#allocation2 + $0x2050] sm:$0xff]
    %v1186 = vld [vmem:[#allocation2 + $0x2058] sm:$0xff]
    %v1187 = vld [vmem:[#allocation2 + $0x2060] sm:$0xff]
    %v1188 = vld [vmem:[#allocation2 + $0x2068] sm:$0xff]
    %v1189 = vld [vmem:[#allocation2 + $0x2070] sm:$0xff]
    %v1190 = vld [vmem:[#allocation2 + $0x2078] sm:$0xff]
    %v1191 = vld [vmem:[#allocation2 + $0x2080] sm:$0xff]
    %v1192 = vld [vmem:[#allocation2 + $0x2088] sm:$0xff]
    %v1193 = vld [vmem:[#allocation2 + $0x2090] sm:$0xff]
    %v1194 = vld [vmem:[#allocation2 + $0x2098] sm:$0xff]
    %v1195 = vld [vmem:[#allocation2 + $0x20a0] sm:$0xff]
    %v1196 = vld [vmem:[#allocation2 + $0x20a8] sm:$0xff]
    %v1197 = vld [vmem:[#allocation2 + $0x20b0] sm:$0xff]
    %v1198 = vld [vmem:[#allocation2 + $0x20b8] sm:$0xff]
    %v1199 = vld [vmem:[#allocation2 + $0x20c0] sm:$0xff]
    %v1200 = vld [vmem:[#allocation2 + $0x20c8] sm:$0xff]
    %v1201 = vld [vmem:[#allocation2 + $0x20d0] sm:$0xff]
    %v1202 = vld [vmem:[#allocation2 + $0x20d8] sm:$0xff]
    %v1203 = vld [vmem:[#allocation2 + $0x20e0] sm:$0xff]
    %v1204 = vld [vmem:[#allocation2 + $0x20e8] sm:$0xff]
    %v1205 = vld [vmem:[#allocation2 + $0x20f0] sm:$0xff]
    %v1206 = vld [vmem:[#allocation2 + $0x20f8] sm:$0xff]
    %v1207 = vld [vmem:[#allocation2 + $0x2100] sm:$0xff]
    %v1208 = vld [vmem:[#allocation2 + $0x2108] sm:$0xff]
    %v1209 = vld [vmem:[#allocation2 + $0x2110] sm:$0xff]
    %v1210 = vld [vmem:[#allocation2 + $0x2118] sm:$0xff]
    %v1211 = vld [vmem:[#allocation2 + $0x2120] sm:$0xff]
    %v1212 = vld [vmem:[#allocation2 + $0x2128] sm:$0xff]
    %v1213 = vld [vmem:[#allocation2 + $0x2130] sm:$0xff]
    %v1214 = vld [vmem:[#allocation2 + $0x2138] sm:$0xff]
    %v1215 = vld [vmem:[#allocation2 + $0x2140] sm:$0xff]
    %v1216 = vld [vmem:[#allocation2 + $0x2148] sm:$0xff]
    %v1217 = vld [vmem:[#allocation2 + $0x2150] sm:$0xff]
    %v1218 = vld [vmem:[#allocation2 + $0x2158] sm:$0xff]
    %v1219 = vld [vmem:[#allocation2 + $0x2160] sm:$0xff]
    %v1220 = vld [vmem:[#allocation2 + $0x2168] sm:$0xff]
    %v1221 = vld [vmem:[#allocation2 + $0x2170] sm:$0xff]
    %v1222 = vld [vmem:[#allocation2 + $0x2178] sm:$0xff]
    %v1223 = vld [vmem:[#allocation2 + $0x2180] sm:$0xff]
    %v1224 = vld [vmem:[#allocation2 + $0x2188] sm:$0xff]
    %v1225 = vld [vmem:[#allocation2 + $0x2190] sm:$0xff]
    %v1226 = vld [vmem:[#allocation2 + $0x2198] sm:$0xff]
    %v1227 = vld [vmem:[#allocation2 + $0x21a0] sm:$0xff]
    %v1228 = vld [vmem:[#allocation2 + $0x21a8] sm:$0xff]
    %v1229 = vld [vmem:[#allocation2 + $0x21b0] sm:$0xff]
    %v1230 = vld [vmem:[#allocation2 + $0x21b8] sm:$0xff]
    %v1231 = vld [vmem:[#allocation2 + $0x21c0] sm:$0xff]
    %v1232 = vld [vmem:[#allocation2 + $0x21c8] sm:$0xff]
    %v1233 = vld [vmem:[#allocation2 + $0x21d0] sm:$0xff]
    %v1234 = vld [vmem:[#allocation2 + $0x21d8] sm:$0xff]
    %v1235 = vld [vmem:[#allocation2 + $0x21e0] sm:$0xff]
    %v1236 = vld [vmem:[#allocation2 + $0x21e8] sm:$0xff]
    %v1237 = vld [vmem:[#allocation2 + $0x21f0] sm:$0xff]
    %v1238 = vld [vmem:[#allocation2 + $0x21f8] sm:$0xff]
    %v1239 = vld [vmem:[#allocation2 + $0x2200] sm:$0xff]
    %v1240 = vld [vmem:[#allocation2 + $0x2208] sm:$0xff]
    %v1241 = vld [vmem:[#allocation2 + $0x2210] sm:$0xff]
    %v1242 = vld [vmem:[#allocation2 + $0x2218] sm:$0xff]
    %v1243 = vld [vmem:[#allocation2 + $0x2220] sm:$0xff]
    %v1244 = vld [vmem:[#allocation2 + $0x2228] sm:$0xff]
    %v1245 = vld [vmem:[#allocation2 + $0x2230] sm:$0xff]
    %v1246 = vld [vmem:[#allocation2 + $0x2238] sm:$0xff]
    %v1247 = vld [vmem:[#allocation2 + $0x2240] sm:$0xff]
    %v1248 = vld [vmem:[#allocation2 + $0x2248] sm:$0xff]
    %v1249 = vld [vmem:[#allocation2 + $0x2250] sm:$0xff]
    %v1250 = vld [vmem:[#allocation2 + $0x2258] sm:$0xff]
    %v1251 = vld [vmem:[#allocation2 + $0x2260] sm:$0xff]
    %v1252 = vld [vmem:[#allocation2 + $0x2268] sm:$0xff]
    %v1253 = vld [vmem:[#allocation2 + $0x2270] sm:$0xff]
    %v1254 = vld [vmem:[#allocation2 + $0x2278] sm:$0xff]
    %v1255 = vld [vmem:[#allocation2 + $0x2280] sm:$0xff]
    %v1256 = vld [vmem:[#allocation2 + $0x2288] sm:$0xff]
    %v1257 = vld [vmem:[#allocation2 + $0x2290] sm:$0xff]
    %v1258 = vld [vmem:[#allocation2 + $0x2298] sm:$0xff]
    %v1259 = vld [vmem:[#allocation2 + $0x22a0] sm:$0xff]
    %v1260 = vld [vmem:[#allocation2 + $0x22a8] sm:$0xff]
    %v1261 = vld [vmem:[#allocation2 + $0x22b0] sm:$0xff]
    %v1262 = vld [vmem:[#allocation2 + $0x22b8] sm:$0xff]
    %v1263 = vld [vmem:[#allocation2 + $0x22c0] sm:$0xff]
    %v1264 = vld [vmem:[#allocation2 + $0x22c8] sm:$0xff]
    %v1265 = vld [vmem:[#allocation2 + $0x22d0] sm:$0xff]
    %v1266 = vld [vmem:[#allocation2 + $0x22d8] sm:$0xff]
    %v1267 = vld [vmem:[#allocation2 + $0x22e0] sm:$0xff]
    %v1268 = vld [vmem:[#allocation2 + $0x22e8] sm:$0xff]
    %v1269 = vld [vmem:[#allocation2 + $0x22f0] sm:$0xff]
    %v1270 = vld [vmem:[#allocation2 + $0x22f8] sm:$0xff]
    %v1271 = vld [vmem:[#allocation2 + $0x2300] sm:$0xff]
    %v1272 = vld [vmem:[#allocation2 + $0x2308] sm:$0xff]
    %v1273 = vld [vmem:[#allocation2 + $0x2310] sm:$0xff]
    %v1274 = vld [vmem:[#allocation2 + $0x2318] sm:$0xff]
    %v1275 = vld [vmem:[#allocation2 + $0x2320] sm:$0xff]
    %v1276 = vld [vmem:[#allocation2 + $0x2328] sm:$0xff]
    %v1277 = vld [vmem:[#allocation2 + $0x2330] sm:$0xff]
    %v1278 = vld [vmem:[#allocation2 + $0x2338] sm:$0xff]
    %v1279 = vld [vmem:[#allocation2 + $0x2340] sm:$0xff]
    %v1280 = vld [vmem:[#allocation2 + $0x2348] sm:$0xff]
    %v1281 = vld [vmem:[#allocation2 + $0x2350] sm:$0xff]
    %v1282 = vld [vmem:[#allocation2 + $0x2358] sm:$0xff]
    %v1283 = vld [vmem:[#allocation2 + $0x2360] sm:$0xff]
    %v1284 = vld [vmem:[#allocation2 + $0x2368] sm:$0xff]
    %v1285 = vld [vmem:[#allocation2 + $0x2370] sm:$0xff]
    %v1286 = vld [vmem:[#allocation2 + $0x2378] sm:$0xff]
    %v1287 = vld [vmem:[#allocation2 + $0x2380] sm:$0xff]
    %v1288 = vld [vmem:[#allocation2 + $0x2388] sm:$0xff]
    %v1289 = vld [vmem:[#allocation2 + $0x2390] sm:$0xff]
    %v1290 = vld [vmem:[#allocation2 + $0x2398] sm:$0xff]
    %v1291 = vld [vmem:[#allocation2 + $0x23a0] sm:$0xff]
    %v1292 = vld [vmem:[#allocation2 + $0x23a8] sm:$0xff]
    %v1293 = vld [vmem:[#allocation2 + $0x23b0] sm:$0xff]
    %v1294 = vld [vmem:[#allocation2 + $0x23b8] sm:$0xff]
    %v1295 = vld [vmem:[#allocation2 + $0x23c0] sm:$0xff]
    %v1296 = vld [vmem:[#allocation2 + $0x23c8] sm:$0xff]
    %v1297 = vld [vmem:[#allocation2 + $0x23d0] sm:$0xff]
    %v1298 = vld [vmem:[#allocation2 + $0x23d8] sm:$0xff]
    %v1299 = vld [vmem:[#allocation2 + $0x23e0] sm:$0xff]
    %v1300 = vld [vmem:[#allocation2 + $0x23e8] sm:$0xff]
    %v1301 = vld [vmem:[#allocation2 + $0x23f0] sm:$0xff]
    %v1302 = vld [vmem:[#allocation2 + $0x23f8] sm:$0xff]
    %v1303 = vld [vmem:[#allocation2 + $0x2400] sm:$0xff]
    %v1304 = vld [vmem:[#allocation2 + $0x2408] sm:$0xff]
    %v1305 = vld [vmem:[#allocation2 + $0x2410] sm:$0xff]
    %v1306 = vld [vmem:[#allocation2 + $0x2418] sm:$0xff]
    %v1307 = vld [vmem:[#allocation2 + $0x2420] sm:$0xff]
    %v1308 = vld [vmem:[#allocation2 + $0x2428] sm:$0xff]
    %v1309 = vld [vmem:[#allocation2 + $0x2430] sm:$0xff]
    %v1310 = vld [vmem:[#allocation2 + $0x2438] sm:$0xff]
    %v1311 = vld [vmem:[#allocation2 + $0x2440] sm:$0xff]
    %v1312 = vld [vmem:[#allocation2 + $0x2448] sm:$0xff]
    %v1313 = vld [vmem:[#allocation2 + $0x2450] sm:$0xff]
    %v1314 = vld [vmem:[#allocation2 + $0x2458] sm:$0xff]
    %v1315 = vld [vmem:[#allocation2 + $0x2460] sm:$0xff]
    %v1316 = vld [vmem:[#allocation2 + $0x2468] sm:$0xff]
    %v1317 = vld [vmem:[#allocation2 + $0x2470] sm:$0xff]
    %v1318 = vld [vmem:[#allocation2 + $0x2478] sm:$0xff]
    %v1319 = vld [vmem:[#allocation2 + $0x2480] sm:$0xff]
    %v1320 = vld [vmem:[#allocation2 + $0x2488] sm:$0xff]
    %v1321 = vld [vmem:[#allocation2 + $0x2490] sm:$0xff]
    %v1322 = vld [vmem:[#allocation2 + $0x2498] sm:$0xff]
    %v1323 = vld [vmem:[#allocation2 + $0x24a0] sm:$0xff]
    %v1324 = vld [vmem:[#allocation2 + $0x24a8] sm:$0xff]
    %v1325 = vld [vmem:[#allocation2 + $0x24b0] sm:$0xff]
    %v1326 = vld [vmem:[#allocation2 + $0x24b8] sm:$0xff]
    %v1327 = vld [vmem:[#allocation2 + $0x24c0] sm:$0xff]
    %v1328 = vld [vmem:[#allocation2 + $0x24c8] sm:$0xff]
    %v1329 = vld [vmem:[#allocation2 + $0x24d0] sm:$0xff]
    %v1330 = vld [vmem:[#allocation2 + $0x24d8] sm:$0xff]
    %v1331 = vld [vmem:[#allocation2 + $0x24e0] sm:$0xff]
    %v1332 = vld [vmem:[#allocation2 + $0x24e8] sm:$0xff]
    %v1333 = vld [vmem:[#allocation2 + $0x24f0] sm:$0xff]
    %v1334 = vld [vmem:[#allocation2 + $0x24f8] sm:$0xff]
    %v1335 = vld [vmem:[#allocation2 + $0x2500] sm:$0xff]
    %v1336 = vld [vmem:[#allocation2 + $0x2508] sm:$0xff]
    %v1337 = vld [vmem:[#allocation2 + $0x2510] sm:$0xff]
    %v1338 = vld [vmem:[#allocation2 + $0x2518] sm:$0xff]
    %v1339 = vld [vmem:[#allocation2 + $0x2520] sm:$0xff]
    %v1340 = vld [vmem:[#allocation2 + $0x2528] sm:$0xff]
    %v1341 = vld [vmem:[#allocation2 + $0x2530] sm:$0xff]
    %v1342 = vld [vmem:[#allocation2 + $0x2538] sm:$0xff]
    %v1343 = vld [vmem:[#allocation2 + $0x2540] sm:$0xff]
    %v1344 = vld [vmem:[#allocation2 + $0x2548] sm:$0xff]
    %v1345 = vld [vmem:[#allocation2 + $0x2550] sm:$0xff]
    %v1346 = vld [vmem:[#allocation2 + $0x2558] sm:$0xff]
    %v1347 = vld [vmem:[#allocation2 + $0x2560] sm:$0xff]
    %v1348 = vld [vmem:[#allocation2 + $0x2568] sm:$0xff]
    %v1349 = vld [vmem:[#allocation2 + $0x2570] sm:$0xff]
    %v1350 = vld [vmem:[#allocation2 + $0x2578] sm:$0xff]
    %v1351 = vld [vmem:[#allocation2 + $0x2580] sm:$0xff]
    %v1352 = vld [vmem:[#allocation2 + $0x2588] sm:$0xff]
    %v1353 = vld [vmem:[#allocation2 + $0x2590] sm:$0xff]
    %v1354 = vld [vmem:[#allocation2 + $0x2598] sm:$0xff]
    %v1355 = vld [vmem:[#allocation2 + $0x25a0] sm:$0xff]
    %v1356 = vld [vmem:[#allocation2 + $0x25a8] sm:$0xff]
    %v1357 = vld [vmem:[#allocation2 + $0x25b0] sm:$0xff]
    %v1358 = vld [vmem:[#allocation2 + $0x25b8] sm:$0xff]
    %v1359 = vld [vmem:[#allocation2 + $0x25c0] sm:$0xff]
    %v1360 = vld [vmem:[#allocation2 + $0x25c8] sm:$0xff]
    %v1361 = vld [vmem:[#allocation2 + $0x25d0] sm:$0xff]
    %v1362 = vld [vmem:[#allocation2 + $0x25d8] sm:$0xff]
    %v1363 = vld [vmem:[#allocation2 + $0x25e0] sm:$0xff]
    %v1364 = vld [vmem:[#allocation2 + $0x25e8] sm:$0xff]
    %v1365 = vld [vmem:[#allocation2 + $0x25f0] sm:$0xff]
    %v1366 = vld [vmem:[#allocation2 + $0x25f8] sm:$0xff]
    %v1367 = vld [vmem:[#allocation2 + $0x2600] sm:$0xff]
    %v1368 = vld [vmem:[#allocation2 + $0x2608] sm:$0xff]
    %v1369 = vld [vmem:[#allocation2 + $0x2610] sm:$0xff]
    %v1370 = vld [vmem:[#allocation2 + $0x2618] sm:$0xff]
    %v1371 = vld [vmem:[#allocation2 + $0x2620] sm:$0xff]
    %v1372 = vld [vmem:[#allocation2 + $0x2628] sm:$0xff]
    %v1373 = vld [vmem:[#allocation2 + $0x2630] sm:$0xff]
    %v1374 = vld [vmem:[#allocation2 + $0x2638] sm:$0xff]
    %v1375 = vld [vmem:[#allocation2 + $0x2640] sm:$0xff]
    %v1376 = vld [vmem:[#allocation2 + $0x2648] sm:$0xff]
    %v1377 = vld [vmem:[#allocation2 + $0x2650] sm:$0xff]
    %v1378 = vld [vmem:[#allocation2 + $0x2658] sm:$0xff]
    %v1379 = vld [vmem:[#allocation2 + $0x2660] sm:$0xff]
    %v1380 = vld [vmem:[#allocation2 + $0x2668] sm:$0xff]
    %v1381 = vld [vmem:[#allocation2 + $0x2670] sm:$0xff]
    %v1382 = vld [vmem:[#allocation2 + $0x2678] sm:$0xff]
    %v1383 = vld [vmem:[#allocation2 + $0x2680] sm:$0xff]
    %v1384 = vld [vmem:[#allocation2 + $0x2688] sm:$0xff]
    %v1385 = vld [vmem:[#allocation2 + $0x2690] sm:$0xff]
    %v1386 = vld [vmem:[#allocation2 + $0x2698] sm:$0xff]
    %v1387 = vld [vmem:[#allocation2 + $0x26a0] sm:$0xff]
    %v1388 = vld [vmem:[#allocation2 + $0x26a8] sm:$0xff]
    %v1389 = vld [vmem:[#allocation2 + $0x26b0] sm:$0xff]
    %v1390 = vld [vmem:[#allocation2 + $0x26b8] sm:$0xff]
    %v1391 = vld [vmem:[#allocation2 + $0x26c0] sm:$0xff]
    %v1392 = vld [vmem:[#allocation2 + $0x26c8] sm:$0xff]
    %v1393 = vld [vmem:[#allocation2 + $0x26d0] sm:$0xff]
    %v1394 = vld [vmem:[#allocation2 + $0x26d8] sm:$0xff]
    %v1395 = vld [vmem:[#allocation2 + $0x26e0] sm:$0xff]
    %v1396 = vld [vmem:[#allocation2 + $0x26e8] sm:$0xff]
    %v1397 = vld [vmem:[#allocation2 + $0x26f0] sm:$0xff]
    %v1398 = vld [vmem:[#allocation2 + $0x26f8] sm:$0xff]
    %v1399 = vld [vmem:[#allocation2 + $0x2700] sm:$0xff]
    %v1400 = vld [vmem:[#allocation2 + $0x2708] sm:$0xff]
    %v1401 = vld [vmem:[#allocation2 + $0x2710] sm:$0xff]
    %v1402 = vld [vmem:[#allocation2 + $0x2718] sm:$0xff]
    %v1403 = vld [vmem:[#allocation2 + $0x2720] sm:$0xff]
    %v1404 = vld [vmem:[#allocation2 + $0x2728] sm:$0xff]
    %v1405 = vld [vmem:[#allocation2 + $0x2730] sm:$0xff]
    %v1406 = vld [vmem:[#allocation2 + $0x2738] sm:$0xff]
    %v1407 = vld [vmem:[#allocation2 + $0x2740] sm:$0xff]
    %v1408 = vld [vmem:[#allocation2 + $0x2748] sm:$0xff]
    %v1409 = vld [vmem:[#allocation2 + $0x2750] sm:$0xff]
    %v1410 = vld [vmem:[#allocation2 + $0x2758] sm:$0xff]
    %v1411 = vld [vmem:[#allocation2 + $0x2760] sm:$0xff]
    %v1412 = vld [vmem:[#allocation2 + $0x2768] sm:$0xff]
    %v1413 = vld [vmem:[#allocation2 + $0x2770] sm:$0xff]
    %v1414 = vld [vmem:[#allocation2 + $0x2778] sm:$0xff]
    %v1415 = vld [vmem:[#allocation2 + $0x2780] sm:$0xff]
    %v1416 = vld [vmem:[#allocation2 + $0x2788] sm:$0xff]
    %v1417 = vld [vmem:[#allocation2 + $0x2790] sm:$0xff]
    %v1418 = vld [vmem:[#allocation2 + $0x2798] sm:$0xff]
    %v1419 = vld [vmem:[#allocation2 + $0x27a0] sm:$0xff]
    %v1420 = vld [vmem:[#allocation2 + $0x27a8] sm:$0xff]
    %v1421 = vld [vmem:[#allocation2 + $0x27b0] sm:$0xff]
    %v1422 = vld [vmem:[#allocation2 + $0x27b8] sm:$0xff]
    %v1423 = vld [vmem:[#allocation2 + $0x27c0] sm:$0xff]
    %v1424 = vld [vmem:[#allocation2 + $0x27c8] sm:$0xff]
    %v1425 = vld [vmem:[#allocation2 + $0x27d0] sm:$0xff]
    %v1426 = vld [vmem:[#allocation2 + $0x27d8] sm:$0xff]
    %v1427 = vld [vmem:[#allocation2 + $0x27e0] sm:$0xff]
    %v1428 = vld [vmem:[#allocation2 + $0x27e8] sm:$0xff]
    %v1429 = vld [vmem:[#allocation2 + $0x27f0] sm:$0xff]
    %v1430 = vld [vmem:[#allocation2 + $0x27f8] sm:$0xff]
    %v1431 = vld [vmem:[#allocation2 + $0x2800] sm:$0xff]
    %v1432 = vld [vmem:[#allocation2 + $0x2808] sm:$0xff]
    %v1433 = vld [vmem:[#allocation2 + $0x2810] sm:$0xff]
    %v1434 = vld [vmem:[#allocation2 + $0x2818] sm:$0xff]
    %v1435 = vld [vmem:[#allocation2 + $0x2820] sm:$0xff]
    %v1436 = vld [vmem:[#allocation2 + $0x2828] sm:$0xff]
    %v1437 = vld [vmem:[#allocation2 + $0x2830] sm:$0xff]
    %v1438 = vld [vmem:[#allocation2 + $0x2838] sm:$0xff]
    %v1439 = vld [vmem:[#allocation2 + $0x2840] sm:$0xff]
    %v1440 = vld [vmem:[#allocation2 + $0x2848] sm:$0xff]
    %v1441 = vld [vmem:[#allocation2 + $0x2850] sm:$0xff]
    %v1442 = vld [vmem:[#allocation2 + $0x2858] sm:$0xff]
    %v1443 = vld [vmem:[#allocation2 + $0x2860] sm:$0xff]
    %v1444 = vld [vmem:[#allocation2 + $0x2868] sm:$0xff]
    %v1445 = vld [vmem:[#allocation2 + $0x2870] sm:$0xff]
    %v1446 = vld [vmem:[#allocation2 + $0x2878] sm:$0xff]
    %v1447 = vld [vmem:[#allocation2 + $0x2880] sm:$0xff]
    %v1448 = vld [vmem:[#allocation2 + $0x2888] sm:$0xff]
    %v1449 = vld [vmem:[#allocation2 + $0x2890] sm:$0xff]
    %v1450 = vld [vmem:[#allocation2 + $0x2898] sm:$0xff]
    %v1451 = vld [vmem:[#allocation2 + $0x28a0] sm:$0xff]
    %v1452 = vld [vmem:[#allocation2 + $0x28a8] sm:$0xff]
    %v1453 = vld [vmem:[#allocation2 + $0x28b0] sm:$0xff]
    %v1454 = vld [vmem:[#allocation2 + $0x28b8] sm:$0xff]
    %v1455 = vld [vmem:[#allocation2 + $0x28c0] sm:$0xff]
    %v1456 = vld [vmem:[#allocation2 + $0x28c8] sm:$0xff]
    %v1457 = vld [vmem:[#allocation2 + $0x28d0] sm:$0xff]
    %v1458 = vld [vmem:[#allocation2 + $0x28d8] sm:$0xff]
    %v1459 = vld [vmem:[#allocation2 + $0x28e0] sm:$0xff]
    %v1460 = vld [vmem:[#allocation2 + $0x28e8] sm:$0xff]
    %v1461 = vld [vmem:[#allocation2 + $0x28f0] sm:$0xff]
    %v1462 = vld [vmem:[#allocation2 + $0x28f8] sm:$0xff]
    %v1463 = vld [vmem:[#allocation2 + $0x2900] sm:$0xff]
    %v1464 = vld [vmem:[#allocation2 + $0x2908] sm:$0xff]
    %v1465 = vld [vmem:[#allocation2 + $0x2910] sm:$0xff]
    %v1466 = vld [vmem:[#allocation2 + $0x2918] sm:$0xff]
    %v1467 = vld [vmem:[#allocation2 + $0x2920] sm:$0xff]
    %v1468 = vld [vmem:[#allocation2 + $0x2928] sm:$0xff]
    %v1469 = vld [vmem:[#allocation2 + $0x2930] sm:$0xff]
    %v1470 = vld [vmem:[#allocation2 + $0x2938] sm:$0xff]
    %v1471 = vld [vmem:[#allocation2 + $0x2940] sm:$0xff]
    %v1472 = vld [vmem:[#allocation2 + $0x2948] sm:$0xff]
    %v1473 = vld [vmem:[#allocation2 + $0x2950] sm:$0xff]
    %v1474 = vld [vmem:[#allocation2 + $0x2958] sm:$0xff]
    %v1475 = vld [vmem:[#allocation2 + $0x2960] sm:$0xff]
    %v1476 = vld [vmem:[#allocation2 + $0x2968] sm:$0xff]
    %v1477 = vld [vmem:[#allocation2 + $0x2970] sm:$0xff]
    %v1478 = vld [vmem:[#allocation2 + $0x2978] sm:$0xff]
    %v1479 = vld [vmem:[#allocation2 + $0x2980] sm:$0xff]
    %v1480 = vld [vmem:[#allocation2 + $0x2988] sm:$0xff]
    %v1481 = vld [vmem:[#allocation2 + $0x2990] sm:$0xff]
    %v1482 = vld [vmem:[#allocation2 + $0x2998] sm:$0xff]
    %v1483 = vld [vmem:[#allocation2 + $0x29a0] sm:$0xff]
    %v1484 = vld [vmem:[#allocation2 + $0x29a8] sm:$0xff]
    %v1485 = vld [vmem:[#allocation2 + $0x29b0] sm:$0xff]
    %v1486 = vld [vmem:[#allocation2 + $0x29b8] sm:$0xff]
    %v1487 = vld [vmem:[#allocation2 + $0x29c0] sm:$0xff]
    %v1488 = vld [vmem:[#allocation2 + $0x29c8] sm:$0xff]
    %v1489 = vld [vmem:[#allocation2 + $0x29d0] sm:$0xff]
    %v1490 = vld [vmem:[#allocation2 + $0x29d8] sm:$0xff]
    %v1491 = vld [vmem:[#allocation2 + $0x29e0] sm:$0xff]
    %v1492 = vld [vmem:[#allocation2 + $0x29e8] sm:$0xff]
    %v1493 = vld [vmem:[#allocation2 + $0x29f0] sm:$0xff]
    %v1494 = vld [vmem:[#allocation2 + $0x29f8] sm:$0xff]
    %v1495 = vld [vmem:[#allocation2 + $0x2a00] sm:$0xff]
    %v1496 = vld [vmem:[#allocation2 + $0x2a08] sm:$0xff]
    %v1497 = vld [vmem:[#allocation2 + $0x2a10] sm:$0xff]
    %v1498 = vld [vmem:[#allocation2 + $0x2a18] sm:$0xff]
    %v1499 = vld [vmem:[#allocation2 + $0x2a20] sm:$0xff]
    %v1500 = vld [vmem:[#allocation2 + $0x2a28] sm:$0xff]
    %v1501 = vld [vmem:[#allocation2 + $0x2a30] sm:$0xff]
    %v1502 = vld [vmem:[#allocation2 + $0x2a38] sm:$0xff]
    %v1503 = vld [vmem:[#allocation2 + $0x2a40] sm:$0xff]
    %v1504 = vld [vmem:[#allocation2 + $0x2a48] sm:$0xff]
    %v1505 = vld [vmem:[#allocation2 + $0x2a50] sm:$0xff]
    %v1506 = vld [vmem:[#allocation2 + $0x2a58] sm:$0xff]
    %v1507 = vld [vmem:[#allocation2 + $0x2a60] sm:$0xff]
    %v1508 = vld [vmem:[#allocation2 + $0x2a68] sm:$0xff]
    %v1509 = vld [vmem:[#allocation2 + $0x2a70] sm:$0xff]
    %v1510 = vld [vmem:[#allocation2 + $0x2a78] sm:$0xff]
    %v1511 = vld [vmem:[#allocation2 + $0x2a80] sm:$0xff]
    %v1512 = vld [vmem:[#allocation2 + $0x2a88] sm:$0xff]
    %v1513 = vld [vmem:[#allocation2 + $0x2a90] sm:$0xff]
    %v1514 = vld [vmem:[#allocation2 + $0x2a98] sm:$0xff]
    %v1515 = vld [vmem:[#allocation2 + $0x2aa0] sm:$0xff]
    %v1516 = vld [vmem:[#allocation2 + $0x2aa8] sm:$0xff]
    %v1517 = vld [vmem:[#allocation2 + $0x2ab0] sm:$0xff]
    %v1518 = vld [vmem:[#allocation2 + $0x2ab8] sm:$0xff]
    %v1519 = vld [vmem:[#allocation2 + $0x2ac0] sm:$0xff]
    %v1520 = vld [vmem:[#allocation2 + $0x2ac8] sm:$0xff]
    %v1521 = vld [vmem:[#allocation2 + $0x2ad0] sm:$0xff]
    %v1522 = vld [vmem:[#allocation2 + $0x2ad8] sm:$0xff]
    %v1523 = vld [vmem:[#allocation2 + $0x2ae0] sm:$0xff]
    %v1524 = vld [vmem:[#allocation2 + $0x2ae8] sm:$0xff]
    %v1525 = vld [vmem:[#allocation2 + $0x2af0] sm:$0xff]
    %v1526 = vld [vmem:[#allocation2 + $0x2af8] sm:$0xff]
    %v1527 = vld [vmem:[#allocation2 + $0x2b00] sm:$0xff]
    %v1528 = vld [vmem:[#allocation2 + $0x2b08] sm:$0xff]
    %v1529 = vld [vmem:[#allocation2 + $0x2b10] sm:$0xff]
    %v1530 = vld [vmem:[#allocation2 + $0x2b18] sm:$0xff]
    %v1531 = vld [vmem:[#allocation2 + $0x2b20] sm:$0xff]
    %v1532 = vld [vmem:[#allocation2 + $0x2b28] sm:$0xff]
    %v1533 = vld [vmem:[#allocation2 + $0x2b30] sm:$0xff]
    %v1534 = vld [vmem:[#allocation2 + $0x2b38] sm:$0xff]
    %v1535 = vld [vmem:[#allocation2 + $0x2b40] sm:$0xff]
    %v1536 = vld [vmem:[#allocation2 + $0x2b48] sm:$0xff]
    %v1537 = vld [vmem:[#allocation2 + $0x2b50] sm:$0xff]
    %v1538 = vld [vmem:[#allocation2 + $0x2b58] sm:$0xff]
    %v1539 = vld [vmem:[#allocation2 + $0x2b60] sm:$0xff]
    %v1540 = vld [vmem:[#allocation2 + $0x2b68] sm:$0xff]
    %v1541 = vld [vmem:[#allocation2 + $0x2b70] sm:$0xff]
    %v1542 = vld [vmem:[#allocation2 + $0x2b78] sm:$0xff]
    %v1543 = vld [vmem:[#allocation2 + $0x2b80] sm:$0xff]
    %v1544 = vld [vmem:[#allocation2 + $0x2b88] sm:$0xff]
    %v1545 = vld [vmem:[#allocation2 + $0x2b90] sm:$0xff]
    %v1546 = vld [vmem:[#allocation2 + $0x2b98] sm:$0xff]
    %v1547 = vld [vmem:[#allocation2 + $0x2ba0] sm:$0xff]
    %v1548 = vld [vmem:[#allocation2 + $0x2ba8] sm:$0xff]
    %v1549 = vld [vmem:[#allocation2 + $0x2bb0] sm:$0xff]
    %v1550 = vld [vmem:[#allocation2 + $0x2bb8] sm:$0xff]
    %v1551 = vld [vmem:[#allocation2 + $0x2bc0] sm:$0xff]
    %v1552 = vld [vmem:[#allocation2 + $0x2bc8] sm:$0xff]
    %v1553 = vld [vmem:[#allocation2 + $0x2bd0] sm:$0xff]
    %v1554 = vld [vmem:[#allocation2 + $0x2bd8] sm:$0xff]
    %v1555 = vld [vmem:[#allocation2 + $0x2be0] sm:$0xff]
    %v1556 = vld [vmem:[#allocation2 + $0x2be8] sm:$0xff]
    %v1557 = vld [vmem:[#allocation2 + $0x2bf0] sm:$0xff]
    %v1558 = vld [vmem:[#allocation2 + $0x2bf8] sm:$0xff]
    %v1559 = vld [vmem:[#allocation2 + $0x2c00] sm:$0xff]
    %v1560 = vld [vmem:[#allocation2 + $0x2c08] sm:$0xff]
    %v1561 = vld [vmem:[#allocation2 + $0x2c10] sm:$0xff]
    %v1562 = vld [vmem:[#allocation2 + $0x2c18] sm:$0xff]
    %v1563 = vld [vmem:[#allocation2 + $0x2c20] sm:$0xff]
    %v1564 = vld [vmem:[#allocation2 + $0x2c28] sm:$0xff]
    %v1565 = vld [vmem:[#allocation2 + $0x2c30] sm:$0xff]
    %v1566 = vld [vmem:[#allocation2 + $0x2c38] sm:$0xff]
    %v1567 = vld [vmem:[#allocation2 + $0x2c40] sm:$0xff]
    %v1568 = vld [vmem:[#allocation2 + $0x2c48] sm:$0xff]
    %v1569 = vld [vmem:[#allocation2 + $0x2c50] sm:$0xff]
    %v1570 = vld [vmem:[#allocation2 + $0x2c58] sm:$0xff]
    %v1571 = vld [vmem:[#allocation2 + $0x2c60] sm:$0xff]
    %v1572 = vld [vmem:[#allocation2 + $0x2c68] sm:$0xff]
    %v1573 = vld [vmem:[#allocation2 + $0x2c70] sm:$0xff]
    %v1574 = vld [vmem:[#allocation2 + $0x2c78] sm:$0xff]
    %v1575 = vld [vmem:[#allocation2 + $0x2c80] sm:$0xff]
    %v1576 = vld [vmem:[#allocation2 + $0x2c88] sm:$0xff]
    %v1577 = vld [vmem:[#allocation2 + $0x2c90] sm:$0xff]
    %v1578 = vld [vmem:[#allocation2 + $0x2c98] sm:$0xff]
    %v1579 = vld [vmem:[#allocation2 + $0x2ca0] sm:$0xff]
    %v1580 = vld [vmem:[#allocation2 + $0x2ca8] sm:$0xff]
    %v1581 = vld [vmem:[#allocation2 + $0x2cb0] sm:$0xff]
    %v1582 = vld [vmem:[#allocation2 + $0x2cb8] sm:$0xff]
    %v1583 = vld [vmem:[#allocation2 + $0x2cc0] sm:$0xff]
    %v1584 = vld [vmem:[#allocation2 + $0x2cc8] sm:$0xff]
    %v1585 = vld [vmem:[#allocation2 + $0x2cd0] sm:$0xff]
    %v1586 = vld [vmem:[#allocation2 + $0x2cd8] sm:$0xff]
    %v1587 = vld [vmem:[#allocation2 + $0x2ce0] sm:$0xff]
    %v1588 = vld [vmem:[#allocation2 + $0x2ce8] sm:$0xff]
    %v1589 = vld [vmem:[#allocation2 + $0x2cf0] sm:$0xff]
    %v1590 = vld [vmem:[#allocation2 + $0x2cf8] sm:$0xff]
    %v1591 = vld [vmem:[#allocation2 + $0x2d00] sm:$0xff]
    %v1592 = vld [vmem:[#allocation2 + $0x2d08] sm:$0xff]
    %v1593 = vld [vmem:[#allocation2 + $0x2d10] sm:$0xff]
    %v1594 = vld [vmem:[#allocation2 + $0x2d18] sm:$0xff]
    %v1595 = vld [vmem:[#allocation2 + $0x2d20] sm:$0xff]
    %v1596 = vld [vmem:[#allocation2 + $0x2d28] sm:$0xff]
    %v1597 = vld [vmem:[#allocation2 + $0x2d30] sm:$0xff]
    %v1598 = vld [vmem:[#allocation2 + $0x2d38] sm:$0xff]
    %v1599 = vld [vmem:[#allocation2 + $0x2d40] sm:$0xff]
    %v1600 = vld [vmem:[#allocation2 + $0x2d48] sm:$0xff]
    %v1601 = vld [vmem:[#allocation2 + $0x2d50] sm:$0xff]
    %v1602 = vld [vmem:[#allocation2 + $0x2d58] sm:$0xff]
    %v1603 = vld [vmem:[#allocation2 + $0x2d60] sm:$0xff]
    %v1604 = vld [vmem:[#allocation2 + $0x2d68] sm:$0xff]
    %v1605 = vld [vmem:[#allocation2 + $0x2d70] sm:$0xff]
    %v1606 = vld [vmem:[#allocation2 + $0x2d78] sm:$0xff]
    %v1607 = vld [vmem:[#allocation2 + $0x2d80] sm:$0xff]
    %v1608 = vld [vmem:[#allocation2 + $0x2d88] sm:$0xff]
    %v1609 = vld [vmem:[#allocation2 + $0x2d90] sm:$0xff]
    %v1610 = vld [vmem:[#allocation2 + $0x2d98] sm:$0xff]
    %v1611 = vld [vmem:[#allocation2 + $0x2da0] sm:$0xff]
    %v1612 = vld [vmem:[#allocation2 + $0x2da8] sm:$0xff]
    %v1613 = vld [vmem:[#allocation2 + $0x2db0] sm:$0xff]
    %v1614 = vld [vmem:[#allocation2 + $0x2db8] sm:$0xff]
    %v1615 = vld [vmem:[#allocation2 + $0x2dc0] sm:$0xff]
    %v1616 = vld [vmem:[#allocation2 + $0x2dc8] sm:$0xff]
    %v1617 = vld [vmem:[#allocation2 + $0x2dd0] sm:$0xff]
    %v1618 = vld [vmem:[#allocation2 + $0x2dd8] sm:$0xff]
    %v1619 = vld [vmem:[#allocation2 + $0x2de0] sm:$0xff]
    %v1620 = vld [vmem:[#allocation2 + $0x2de8] sm:$0xff]
    %v1621 = vld [vmem:[#allocation2 + $0x2df0] sm:$0xff]
    %v1622 = vld [vmem:[#allocation2 + $0x2df8] sm:$0xff]
    %v1623 = vld [vmem:[#allocation2 + $0x2e00] sm:$0xff]
    %v1624 = vld [vmem:[#allocation2 + $0x2e08] sm:$0xff]
    %v1625 = vld [vmem:[#allocation2 + $0x2e10] sm:$0xff]
    %v1626 = vld [vmem:[#allocation2 + $0x2e18] sm:$0xff]
    %v1627 = vld [vmem:[#allocation2 + $0x2e20] sm:$0xff]
    %v1628 = vld [vmem:[#allocation2 + $0x2e28] sm:$0xff]
    %v1629 = vld [vmem:[#allocation2 + $0x2e30] sm:$0xff]
    %v1630 = vld [vmem:[#allocation2 + $0x2e38] sm:$0xff]
    %v1631 = vld [vmem:[#allocation2 + $0x2e40] sm:$0xff]
    %v1632 = vld [vmem:[#allocation2 + $0x2e48] sm:$0xff]
    %v1633 = vld [vmem:[#allocation2 + $0x2e50] sm:$0xff]
    %v1634 = vld [vmem:[#allocation2 + $0x2e58] sm:$0xff]
    %v1635 = vld [vmem:[#allocation2 + $0x2e60] sm:$0xff]
    %v1636 = vld [vmem:[#allocation2 + $0x2e68] sm:$0xff]
    %v1637 = vld [vmem:[#allocation2 + $0x2e70] sm:$0xff]
    %v1638 = vld [vmem:[#allocation2 + $0x2e78] sm:$0xff]
    %v1639 = vld [vmem:[#allocation2 + $0x2e80] sm:$0xff]
    %v1640 = vld [vmem:[#allocation2 + $0x2e88] sm:$0xff]
    %v1641 = vld [vmem:[#allocation2 + $0x2e90] sm:$0xff]
    %v1642 = vld [vmem:[#allocation2 + $0x2e98] sm:$0xff]
    %v1643 = vld [vmem:[#allocation2 + $0x2ea0] sm:$0xff]
    %v1644 = vld [vmem:[#allocation2 + $0x2ea8] sm:$0xff]
    %v1645 = vld [vmem:[#allocation2 + $0x2eb0] sm:$0xff]
    %v1646 = vld [vmem:[#allocation2 + $0x2eb8] sm:$0xff]
    %v1647 = vld [vmem:[#allocation2 + $0x2ec0] sm:$0xff]
    %v1648 = vld [vmem:[#allocation2 + $0x2ec8] sm:$0xff]
    %v1649 = vld [vmem:[#allocation2 + $0x2ed0] sm:$0xff]
    %v1650 = vld [vmem:[#allocation2 + $0x2ed8] sm:$0xff]
    %v1651 = vld [vmem:[#allocation2 + $0x2ee0] sm:$0xff]
    %v1652 = vld [vmem:[#allocation2 + $0x2ee8] sm:$0xff]
    %v1653 = vld [vmem:[#allocation2 + $0x2ef0] sm:$0xff]
    %v1654 = vld [vmem:[#allocation2 + $0x2ef8] sm:$0xff]
    %v1655 = vld [vmem:[#allocation2 + $0x2f00] sm:$0xff]
    %v1656 = vld [vmem:[#allocation2 + $0x2f08] sm:$0xff]
    %v1657 = vld [vmem:[#allocation2 + $0x2f10] sm:$0xff]
    %v1658 = vld [vmem:[#allocation2 + $0x2f18] sm:$0xff]
    %v1659 = vld [vmem:[#allocation2 + $0x2f20] sm:$0xff]
    %v1660 = vld [vmem:[#allocation2 + $0x2f28] sm:$0xff]
    %v1661 = vld [vmem:[#allocation2 + $0x2f30] sm:$0xff]
    %v1662 = vld [vmem:[#allocation2 + $0x2f38] sm:$0xff]
    %v1663 = vld [vmem:[#allocation2 + $0x2f40] sm:$0xff]
    %v1664 = vld [vmem:[#allocation2 + $0x2f48] sm:$0xff]
    %v1665 = vld [vmem:[#allocation2 + $0x2f50] sm:$0xff]
    %v1666 = vld [vmem:[#allocation2 + $0x2f58] sm:$0xff]
    %v1667 = vld [vmem:[#allocation2 + $0x2f60] sm:$0xff]
    %v1668 = vld [vmem:[#allocation2 + $0x2f68] sm:$0xff]
    %v1669 = vld [vmem:[#allocation2 + $0x2f70] sm:$0xff]
    %v1670 = vld [vmem:[#allocation2 + $0x2f78] sm:$0xff]
    %v1671 = vld [vmem:[#allocation2 + $0x2f80] sm:$0xff]
    %v1672 = vld [vmem:[#allocation2 + $0x2f88] sm:$0xff]
    %v1673 = vld [vmem:[#allocation2 + $0x2f90] sm:$0xff]
    %v1674 = vld [vmem:[#allocation2 + $0x2f98] sm:$0xff]
    %v1675 = vld [vmem:[#allocation2 + $0x2fa0] sm:$0xff]
    %v1676 = vld [vmem:[#allocation2 + $0x2fa8] sm:$0xff]
    %v1677 = vld [vmem:[#allocation2 + $0x2fb0] sm:$0xff]
    %v1678 = vld [vmem:[#allocation2 + $0x2fb8] sm:$0xff]
    %v1679 = vld [vmem:[#allocation2 + $0x2fc0] sm:$0xff]
    %v1680 = vld [vmem:[#allocation2 + $0x2fc8] sm:$0xff]
    %v1681 = vld [vmem:[#allocation2 + $0x2fd0] sm:$0xff]
    %v1682 = vld [vmem:[#allocation2 + $0x2fd8] sm:$0xff]
    %v1683 = vld [vmem:[#allocation2 + $0x2fe0] sm:$0xff]
    %v1684 = vld [vmem:[#allocation2 + $0x2fe8] sm:$0xff]
    %v1685 = vld [vmem:[#allocation2 + $0x2ff0] sm:$0xff]
    %v1686 = vld [vmem:[#allocation2 + $0x2ff8] sm:$0xff]
    %v1689 = vcombine.high %v149, %v149
    %v1691 = vunpack.c.l.s4 1983009808
    %v1692 = vunpack.c.0.s8 %v1691
    %v1693 = vlaneseq
    %v1694 = vshrl.u32 %v1693, 7
    %v1695 = vsub.s32 %v1692, %v1694
    %v1696 = vrot.slane %v149, %v1695
    %v1698 = vunpack.c.l.s4 1983009808
    %v1699 = vunpack.c.0.s8 %v1698
    %v1700 = vlaneseq
    %v1701 = vshrl.u32 %v1700, 7
    %v1702 = vsub.s32 %v1699, %v1701
    %v1703 = vrot.slane %v1689, %v1702
    %v1704 = vcombine.high %v1696, %v1696
    %v1705 = vcombine.high %v1703, %v1703
    %v1707 = vunpack.c.l.s4 1983009808
    %v1708 = vunpack.c.0.s8 %v1707
    %v1709 = vlaneseq
    %v1710 = vshrl.u32 %v1709, 7
    %v1711 = vsub.s32 %v1708, %v1710
    %v1712 = vrot.slane %v150, %v1711
    %v1713 = vcombine.high %v1712, %v1712
    %1720 = vmatprep.subr.mxu0 %v152
    %1721 = vmatpush1.msra.mxu0 %v151
    %1722 = vmatprep.subr.mxu0 %v168
    %1723 = vmatpush1.msra.mxu0 %v167
    %1724 = vmatprep.subr.mxu0 %v184
    %1725 = vmatpush1.msra.mxu0 %v183
    %1726 = vmatprep.subr.mxu0 %v200
    %1727 = vmatpush1.msra.mxu0 %v199
    %1728 = vmatprep.subr.mxu0 %v216
    %1729 = vmatpush1.msra.mxu0 %v215
    %1730 = vmatprep.subr.mxu0 %v232
    %1731 = vmatpush1.msra.mxu0 %v231
    %1732 = vmatprep.subr.mxu0 %v248
    %1733 = vmatpush1.msra.mxu0 %v247
    %1734 = vmatprep.subr.mxu0 %v264
    %1735 = vmatpush1.msra.mxu0 %v263
    %1736 = vmatprep.subr.mxu0 %v280
    %1737 = vmatpush1.msra.mxu0 %v279
    %1738 = vmatprep.subr.mxu0 %v296
    %1739 = vmatpush1.msra.mxu0 %v295
    %1740 = vmatprep.subr.mxu0 %v312
    %1741 = vmatpush1.msra.mxu0 %v311
    %1742 = vmatprep.subr.mxu0 %v328
    %1743 = vmatpush1.msra.mxu0 %v327
    %1744 = vmatprep.subr.mxu0 %v344
    %1745 = vmatpush1.msra.mxu0 %v343
    %1746 = vmatprep.subr.mxu0 %v360
    %1747 = vmatpush1.msra.mxu0 %v359
    %1748 = vmatprep.subr.mxu0 %v376
    %1749 = vmatpush1.msra.mxu0 %v375
    %1750 = vmatprep.subr.mxu0 %v392
    %1751 = vmatpush1.msra.mxu0 %v391
    %1752 = vmatprep.subr.mxu0 %v408
    %1753 = vmatpush1.msra.mxu0 %v407
    %1754 = vmatprep.subr.mxu0 %v424
    %1755 = vmatpush1.msra.mxu0 %v423
    %1756 = vmatprep.subr.mxu0 %v440
    %1757 = vmatpush1.msra.mxu0 %v439
    %1758 = vmatprep.subr.mxu0 %v456
    %1759 = vmatpush1.msra.mxu0 %v455
    %1760 = vmatprep.subr.mxu0 %v472
    %1761 = vmatpush1.msra.mxu0 %v471
    %1762 = vmatprep.subr.mxu0 %v488
    %1763 = vmatpush1.msra.mxu0 %v487
    %1764 = vmatprep.subr.mxu0 %v504
    %1765 = vmatpush1.msra.mxu0 %v503
    %1766 = vmatprep.subr.mxu0 %v520
    %1767 = vmatpush1.msra.mxu0 %v519
    %1768 = vmatprep.subr.mxu0 %v536
    %1769 = vmatpush1.msra.mxu0 %v535
    %1770 = vmatprep.subr.mxu0 %v552
    %1771 = vmatpush1.msra.mxu0 %v551
    %1772 = vmatprep.subr.mxu0 %v568
    %1773 = vmatpush1.msra.mxu0 %v567
    %1774 = vmatprep.subr.mxu0 %v584
    %1775 = vmatpush1.msra.mxu0 %v583
    %1776 = vmatprep.subr.mxu0 %v600
    %1777 = vmatpush1.msra.mxu0 %v599
    %1778 = vmatprep.subr.mxu0 %v616
    %1779 = vmatpush1.msra.mxu0 %v615
    %1780 = vmatprep.subr.mxu0 %v632
    %1781 = vmatpush1.msra.mxu0 %v631
    %1782 = vmatprep.subr.mxu0 %v648
    %1783 = vmatpush1.msra.mxu0 %v647
    %1784 = vmatprep.mubr.f32.mxu0 %v1704
    %1785 = vmatmul.mubr.f32.gmra.mrb[0].mxu0 %v1696
    %v1786 = vpop.f32.mrb[0].mxu0
    %v1787 = vadd.f32 0.0, %v1786
    %v1788 = vpop.f32.mrb[0].mxu0
    %v1789 = vadd.f32 0.0, %v1788
    %1790 = vdwg.mxu0
    %1791 = vmatprep.subr.mxu0 %v664
    %1792 = vmatpush1.msra.mxu0 %v663
    %1793 = vmatprep.subr.mxu0 %v680
    %1794 = vmatpush1.msra.mxu0 %v679
    %1795 = vmatprep.subr.mxu0 %v696
    %1796 = vmatpush1.msra.mxu0 %v695
    %1797 = vmatprep.subr.mxu0 %v712
    %1798 = vmatpush1.msra.mxu0 %v711
    %1799 = vmatprep.subr.mxu0 %v728
    %1800 = vmatpush1.msra.mxu0 %v727
    %1801 = vmatprep.subr.mxu0 %v744
    %1802 = vmatpush1.msra.mxu0 %v743
    %1803 = vmatprep.subr.mxu0 %v760
    %1804 = vmatpush1.msra.mxu0 %v759
    %1805 = vmatprep.subr.mxu0 %v776
    %1806 = vmatpush1.msra.mxu0 %v775
    %1807 = vmatprep.subr.mxu0 %v792
    %1808 = vmatpush1.msra.mxu0 %v791
    %1809 = vmatprep.subr.mxu0 %v808
    %1810 = vmatpush1.msra.mxu0 %v807
    %1811 = vmatprep.subr.mxu0 %v824
    %1812 = vmatpush1.msra.mxu0 %v823
    %1813 = vmatprep.subr.mxu0 %v840
    %1814 = vmatpush1.msra.mxu0 %v839
    %1815 = vmatprep.subr.mxu0 %v856
    %1816 = vmatpush1.msra.mxu0 %v855
    %1817 = vmatprep.subr.mxu0 %v872
    %1818 = vmatpush1.msra.mxu0 %v871
    %1819 = vmatprep.subr.mxu0 %v888
    %1820 = vmatpush1.msra.mxu0 %v887
    %1821 = vmatprep.subr.mxu0 %v904
    %1822 = vmatpush1.msra.mxu0 %v903
    %1823 = vmatprep.subr.mxu0 %v920
    %1824 = vmatpush1.msra.mxu0 %v919
    %1825 = vmatprep.subr.mxu0 %v936
    %1826 = vmatpush1.msra.mxu0 %v935
    %1827 = vmatprep.subr.mxu0 %v952
    %1828 = vmatpush1.msra.mxu0 %v951
    %1829 = vmatprep.subr.mxu0 %v968
    %1830 = vmatpush1.msra.mxu0 %v967
    %1831 = vmatprep.subr.mxu0 %v984
    %1832 = vmatpush1.msra.mxu0 %v983
    %1833 = vmatprep.subr.mxu0 %v1000
    %1834 = vmatpush1.msra.mxu0 %v999
    %1835 = vmatprep.subr.mxu0 %v1016
    %1836 = vmatpush1.msra.mxu0 %v1015
    %1837 = vmatprep.subr.mxu0 %v1032
    %1838 = vmatpush1.msra.mxu0 %v1031
    %1839 = vmatprep.subr.mxu0 %v1048
    %1840 = vmatpush1.msra.mxu0 %v1047
    %1841 = vmatprep.subr.mxu0 %v1064
    %1842 = vmatpush1.msra.mxu0 %v1063
    %1843 = vmatprep.subr.mxu0 %v1080
    %1844 = vmatpush1.msra.mxu0 %v1079
    %1845 = vmatprep.subr.mxu0 %v1096
    %1846 = vmatpush1.msra.mxu0 %v1095
    %1847 = vmatprep.subr.mxu0 %v1112
    %1848 = vmatpush1.msra.mxu0 %v1111
    %1849 = vmatprep.subr.mxu0 %v1128
    %1850 = vmatpush1.msra.mxu0 %v1127
    %1851 = vmatprep.subr.mxu0 %v1144
    %1852 = vmatpush1.msra.mxu0 %v1143
    %1853 = vmatprep.subr.mxu0 %v1160
    %1854 = vmatpush1.msra.mxu0 %v1159
    %1855 = vmatprep.mubr.f32.mxu0 %v1705
    %1856 = vmatmul.mubr.f32.gmra.mrb[0].mxu0 %v1703
    %v1857 = vpop.f32.mrb[0].mxu0
    %v1858 = vadd.f32 %v1787, %v1857
    %v1859 = vpop.f32.mrb[0].mxu0
    %v1860 = vadd.f32 %v1789, %v1859
    %1861 = vdwg.mxu0
    %1862 = vmatprep.subr.mxu0 %v1176
    %1863 = vmatpush1.msra.mxu0 %v1175
    %1864 = vmatprep.subr.mxu0 %v1192
    %1865 = vmatpush1.msra.mxu0 %v1191
    %1866 = vmatprep.subr.mxu0 %v1208
    %1867 = vmatpush1.msra.mxu0 %v1207
    %1868 = vmatprep.subr.mxu0 %v1224
    %1869 = vmatpush1.msra.mxu0 %v1223
    %1870 = vmatprep.subr.mxu0 %v1240
    %1871 = vmatpush1.msra.mxu0 %v1239
    %1872 = vmatprep.subr.mxu0 %v1256
    %1873 = vmatpush1.msra.mxu0 %v1255
    %1874 = vmatprep.subr.mxu0 %v1272
    %1875 = vmatpush1.msra.mxu0 %v1271
    %1876 = vmatprep.subr.mxu0 %v1288
    %1877 = vmatpush1.msra.mxu0 %v1287
    %1878 = vmatprep.subr.mxu0 %v1304
    %1879 = vmatpush1.msra.mxu0 %v1303
    %1880 = vmatprep.subr.mxu0 %v1320
    %1881 = vmatpush1.msra.mxu0 %v1319
    %1882 = vmatprep.subr.mxu0 %v1336
    %1883 = vmatpush1.msra.mxu0 %v1335
    %1884 = vmatprep.subr.mxu0 %v1352
    %1885 = vmatpush1.msra.mxu0 %v1351
    %1886 = vmatprep.subr.mxu0 %v1368
    %1887 = vmatpush1.msra.mxu0 %v1367
    %1888 = vmatprep.subr.mxu0 %v1384
    %1889 = vmatpush1.msra.mxu0 %v1383
    %1890 = vmatprep.subr.mxu0 %v1400
    %1891 = vmatpush1.msra.mxu0 %v1399
    %1892 = vmatprep.subr.mxu0 %v1416
    %1893 = vmatpush1.msra.mxu0 %v1415
    %1894 = vmatprep.subr.mxu0 %v1432
    %1895 = vmatpush1.msra.mxu0 %v1431
    %1896 = vmatprep.subr.mxu0 %v1448
    %1897 = vmatpush1.msra.mxu0 %v1447
    %1898 = vmatprep.subr.mxu0 %v1464
    %1899 = vmatpush1.msra.mxu0 %v1463
    %1900 = vmatprep.subr.mxu0 %v1480
    %1901 = vmatpush1.msra.mxu0 %v1479
    %1902 = vmatprep.subr.mxu0 %v1496
    %1903 = vmatpush1.msra.mxu0 %v1495
    %1904 = vmatprep.subr.mxu0 %v1512
    %1905 = vmatpush1.msra.mxu0 %v1511
    %1906 = vmatprep.subr.mxu0 %v1528
    %1907 = vmatpush1.msra.mxu0 %v1527
    %1908 = vmatprep.subr.mxu0 %v1544
    %1909 = vmatpush1.msra.mxu0 %v1543
    %1910 = vmatprep.subr.mxu0 %v1560
    %1911 = vmatpush1.msra.mxu0 %v1559
    %1912 = vmatprep.subr.mxu0 %v1576
    %1913 = vmatpush1.msra.mxu0 %v1575
    %1914 = vmatprep.subr.mxu0 %v1592
    %1915 = vmatpush1.msra.mxu0 %v1591
    %1916 = vmatprep.subr.mxu0 %v1608
    %1917 = vmatpush1.msra.mxu0 %v1607
    %1918 = vmatprep.subr.mxu0 %v1624
    %1919 = vmatpush1.msra.mxu0 %v1623
    %1920 = vmatprep.subr.mxu0 %v1640
    %1921 = vmatpush1.msra.mxu0 %v1639
    %1922 = vmatprep.subr.mxu0 %v1656
    %1923 = vmatpush1.msra.mxu0 %v1655
    %1924 = vmatprep.subr.mxu0 %v1672
    %1925 = vmatpush1.msra.mxu0 %v1671
    %1926 = vmatprep.mubr.f32.mxu0 %v1713
    %1927 = vmatmul.mubr.f32.gmra.mrb[0].mxu0 %v1712
    %v1928 = vpop.f32.mrb[0].mxu0
    %v1929 = vadd.f32 %v1858, %v1928
    %v1930 = vpop.f32.mrb[0].mxu0
    %v1931 = vadd.f32 %v1860, %v1930
    %1932 = vdwg.mxu0
    %1933 = vmatprep.subr.mxu0 %v154
    %1934 = vmatpush1.msra.mxu0 %v153
    %1935 = vmatprep.subr.mxu0 %v170
    %1936 = vmatpush1.msra.mxu0 %v169
    %1937 = vmatprep.subr.mxu0 %v186
    %1938 = vmatpush1.msra.mxu0 %v185
    %1939 = vmatprep.subr.mxu0 %v202
    %1940 = vmatpush1.msra.mxu0 %v201
    %1941 = vmatprep.subr.mxu0 %v218
    %1942 = vmatpush1.msra.mxu0 %v217
    %1943 = vmatprep.subr.mxu0 %v234
    %1944 = vmatpush1.msra.mxu0 %v233
    %1945 = vmatprep.subr.mxu0 %v250
    %1946 = vmatpush1.msra.mxu0 %v249
    %1947 = vmatprep.subr.mxu0 %v266
    %1948 = vmatpush1.msra.mxu0 %v265
    %1949 = vmatprep.subr.mxu0 %v282
    %1950 = vmatpush1.msra.mxu0 %v281
    %1951 = vmatprep.subr.mxu0 %v298
    %1952 = vmatpush1.msra.mxu0 %v297
    %1953 = vmatprep.subr.mxu0 %v314
    %1954 = vmatpush1.msra.mxu0 %v313
    %1955 = vmatprep.subr.mxu0 %v330
    %1956 = vmatpush1.msra.mxu0 %v329
    %1957 = vmatprep.subr.mxu0 %v346
    %1958 = vmatpush1.msra.mxu0 %v345
    %1959 = vmatprep.subr.mxu0 %v362
    %1960 = vmatpush1.msra.mxu0 %v361
    %1961 = vmatprep.subr.mxu0 %v378
    %1962 = vmatpush1.msra.mxu0 %v377
    %1963 = vmatprep.subr.mxu0 %v394
    %1964 = vmatpush1.msra.mxu0 %v393
    %1965 = vmatprep.subr.mxu0 %v410
    %1966 = vmatpush1.msra.mxu0 %v409
    %1967 = vmatprep.subr.mxu0 %v426
    %1968 = vmatpush1.msra.mxu0 %v425
    %1969 = vmatprep.subr.mxu0 %v442
    %1970 = vmatpush1.msra.mxu0 %v441
    %1971 = vmatprep.subr.mxu0 %v458
    %1972 = vmatpush1.msra.mxu0 %v457
    %1973 = vmatprep.subr.mxu0 %v474
    %1974 = vmatpush1.msra.mxu0 %v473
    %1975 = vmatprep.subr.mxu0 %v490
    %1976 = vmatpush1.msra.mxu0 %v489
    %1977 = vmatprep.subr.mxu0 %v506
    %1978 = vmatpush1.msra.mxu0 %v505
    %1979 = vmatprep.subr.mxu0 %v522
    %1980 = vmatpush1.msra.mxu0 %v521
    %1981 = vmatprep.subr.mxu0 %v538
    %1982 = vmatpush1.msra.mxu0 %v537
    %1983 = vmatprep.subr.mxu0 %v554
    %1984 = vmatpush1.msra.mxu0 %v553
    %1985 = vmatprep.subr.mxu0 %v570
    %1986 = vmatpush1.msra.mxu0 %v569
    %1987 = vmatprep.subr.mxu0 %v586
    %1988 = vmatpush1.msra.mxu0 %v585
    %1989 = vmatprep.subr.mxu0 %v602
    %1990 = vmatpush1.msra.mxu0 %v601
    %1991 = vmatprep.subr.mxu0 %v618
    %1992 = vmatpush1.msra.mxu0 %v617
    %1993 = vmatprep.subr.mxu0 %v634
    %1994 = vmatpush1.msra.mxu0 %v633
    %1995 = vmatprep.subr.mxu0 %v650
    %1996 = vmatpush1.msra.mxu0 %v649
    %1997 = vmatprep.mubr.f32.mxu0 %v1704
    %1998 = vmatmul.mubr.f32.gmra.mrb[0].mxu0 %v1696
    %v1999 = vpop.f32.mrb[0].mxu0
    %v2000 = vadd.f32 0.0, %v1999
    %v2001 = vpop.f32.mrb[0].mxu0
    %v2002 = vadd.f32 0.0, %v2001
    %2003 = vdwg.mxu0
    %2004 = vmatprep.subr.mxu0 %v666
    %2005 = vmatpush1.msra.mxu0 %v665
    %2006 = vmatprep.subr.mxu0 %v682
    %2007 = vmatpush1.msra.mxu0 %v681
    %2008 = vmatprep.subr.mxu0 %v698
    %2009 = vmatpush1.msra.mxu0 %v697
    %2010 = vmatprep.subr.mxu0 %v714
    %2011 = vmatpush1.msra.mxu0 %v713
    %2012 = vmatprep.subr.mxu0 %v730
    %2013 = vmatpush1.msra.mxu0 %v729
    %2014 = vmatprep.subr.mxu0 %v746
    %2015 = vmatpush1.msra.mxu0 %v745
    %2016 = vmatprep.subr.mxu0 %v762
    %2017 = vmatpush1.msra.mxu0 %v761
    %2018 = vmatprep.subr.mxu0 %v778
    %2019 = vmatpush1.msra.mxu0 %v777
    %2020 = vmatprep.subr.mxu0 %v794
    %2021 = vmatpush1.msra.mxu0 %v793
    %2022 = vmatprep.subr.mxu0 %v810
    %2023 = vmatpush1.msra.mxu0 %v809
    %2024 = vmatprep.subr.mxu0 %v826
    %2025 = vmatpush1.msra.mxu0 %v825
    %2026 = vmatprep.subr.mxu0 %v842
    %2027 = vmatpush1.msra.mxu0 %v841
    %2028 = vmatprep.subr.mxu0 %v858
    %2029 = vmatpush1.msra.mxu0 %v857
    %2030 = vmatprep.subr.mxu0 %v874
    %2031 = vmatpush1.msra.mxu0 %v873
    %2032 = vmatprep.subr.mxu0 %v890
    %2033 = vmatpush1.msra.mxu0 %v889
    %2034 = vmatprep.subr.mxu0 %v906
    %2035 = vmatpush1.msra.mxu0 %v905
    %2036 = vmatprep.subr.mxu0 %v922
    %2037 = vmatpush1.msra.mxu0 %v921
    %2038 = vmatprep.subr.mxu0 %v938
    %2039 = vmatpush1.msra.mxu0 %v937
    %2040 = vmatprep.subr.mxu0 %v954
    %2041 = vmatpush1.msra.mxu0 %v953
    %2042 = vmatprep.subr.mxu0 %v970
    %2043 = vmatpush1.msra.mxu0 %v969
    %2044 = vmatprep.subr.mxu0 %v986
    %2045 = vmatpush1.msra.mxu0 %v985
    %2046 = vmatprep.subr.mxu0 %v1002
    %2047 = vmatpush1.msra.mxu0 %v1001
    %2048 = vmatprep.subr.mxu0 %v1018
    %2049 = vmatpush1.msra.mxu0 %v1017
    %2050 = vmatprep.subr.mxu0 %v1034
    %2051 = vmatpush1.msra.mxu0 %v1033
    %2052 = vmatprep.subr.mxu0 %v1050
    %2053 = vmatpush1.msra.mxu0 %v1049
    %2054 = vmatprep.subr.mxu0 %v1066
    %2055 = vmatpush1.msra.mxu0 %v1065
    %2056 = vmatprep.subr.mxu0 %v1082
    %2057 = vmatpush1.msra.mxu0 %v1081
    %2058 = vmatprep.subr.mxu0 %v1098
    %2059 = vmatpush1.msra.mxu0 %v1097
    %2060 = vmatprep.subr.mxu0 %v1114
    %2061 = vmatpush1.msra.mxu0 %v1113
    %2062 = vmatprep.subr.mxu0 %v1130
    %2063 = vmatpush1.msra.mxu0 %v1129
    %2064 = vmatprep.subr.mxu0 %v1146
    %2065 = vmatpush1.msra.mxu0 %v1145
    %2066 = vmatprep.subr.mxu0 %v1162
    %2067 = vmatpush1.msra.mxu0 %v1161
    %2068 = vmatprep.mubr.f32.mxu0 %v1705
    %2069 = vmatmul.mubr.f32.gmra.mrb[0].mxu0 %v1703
    %v2070 = vpop.f32.mrb[0].mxu0
    %v2071 = vadd.f32 %v2000, %v2070
    %v2072 = vpop.f32.mrb[0].mxu0
    %v2073 = vadd.f32 %v2002, %v2072
    %2074 = vdwg.mxu0
    %2075 = vmatprep.subr.mxu0 %v1178
    %2076 = vmatpush1.msra.mxu0 %v1177
    %2077 = vmatprep.subr.mxu0 %v1194
    %2078 = vmatpush1.msra.mxu0 %v1193
    %2079 = vmatprep.subr.mxu0 %v1210
    %2080 = vmatpush1.msra.mxu0 %v1209
    %2081 = vmatprep.subr.mxu0 %v1226
    %2082 = vmatpush1.msra.mxu0 %v1225
    %2083 = vmatprep.subr.mxu0 %v1242
    %2084 = vmatpush1.msra.mxu0 %v1241
    %2085 = vmatprep.subr.mxu0 %v1258
    %2086 = vmatpush1.msra.mxu0 %v1257
    %2087 = vmatprep.subr.mxu0 %v1274
    %2088 = vmatpush1.msra.mxu0 %v1273
    %2089 = vmatprep.subr.mxu0 %v1290
    %2090 = vmatpush1.msra.mxu0 %v1289
    %2091 = vmatprep.subr.mxu0 %v1306
    %2092 = vmatpush1.msra.mxu0 %v1305
    %2093 = vmatprep.subr.mxu0 %v1322
    %2094 = vmatpush1.msra.mxu0 %v1321
    %2095 = vmatprep.subr.mxu0 %v1338
    %2096 = vmatpush1.msra.mxu0 %v1337
    %2097 = vmatprep.subr.mxu0 %v1354
    %2098 = vmatpush1.msra.mxu0 %v1353
    %2099 = vmatprep.subr.mxu0 %v1370
    %2100 = vmatpush1.msra.mxu0 %v1369
    %2101 = vmatprep.subr.mxu0 %v1386
    %2102 = vmatpush1.msra.mxu0 %v1385
    %2103 = vmatprep.subr.mxu0 %v1402
    %2104 = vmatpush1.msra.mxu0 %v1401
    %2105 = vmatprep.subr.mxu0 %v1418
    %2106 = vmatpush1.msra.mxu0 %v1417
    %2107 = vmatprep.subr.mxu0 %v1434
    %2108 = vmatpush1.msra.mxu0 %v1433
    %2109 = vmatprep.subr.mxu0 %v1450
    %2110 = vmatpush1.msra.mxu0 %v1449
    %2111 = vmatprep.subr.mxu0 %v1466
    %2112 = vmatpush1.msra.mxu0 %v1465
    %2113 = vmatprep.subr.mxu0 %v1482
    %2114 = vmatpush1.msra.mxu0 %v1481
    %2115 = vmatprep.subr.mxu0 %v1498
    %2116 = vmatpush1.msra.mxu0 %v1497
    %2117 = vmatprep.subr.mxu0 %v1514
    %2118 = vmatpush1.msra.mxu0 %v1513
    %2119 = vmatprep.subr.mxu0 %v1530
    %2120 = vmatpush1.msra.mxu0 %v1529
    %2121 = vmatprep.subr.mxu0 %v1546
    %2122 = vmatpush1.msra.mxu0 %v1545
    %2123 = vmatprep.subr.mxu0 %v1562
    %2124 = vmatpush1.msra.mxu0 %v1561
    %2125 = vmatprep.subr.mxu0 %v1578
    %2126 = vmatpush1.msra.mxu0 %v1577
    %2127 = vmatprep.subr.mxu0 %v1594
    %2128 = vmatpush1.msra.mxu0 %v1593
    %2129 = vmatprep.subr.mxu0 %v1610
    %2130 = vmatpush1.msra.mxu0 %v1609
    %2131 = vmatprep.subr.mxu0 %v1626
    %2132 = vmatpush1.msra.mxu0 %v1625
    %2133 = vmatprep.subr.mxu0 %v1642
    %2134 = vmatpush1.msra.mxu0 %v1641
    %2135 = vmatprep.subr.mxu0 %v1658
    %2136 = vmatpush1.msra.mxu0 %v1657
    %2137 = vmatprep.subr.mxu0 %v1674
    %2138 = vmatpush1.msra.mxu0 %v1673
    %2139 = vmatprep.mubr.f32.mxu0 %v1713
    %2140 = vmatmul.mubr.f32.gmra.mrb[0].mxu0 %v1712
    %v2141 = vpop.f32.mrb[0].mxu0
    %v2142 = vadd.f32 %v2071, %v2141
    %v2143 = vpop.f32.mrb[0].mxu0
    %v2144 = vadd.f32 %v2073, %v2143
    %2145 = vdwg.mxu0
    %2146 = vmatprep.subr.mxu0 %v156
    %2147 = vmatpush1.msra.mxu0 %v155
    %2148 = vmatprep.subr.mxu0 %v172
    %2149 = vmatpush1.msra.mxu0 %v171
    %2150 = vmatprep.subr.mxu0 %v188
    %2151 = vmatpush1.msra.mxu0 %v187
    %2152 = vmatprep.subr.mxu0 %v204
    %2153 = vmatpush1.msra.mxu0 %v203
    %2154 = vmatprep.subr.mxu0 %v220
    %2155 = vmatpush1.msra.mxu0 %v219
    %2156 = vmatprep.subr.mxu0 %v236
    %2157 = vmatpush1.msra.mxu0 %v235
    %2158 = vmatprep.subr.mxu0 %v252
    %2159 = vmatpush1.msra.mxu0 %v251
    %2160 = vmatprep.subr.mxu0 %v268
    %2161 = vmatpush1.msra.mxu0 %v267
    %2162 = vmatprep.subr.mxu0 %v284
    %2163 = vmatpush1.msra.mxu0 %v283
    %2164 = vmatprep.subr.mxu0 %v300
    %2165 = vmatpush1.msra.mxu0 %v299
    %2166 = vmatprep.subr.mxu0 %v316
    %2167 = vmatpush1.msra.mxu0 %v315
    %2168 = vmatprep.subr.mxu0 %v332
    %2169 = vmatpush1.msra.mxu0 %v331
    %2170 = vmatprep.subr.mxu0 %v348
    %2171 = vmatpush1.msra.mxu0 %v347
    %2172 = vmatprep.subr.mxu0 %v364
    %2173 = vmatpush1.msra.mxu0 %v363
    %2174 = vmatprep.subr.mxu0 %v380
    %2175 = vmatpush1.msra.mxu0 %v379
    %2176 = vmatprep.subr.mxu0 %v396
    %2177 = vmatpush1.msra.mxu0 %v395
    %2178 = vmatprep.subr.mxu0 %v412
    %2179 = vmatpush1.msra.mxu0 %v411
    %2180 = vmatprep.subr.mxu0 %v428
    %2181 = vmatpush1.msra.mxu0 %v427
    %2182 = vmatprep.subr.mxu0 %v444
    %2183 = vmatpush1.msra.mxu0 %v443
    %2184 = vmatprep.subr.mxu0 %v460
    %2185 = vmatpush1.msra.mxu0 %v459
    %2186 = vmatprep.subr.mxu0 %v476
    %2187 = vmatpush1.msra.mxu0 %v475
    %2188 = vmatprep.subr.mxu0 %v492
    %2189 = vmatpush1.msra.mxu0 %v491
    %2190 = vmatprep.subr.mxu0 %v508
    %2191 = vmatpush1.msra.mxu0 %v507
    %2192 = vmatprep.subr.mxu0 %v524
    %2193 = vmatpush1.msra.mxu0 %v523
    %2194 = vmatprep.subr.mxu0 %v540
    %2195 = vmatpush1.msra.mxu0 %v539
    %2196 = vmatprep.subr.mxu0 %v556
    %2197 = vmatpush1.msra.mxu0 %v555
    %2198 = vmatprep.subr.mxu0 %v572
    %2199 = vmatpush1.msra.mxu0 %v571
    %2200 = vmatprep.subr.mxu0 %v588
    %2201 = vmatpush1.msra.mxu0 %v587
    %2202 = vmatprep.subr.mxu0 %v604
    %2203 = vmatpush1.msra.mxu0 %v603
    %2204 = vmatprep.subr.mxu0 %v620
    %2205 = vmatpush1.msra.mxu0 %v619
    %2206 = vmatprep.subr.mxu0 %v636
    %2207 = vmatpush1.msra.mxu0 %v635
    %2208 = vmatprep.subr.mxu0 %v652
    %2209 = vmatpush1.msra.mxu0 %v651
    %2210 = vmatprep.mubr.f32.mxu0 %v1704
    %2211 = vmatmul.mubr.f32.gmra.mrb[0].mxu0 %v1696
    %v2212 = vpop.f32.mrb[0].mxu0
    %v2213 = vadd.f32 0.0, %v2212
    %v2214 = vpop.f32.mrb[0].mxu0
    %v2215 = vadd.f32 0.0, %v2214
    %2216 = vdwg.mxu0
    %2217 = vmatprep.subr.mxu0 %v668
    %2218 = vmatpush1.msra.mxu0 %v667
    %2219 = vmatprep.subr.mxu0 %v684
    %2220 = vmatpush1.msra.mxu0 %v683
    %2221 = vmatprep.subr.mxu0 %v700
    %2222 = vmatpush1.msra.mxu0 %v699
    %2223 = vmatprep.subr.mxu0 %v716
    %2224 = vmatpush1.msra.mxu0 %v715
    %2225 = vmatprep.subr.mxu0 %v732
    %2226 = vmatpush1.msra.mxu0 %v731
    %2227 = vmatprep.subr.mxu0 %v748
    %2228 = vmatpush1.msra.mxu0 %v747
    %2229 = vmatprep.subr.mxu0 %v764
    %2230 = vmatpush1.msra.mxu0 %v763
    %2231 = vmatprep.subr.mxu0 %v780
    %2232 = vmatpush1.msra.mxu0 %v779
    %2233 = vmatprep.subr.mxu0 %v796
    %2234 = vmatpush1.msra.mxu0 %v795
    %2235 = vmatprep.subr.mxu0 %v812
    %2236 = vmatpush1.msra.mxu0 %v811
    %2237 = vmatprep.subr.mxu0 %v828
    %2238 = vmatpush1.msra.mxu0 %v827
    %2239 = vmatprep.subr.mxu0 %v844
    %2240 = vmatpush1.msra.mxu0 %v843
    %2241 = vmatprep.subr.mxu0 %v860
    %2242 = vmatpush1.msra.mxu0 %v859
    %2243 = vmatprep.subr.mxu0 %v876
    %2244 = vmatpush1.msra.mxu0 %v875
    %2245 = vmatprep.subr.mxu0 %v892
    %2246 = vmatpush1.msra.mxu0 %v891
    %2247 = vmatprep.subr.mxu0 %v908
    %2248 = vmatpush1.msra.mxu0 %v907
    %2249 = vmatprep.subr.mxu0 %v924
    %2250 = vmatpush1.msra.mxu0 %v923
    %2251 = vmatprep.subr.mxu0 %v940
    %2252 = vmatpush1.msra.mxu0 %v939
    %2253 = vmatprep.subr.mxu0 %v956
    %2254 = vmatpush1.msra.mxu0 %v955
    %2255 = vmatprep.subr.mxu0 %v972
    %2256 = vmatpush1.msra.mxu0 %v971
    %2257 = vmatprep.subr.mxu0 %v988
    %2258 = vmatpush1.msra.mxu0 %v987
    %2259 = vmatprep.subr.mxu0 %v1004
    %2260 = vmatpush1.msra.mxu0 %v1003
    %2261 = vmatprep.subr.mxu0 %v1020
    %2262 = vmatpush1.msra.mxu0 %v1019
    %2263 = vmatprep.subr.mxu0 %v1036
    %2264 = vmatpush1.msra.mxu0 %v1035
    %2265 = vmatprep.subr.mxu0 %v1052
    %2266 = vmatpush1.msra.mxu0 %v1051
    %2267 = vmatprep.subr.mxu0 %v1068
    %2268 = vmatpush1.msra.mxu0 %v1067
    %2269 = vmatprep.subr.mxu0 %v1084
    %2270 = vmatpush1.msra.mxu0 %v1083
    %2271 = vmatprep.subr.mxu0 %v1100
    %2272 = vmatpush1.msra.mxu0 %v1099
    %2273 = vmatprep.subr.mxu0 %v1116
    %2274 = vmatpush1.msra.mxu0 %v1115
    %2275 = vmatprep.subr.mxu0 %v1132
    %2276 = vmatpush1.msra.mxu0 %v1131
    %2277 = vmatprep.subr.mxu0 %v1148
    %2278 = vmatpush1.msra.mxu0 %v1147
    %2279 = vmatprep.subr.mxu0 %v1164
    %2280 = vmatpush1.msra.mxu0 %v1163
    %2281 = vmatprep.mubr.f32.mxu0 %v1705
    %2282 = vmatmul.mubr.f32.gmra.mrb[0].mxu0 %v1703
    %v2283 = vpop.f32.mrb[0].mxu0
    %v2284 = vadd.f32 %v2213, %v2283
    %v2285 = vpop.f32.mrb[0].mxu0
    %v2286 = vadd.f32 %v2215, %v2285
    %2287 = vdwg.mxu0
    %2288 = vmatprep.subr.mxu0 %v1180
    %2289 = vmatpush1.msra.mxu0 %v1179
    %2290 = vmatprep.subr.mxu0 %v1196
    %2291 = vmatpush1.msra.mxu0 %v1195
    %2292 = vmatprep.subr.mxu0 %v1212
    %2293 = vmatpush1.msra.mxu0 %v1211
    %2294 = vmatprep.subr.mxu0 %v1228
    %2295 = vmatpush1.msra.mxu0 %v1227
    %2296 = vmatprep.subr.mxu0 %v1244
    %2297 = vmatpush1.msra.mxu0 %v1243
    %2298 = vmatprep.subr.mxu0 %v1260
    %2299 = vmatpush1.msra.mxu0 %v1259
    %2300 = vmatprep.subr.mxu0 %v1276
    %2301 = vmatpush1.msra.mxu0 %v1275
    %2302 = vmatprep.subr.mxu0 %v1292
    %2303 = vmatpush1.msra.mxu0 %v1291
    %2304 = vmatprep.subr.mxu0 %v1308
    %2305 = vmatpush1.msra.mxu0 %v1307
    %2306 = vmatprep.subr.mxu0 %v1324
    %2307 = vmatpush1.msra.mxu0 %v1323
    %2308 = vmatprep.subr.mxu0 %v1340
    %2309 = vmatpush1.msra.mxu0 %v1339
    %2310 = vmatprep.subr.mxu0 %v1356
    %2311 = vmatpush1.msra.mxu0 %v1355
    %2312 = vmatprep.subr.mxu0 %v1372
    %2313 = vmatpush1.msra.mxu0 %v1371
    %2314 = vmatprep.subr.mxu0 %v1388
    %2315 = vmatpush1.msra.mxu0 %v1387
    %2316 = vmatprep.subr.mxu0 %v1404
    %2317 = vmatpush1.msra.mxu0 %v1403
    %2318 = vmatprep.subr.mxu0 %v1420
    %2319 = vmatpush1.msra.mxu0 %v1419
    %2320 = vmatprep.subr.mxu0 %v1436
    %2321 = vmatpush1.msra.mxu0 %v1435
    %2322 = vmatprep.subr.mxu0 %v1452
    %2323 = vmatpush1.msra.mxu0 %v1451
    %2324 = vmatprep.subr.mxu0 %v1468
    %2325 = vmatpush1.msra.mxu0 %v1467
    %2326 = vmatprep.subr.mxu0 %v1484
    %2327 = vmatpush1.msra.mxu0 %v1483
    %2328 = vmatprep.subr.mxu0 %v1500
    %2329 = vmatpush1.msra.mxu0 %v1499
    %2330 = vmatprep.subr.mxu0 %v1516
    %2331 = vmatpush1.msra.mxu0 %v1515
    %2332 = vmatprep.subr.mxu0 %v1532
    %2333 = vmatpush1.msra.mxu0 %v1531
    %2334 = vmatprep.subr.mxu0 %v1548
    %2335 = vmatpush1.msra.mxu0 %v1547
    %2336 = vmatprep.subr.mxu0 %v1564
    %2337 = vmatpush1.msra.mxu0 %v1563
    %2338 = vmatprep.subr.mxu0 %v1580
    %2339 = vmatpush1.msra.mxu0 %v1579
    %2340 = vmatprep.subr.mxu0 %v1596
    %2341 = vmatpush1.msra.mxu0 %v1595
    %2342 = vmatprep.subr.mxu0 %v1612
    %2343 = vmatpush1.msra.mxu0 %v1611
    %2344 = vmatprep.subr.mxu0 %v1628
    %2345 = vmatpush1.msra.mxu0 %v1627
    %2346 = vmatprep.subr.mxu0 %v1644
    %2347 = vmatpush1.msra.mxu0 %v1643
    %2348 = vmatprep.subr.mxu0 %v1660
    %2349 = vmatpush1.msra.mxu0 %v1659
    %2350 = vmatprep.subr.mxu0 %v1676
    %2351 = vmatpush1.msra.mxu0 %v1675
    %2352 = vmatprep.mubr.f32.mxu0 %v1713
    %2353 = vmatmul.mubr.f32.gmra.mrb[0].mxu0 %v1712
    %v2354 = vpop.f32.mrb[0].mxu0
    %v2355 = vadd.f32 %v2284, %v2354
    %v2356 = vpop.f32.mrb[0].mxu0
    %v2357 = vadd.f32 %v2286, %v2356
    %2358 = vdwg.mxu0
    %2359 = vmatprep.subr.mxu0 %v158
    %2360 = vmatpush1.msra.mxu0 %v157
    %2361 = vmatprep.subr.mxu0 %v174
    %2362 = vmatpush1.msra.mxu0 %v173
    %2363 = vmatprep.subr.mxu0 %v190
    %2364 = vmatpush1.msra.mxu0 %v189
    %2365 = vmatprep.subr.mxu0 %v206
    %2366 = vmatpush1.msra.mxu0 %v205
    %2367 = vmatprep.subr.mxu0 %v222
    %2368 = vmatpush1.msra.mxu0 %v221
    %2369 = vmatprep.subr.mxu0 %v238
    %2370 = vmatpush1.msra.mxu0 %v237
    %2371 = vmatprep.subr.mxu0 %v254
    %2372 = vmatpush1.msra.mxu0 %v253
    %2373 = vmatprep.subr.mxu0 %v270
    %2374 = vmatpush1.msra.mxu0 %v269
    %2375 = vmatprep.subr.mxu0 %v286
    %2376 = vmatpush1.msra.mxu0 %v285
    %2377 = vmatprep.subr.mxu0 %v302
    %2378 = vmatpush1.msra.mxu0 %v301
    %2379 = vmatprep.subr.mxu0 %v318
    %2380 = vmatpush1.msra.mxu0 %v317
    %2381 = vmatprep.subr.mxu0 %v334
    %2382 = vmatpush1.msra.mxu0 %v333
    %2383 = vmatprep.subr.mxu0 %v350
    %2384 = vmatpush1.msra.mxu0 %v349
    %2385 = vmatprep.subr.mxu0 %v366
    %2386 = vmatpush1.msra.mxu0 %v365
    %2387 = vmatprep.subr.mxu0 %v382
    %2388 = vmatpush1.msra.mxu0 %v381
    %2389 = vmatprep.subr.mxu0 %v398
    %2390 = vmatpush1.msra.mxu0 %v397
    %2391 = vmatprep.subr.mxu0 %v414
    %2392 = vmatpush1.msra.mxu0 %v413
    %2393 = vmatprep.subr.mxu0 %v430
    %2394 = vmatpush1.msra.mxu0 %v429
    %2395 = vmatprep.subr.mxu0 %v446
    %2396 = vmatpush1.msra.mxu0 %v445
    %2397 = vmatprep.subr.mxu0 %v462
    %2398 = vmatpush1.msra.mxu0 %v461
    %2399 = vmatprep.subr.mxu0 %v478
    %2400 = vmatpush1.msra.mxu0 %v477
    %2401 = vmatprep.subr.mxu0 %v494
    %2402 = vmatpush1.msra.mxu0 %v493
    %2403 = vmatprep.subr.mxu0 %v510
    %2404 = vmatpush1.msra.mxu0 %v509
    %2405 = vmatprep.subr.mxu0 %v526
    %2406 = vmatpush1.msra.mxu0 %v525
    %2407 = vmatprep.subr.mxu0 %v542
    %2408 = vmatpush1.msra.mxu0 %v541
    %2409 = vmatprep.subr.mxu0 %v558
    %2410 = vmatpush1.msra.mxu0 %v557
    %2411 = vmatprep.subr.mxu0 %v574
    %2412 = vmatpush1.msra.mxu0 %v573
    %2413 = vmatprep.subr.mxu0 %v590
    %2414 = vmatpush1.msra.mxu0 %v589
    %2415 = vmatprep.subr.mxu0 %v606
    %2416 = vmatpush1.msra.mxu0 %v605
    %2417 = vmatprep.subr.mxu0 %v622
    %2418 = vmatpush1.msra.mxu0 %v621
    %2419 = vmatprep.subr.mxu0 %v638
    %2420 = vmatpush1.msra.mxu0 %v637
    %2421 = vmatprep.subr.mxu0 %v654
    %2422 = vmatpush1.msra.mxu0 %v653
    %2423 = vmatprep.mubr.f32.mxu0 %v1704
    %2424 = vmatmul.mubr.f32.gmra.mrb[0].mxu0 %v1696
    %v2425 = vpop.f32.mrb[0].mxu0
    %v2426 = vadd.f32 0.0, %v2425
    %v2427 = vpop.f32.mrb[0].mxu0
    %v2428 = vadd.f32 0.0, %v2427
    %2429 = vdwg.mxu0
    %2430 = vmatprep.subr.mxu0 %v670
    %2431 = vmatpush1.msra.mxu0 %v669
    %2432 = vmatprep.subr.mxu0 %v686
    %2433 = vmatpush1.msra.mxu0 %v685
    %2434 = vmatprep.subr.mxu0 %v702
    %2435 = vmatpush1.msra.mxu0 %v701
    %2436 = vmatprep.subr.mxu0 %v718
    %2437 = vmatpush1.msra.mxu0 %v717
    %2438 = vmatprep.subr.mxu0 %v734
    %2439 = vmatpush1.msra.mxu0 %v733
    %2440 = vmatprep.subr.mxu0 %v750
    %2441 = vmatpush1.msra.mxu0 %v749
    %2442 = vmatprep.subr.mxu0 %v766
    %2443 = vmatpush1.msra.mxu0 %v765
    %2444 = vmatprep.subr.mxu0 %v782
    %2445 = vmatpush1.msra.mxu0 %v781
    %2446 = vmatprep.subr.mxu0 %v798
    %2447 = vmatpush1.msra.mxu0 %v797
    %2448 = vmatprep.subr.mxu0 %v814
    %2449 = vmatpush1.msra.mxu0 %v813
    %2450 = vmatprep.subr.mxu0 %v830
    %2451 = vmatpush1.msra.mxu0 %v829
    %2452 = vmatprep.subr.mxu0 %v846
    %2453 = vmatpush1.msra.mxu0 %v845
    %2454 = vmatprep.subr.mxu0 %v862
    %2455 = vmatpush1.msra.mxu0 %v861
    %2456 = vmatprep.subr.mxu0 %v878
    %2457 = vmatpush1.msra.mxu0 %v877
    %2458 = vmatprep.subr.mxu0 %v894
    %2459 = vmatpush1.msra.mxu0 %v893
    %2460 = vmatprep.subr.mxu0 %v910
    %2461 = vmatpush1.msra.mxu0 %v909
    %2462 = vmatprep.subr.mxu0 %v926
    %2463 = vmatpush1.msra.mxu0 %v925
    %2464 = vmatprep.subr.mxu0 %v942
    %2465 = vmatpush1.msra.mxu0 %v941
    %2466 = vmatprep.subr.mxu0 %v958
    %2467 = vmatpush1.msra.mxu0 %v957
    %2468 = vmatprep.subr.mxu0 %v974
    %2469 = vmatpush1.msra.mxu0 %v973
    %2470 = vmatprep.subr.mxu0 %v990
    %2471 = vmatpush1.msra.mxu0 %v989
    %2472 = vmatprep.subr.mxu0 %v1006
    %2473 = vmatpush1.msra.mxu0 %v1005
    %2474 = vmatprep.subr.mxu0 %v1022
    %2475 = vmatpush1.msra.mxu0 %v1021
    %2476 = vmatprep.subr.mxu0 %v1038
    %2477 = vmatpush1.msra.mxu0 %v1037
    %2478 = vmatprep.subr.mxu0 %v1054
    %2479 = vmatpush1.msra.mxu0 %v1053
    %2480 = vmatprep.subr.mxu0 %v1070
    %2481 = vmatpush1.msra.mxu0 %v1069
    %2482 = vmatprep.subr.mxu0 %v1086
    %2483 = vmatpush1.msra.mxu0 %v1085
    %2484 = vmatprep.subr.mxu0 %v1102
    %2485 = vmatpush1.msra.mxu0 %v1101
    %2486 = vmatprep.subr.mxu0 %v1118
    %2487 = vmatpush1.msra.mxu0 %v1117
    %2488 = vmatprep.subr.mxu0 %v1134
    %2489 = vmatpush1.msra.mxu0 %v1133
    %2490 = vmatprep.subr.mxu0 %v1150
    %2491 = vmatpush1.msra.mxu0 %v1149
    %2492 = vmatprep.subr.mxu0 %v1166
    %2493 = vmatpush1.msra.mxu0 %v1165
    %2494 = vmatprep.mubr.f32.mxu0 %v1705
    %2495 = vmatmul.mubr.f32.gmra.mrb[0].mxu0 %v1703
    %v2496 = vpop.f32.mrb[0].mxu0
    %v2497 = vadd.f32 %v2426, %v2496
    %v2498 = vpop.f32.mrb[0].mxu0
    %v2499 = vadd.f32 %v2428, %v2498
    %2500 = vdwg.mxu0
    %2501 = vmatprep.subr.mxu0 %v1182
    %2502 = vmatpush1.msra.mxu0 %v1181
    %2503 = vmatprep.subr.mxu0 %v1198
    %2504 = vmatpush1.msra.mxu0 %v1197
    %2505 = vmatprep.subr.mxu0 %v1214
    %2506 = vmatpush1.msra.mxu0 %v1213
    %2507 = vmatprep.subr.mxu0 %v1230
    %2508 = vmatpush1.msra.mxu0 %v1229
    %2509 = vmatprep.subr.mxu0 %v1246
    %2510 = vmatpush1.msra.mxu0 %v1245
    %2511 = vmatprep.subr.mxu0 %v1262
    %2512 = vmatpush1.msra.mxu0 %v1261
    %2513 = vmatprep.subr.mxu0 %v1278
    %2514 = vmatpush1.msra.mxu0 %v1277
    %2515 = vmatprep.subr.mxu0 %v1294
    %2516 = vmatpush1.msra.mxu0 %v1293
    %2517 = vmatprep.subr.mxu0 %v1310
    %2518 = vmatpush1.msra.mxu0 %v1309
    %2519 = vmatprep.subr.mxu0 %v1326
    %2520 = vmatpush1.msra.mxu0 %v1325
    %2521 = vmatprep.subr.mxu0 %v1342
    %2522 = vmatpush1.msra.mxu0 %v1341
    %2523 = vmatprep.subr.mxu0 %v1358
    %2524 = vmatpush1.msra.mxu0 %v1357
    %2525 = vmatprep.subr.mxu0 %v1374
    %2526 = vmatpush1.msra.mxu0 %v1373
    %2527 = vmatprep.subr.mxu0 %v1390
    %2528 = vmatpush1.msra.mxu0 %v1389
    %2529 = vmatprep.subr.mxu0 %v1406
    %2530 = vmatpush1.msra.mxu0 %v1405
    %2531 = vmatprep.subr.mxu0 %v1422
    %2532 = vmatpush1.msra.mxu0 %v1421
    %2533 = vmatprep.subr.mxu0 %v1438
    %2534 = vmatpush1.msra.mxu0 %v1437
    %2535 = vmatprep.subr.mxu0 %v1454
    %2536 = vmatpush1.msra.mxu0 %v1453
    %2537 = vmatprep.subr.mxu0 %v1470
    %2538 = vmatpush1.msra.mxu0 %v1469
    %2539 = vmatprep.subr.mxu0 %v1486
    %2540 = vmatpush1.msra.mxu0 %v1485
    %2541 = vmatprep.subr.mxu0 %v1502
    %2542 = vmatpush1.msra.mxu0 %v1501
    %2543 = vmatprep.subr.mxu0 %v1518
    %2544 = vmatpush1.msra.mxu0 %v1517
    %2545 = vmatprep.subr.mxu0 %v1534
    %2546 = vmatpush1.msra.mxu0 %v1533
    %2547 = vmatprep.subr.mxu0 %v1550
    %2548 = vmatpush1.msra.mxu0 %v1549
    %2549 = vmatprep.subr.mxu0 %v1566
    %2550 = vmatpush1.msra.mxu0 %v1565
    %2551 = vmatprep.subr.mxu0 %v1582
    %2552 = vmatpush1.msra.mxu0 %v1581
    %2553 = vmatprep.subr.mxu0 %v1598
    %2554 = vmatpush1.msra.mxu0 %v1597
    %2555 = vmatprep.subr.mxu0 %v1614
    %2556 = vmatpush1.msra.mxu0 %v1613
    %2557 = vmatprep.subr.mxu0 %v1630
    %2558 = vmatpush1.msra.mxu0 %v1629
    %2559 = vmatprep.subr.mxu0 %v1646
    %2560 = vmatpush1.msra.mxu0 %v1645
    %2561 = vmatprep.subr.mxu0 %v1662
    %2562 = vmatpush1.msra.mxu0 %v1661
    %2563 = vmatprep.subr.mxu0 %v1678
    %2564 = vmatpush1.msra.mxu0 %v1677
    %2565 = vmatprep.mubr.f32.mxu0 %v1713
    %2566 = vmatmul.mubr.f32.gmra.mrb[0].mxu0 %v1712
    %v2567 = vpop.f32.mrb[0].mxu0
    %v2568 = vadd.f32 %v2497, %v2567
    %v2569 = vpop.f32.mrb[0].mxu0
    %v2570 = vadd.f32 %v2499, %v2569
    %2571 = vdwg.mxu0
    %2572 = vmatprep.subr.mxu0 %v160
    %2573 = vmatpush1.msra.mxu0 %v159
    %2574 = vmatprep.subr.mxu0 %v176
    %2575 = vmatpush1.msra.mxu0 %v175
    %2576 = vmatprep.subr.mxu0 %v192
    %2577 = vmatpush1.msra.mxu0 %v191
    %2578 = vmatprep.subr.mxu0 %v208
    %2579 = vmatpush1.msra.mxu0 %v207
    %2580 = vmatprep.subr.mxu0 %v224
    %2581 = vmatpush1.msra.mxu0 %v223
    %2582 = vmatprep.subr.mxu0 %v240
    %2583 = vmatpush1.msra.mxu0 %v239
    %2584 = vmatprep.subr.mxu0 %v256
    %2585 = vmatpush1.msra.mxu0 %v255
    %2586 = vmatprep.subr.mxu0 %v272
    %2587 = vmatpush1.msra.mxu0 %v271
    %2588 = vmatprep.subr.mxu0 %v288
    %2589 = vmatpush1.msra.mxu0 %v287
    %2590 = vmatprep.subr.mxu0 %v304
    %2591 = vmatpush1.msra.mxu0 %v303
    %2592 = vmatprep.subr.mxu0 %v320
    %2593 = vmatpush1.msra.mxu0 %v319
    %2594 = vmatprep.subr.mxu0 %v336
    %2595 = vmatpush1.msra.mxu0 %v335
    %2596 = vmatprep.subr.mxu0 %v352
    %2597 = vmatpush1.msra.mxu0 %v351
    %2598 = vmatprep.subr.mxu0 %v368
    %2599 = vmatpush1.msra.mxu0 %v367
    %2600 = vmatprep.subr.mxu0 %v384
    %2601 = vmatpush1.msra.mxu0 %v383
    %2602 = vmatprep.subr.mxu0 %v400
    %2603 = vmatpush1.msra.mxu0 %v399
    %2604 = vmatprep.subr.mxu0 %v416
    %2605 = vmatpush1.msra.mxu0 %v415
    %2606 = vmatprep.subr.mxu0 %v432
    %2607 = vmatpush1.msra.mxu0 %v431
    %2608 = vmatprep.subr.mxu0 %v448
    %2609 = vmatpush1.msra.mxu0 %v447
    %2610 = vmatprep.subr.mxu0 %v464
    %2611 = vmatpush1.msra.mxu0 %v463
    %2612 = vmatprep.subr.mxu0 %v480
    %2613 = vmatpush1.msra.mxu0 %v479
    %2614 = vmatprep.subr.mxu0 %v496
    %2615 = vmatpush1.msra.mxu0 %v495
    %2616 = vmatprep.subr.mxu0 %v512
    %2617 = vmatpush1.msra.mxu0 %v511
    %2618 = vmatprep.subr.mxu0 %v528
    %2619 = vmatpush1.msra.mxu0 %v527
    %2620 = vmatprep.subr.mxu0 %v544
    %2621 = vmatpush1.msra.mxu0 %v543
    %2622 = vmatprep.subr.mxu0 %v560
    %2623 = vmatpush1.msra.mxu0 %v559
    %2624 = vmatprep.subr.mxu0 %v576
    %2625 = vmatpush1.msra.mxu0 %v575
    %2626 = vmatprep.subr.mxu0 %v592
    %2627 = vmatpush1.msra.mxu0 %v591
    %2628 = vmatprep.subr.mxu0 %v608
    %2629 = vmatpush1.msra.mxu0 %v607
    %2630 = vmatprep.subr.mxu0 %v624
    %2631 = vmatpush1.msra.mxu0 %v623
    %2632 = vmatprep.subr.mxu0 %v640
    %2633 = vmatpush1.msra.mxu0 %v639
    %2634 = vmatprep.subr.mxu0 %v656
    %2635 = vmatpush1.msra.mxu0 %v655
    %2636 = vmatprep.mubr.f32.mxu0 %v1704
    %2637 = vmatmul.mubr.f32.gmra.mrb[0].mxu0 %v1696
    %v2638 = vpop.f32.mrb[0].mxu0
    %v2639 = vadd.f32 0.0, %v2638
    %v2640 = vpop.f32.mrb[0].mxu0
    %v2641 = vadd.f32 0.0, %v2640
    %2642 = vdwg.mxu0
    %2643 = vmatprep.subr.mxu0 %v672
    %2644 = vmatpush1.msra.mxu0 %v671
    %2645 = vmatprep.subr.mxu0 %v688
    %2646 = vmatpush1.msra.mxu0 %v687
    %2647 = vmatprep.subr.mxu0 %v704
    %2648 = vmatpush1.msra.mxu0 %v703
    %2649 = vmatprep.subr.mxu0 %v720
    %2650 = vmatpush1.msra.mxu0 %v719
    %2651 = vmatprep.subr.mxu0 %v736
    %2652 = vmatpush1.msra.mxu0 %v735
    %2653 = vmatprep.subr.mxu0 %v752
    %2654 = vmatpush1.msra.mxu0 %v751
    %2655 = vmatprep.subr.mxu0 %v768
    %2656 = vmatpush1.msra.mxu0 %v767
    %2657 = vmatprep.subr.mxu0 %v784
    %2658 = vmatpush1.msra.mxu0 %v783
    %2659 = vmatprep.subr.mxu0 %v800
    %2660 = vmatpush1.msra.mxu0 %v799
    %2661 = vmatprep.subr.mxu0 %v816
    %2662 = vmatpush1.msra.mxu0 %v815
    %2663 = vmatprep.subr.mxu0 %v832
    %2664 = vmatpush1.msra.mxu0 %v831
    %2665 = vmatprep.subr.mxu0 %v848
    %2666 = vmatpush1.msra.mxu0 %v847
    %2667 = vmatprep.subr.mxu0 %v864
    %2668 = vmatpush1.msra.mxu0 %v863
    %2669 = vmatprep.subr.mxu0 %v880
    %2670 = vmatpush1.msra.mxu0 %v879
    %2671 = vmatprep.subr.mxu0 %v896
    %2672 = vmatpush1.msra.mxu0 %v895
    %2673 = vmatprep.subr.mxu0 %v912
    %2674 = vmatpush1.msra.mxu0 %v911
    %2675 = vmatprep.subr.mxu0 %v928
    %2676 = vmatpush1.msra.mxu0 %v927
    %2677 = vmatprep.subr.mxu0 %v944
    %2678 = vmatpush1.msra.mxu0 %v943
    %2679 = vmatprep.subr.mxu0 %v960
    %2680 = vmatpush1.msra.mxu0 %v959
    %2681 = vmatprep.subr.mxu0 %v976
    %2682 = vmatpush1.msra.mxu0 %v975
    %2683 = vmatprep.subr.mxu0 %v992
    %2684 = vmatpush1.msra.mxu0 %v991
    %2685 = vmatprep.subr.mxu0 %v1008
    %2686 = vmatpush1.msra.mxu0 %v1007
    %2687 = vmatprep.subr.mxu0 %v1024
    %2688 = vmatpush1.msra.mxu0 %v1023
    %2689 = vmatprep.subr.mxu0 %v1040
    %2690 = vmatpush1.msra.mxu0 %v1039
    %2691 = vmatprep.subr.mxu0 %v1056
    %2692 = vmatpush1.msra.mxu0 %v1055
    %2693 = vmatprep.subr.mxu0 %v1072
    %2694 = vmatpush1.msra.mxu0 %v1071
    %2695 = vmatprep.subr.mxu0 %v1088
    %2696 = vmatpush1.msra.mxu0 %v1087
    %2697 = vmatprep.subr.mxu0 %v1104
    %2698 = vmatpush1.msra.mxu0 %v1103
    %2699 = vmatprep.subr.mxu0 %v1120
    %2700 = vmatpush1.msra.mxu0 %v1119
    %2701 = vmatprep.subr.mxu0 %v1136
    %2702 = vmatpush1.msra.mxu0 %v1135
    %2703 = vmatprep.subr.mxu0 %v1152
    %2704 = vmatpush1.msra.mxu0 %v1151
    %2705 = vmatprep.subr.mxu0 %v1168
    %2706 = vmatpush1.msra.mxu0 %v1167
    %2707 = vmatprep.mubr.f32.mxu0 %v1705
    %2708 = vmatmul.mubr.f32.gmra.mrb[0].mxu0 %v1703
    %v2709 = vpop.f32.mrb[0].mxu0
    %v2710 = vadd.f32 %v2639, %v2709
    %v2711 = vpop.f32.mrb[0].mxu0
    %v2712 = vadd.f32 %v2641, %v2711
    %2713 = vdwg.mxu0
    %2714 = vmatprep.subr.mxu0 %v1184
    %2715 = vmatpush1.msra.mxu0 %v1183
    %2716 = vmatprep.subr.mxu0 %v1200
    %2717 = vmatpush1.msra.mxu0 %v1199
    %2718 = vmatprep.subr.mxu0 %v1216
    %2719 = vmatpush1.msra.mxu0 %v1215
    %2720 = vmatprep.subr.mxu0 %v1232
    %2721 = vmatpush1.msra.mxu0 %v1231
    %2722 = vmatprep.subr.mxu0 %v1248
    %2723 = vmatpush1.msra.mxu0 %v1247
    %2724 = vmatprep.subr.mxu0 %v1264
    %2725 = vmatpush1.msra.mxu0 %v1263
    %2726 = vmatprep.subr.mxu0 %v1280
    %2727 = vmatpush1.msra.mxu0 %v1279
    %2728 = vmatprep.subr.mxu0 %v1296
    %2729 = vmatpush1.msra.mxu0 %v1295
    %2730 = vmatprep.subr.mxu0 %v1312
    %2731 = vmatpush1.msra.mxu0 %v1311
    %2732 = vmatprep.subr.mxu0 %v1328
    %2733 = vmatpush1.msra.mxu0 %v1327
    %2734 = vmatprep.subr.mxu0 %v1344
    %2735 = vmatpush1.msra.mxu0 %v1343
    %2736 = vmatprep.subr.mxu0 %v1360
    %2737 = vmatpush1.msra.mxu0 %v1359
    %2738 = vmatprep.subr.mxu0 %v1376
    %2739 = vmatpush1.msra.mxu0 %v1375
    %2740 = vmatprep.subr.mxu0 %v1392
    %2741 = vmatpush1.msra.mxu0 %v1391
    %2742 = vmatprep.subr.mxu0 %v1408
    %2743 = vmatpush1.msra.mxu0 %v1407
    %2744 = vmatprep.subr.mxu0 %v1424
    %2745 = vmatpush1.msra.mxu0 %v1423
    %2746 = vmatprep.subr.mxu0 %v1440
    %2747 = vmatpush1.msra.mxu0 %v1439
    %2748 = vmatprep.subr.mxu0 %v1456
    %2749 = vmatpush1.msra.mxu0 %v1455
    %2750 = vmatprep.subr.mxu0 %v1472
    %2751 = vmatpush1.msra.mxu0 %v1471
    %2752 = vmatprep.subr.mxu0 %v1488
    %2753 = vmatpush1.msra.mxu0 %v1487
    %2754 = vmatprep.subr.mxu0 %v1504
    %2755 = vmatpush1.msra.mxu0 %v1503
    %2756 = vmatprep.subr.mxu0 %v1520
    %2757 = vmatpush1.msra.mxu0 %v1519
    %2758 = vmatprep.subr.mxu0 %v1536
    %2759 = vmatpush1.msra.mxu0 %v1535
    %2760 = vmatprep.subr.mxu0 %v1552
    %2761 = vmatpush1.msra.mxu0 %v1551
    %2762 = vmatprep.subr.mxu0 %v1568
    %2763 = vmatpush1.msra.mxu0 %v1567
    %2764 = vmatprep.subr.mxu0 %v1584
    %2765 = vmatpush1.msra.mxu0 %v1583
    %2766 = vmatprep.subr.mxu0 %v1600
    %2767 = vmatpush1.msra.mxu0 %v1599
    %2768 = vmatprep.subr.mxu0 %v1616
    %2769 = vmatpush1.msra.mxu0 %v1615
    %2770 = vmatprep.subr.mxu0 %v1632
    %2771 = vmatpush1.msra.mxu0 %v1631
    %2772 = vmatprep.subr.mxu0 %v1648
    %2773 = vmatpush1.msra.mxu0 %v1647
    %2774 = vmatprep.subr.mxu0 %v1664
    %2775 = vmatpush1.msra.mxu0 %v1663
    %2776 = vmatprep.subr.mxu0 %v1680
    %2777 = vmatpush1.msra.mxu0 %v1679
    %2778 = vmatprep.mubr.f32.mxu0 %v1713
    %2779 = vmatmul.mubr.f32.gmra.mrb[0].mxu0 %v1712
    %v2780 = vpop.f32.mrb[0].mxu0
    %v2781 = vadd.f32 %v2710, %v2780
    %v2782 = vpop.f32.mrb[0].mxu0
    %v2783 = vadd.f32 %v2712, %v2782
    %2784 = vdwg.mxu0
    %2785 = vmatprep.subr.mxu0 %v162
    %2786 = vmatpush1.msra.mxu0 %v161
    %2787 = vmatprep.subr.mxu0 %v178
    %2788 = vmatpush1.msra.mxu0 %v177
    %2789 = vmatprep.subr.mxu0 %v194
    %2790 = vmatpush1.msra.mxu0 %v193
    %2791 = vmatprep.subr.mxu0 %v210
    %2792 = vmatpush1.msra.mxu0 %v209
    %2793 = vmatprep.subr.mxu0 %v226
    %2794 = vmatpush1.msra.mxu0 %v225
    %2795 = vmatprep.subr.mxu0 %v242
    %2796 = vmatpush1.msra.mxu0 %v241
    %2797 = vmatprep.subr.mxu0 %v258
    %2798 = vmatpush1.msra.mxu0 %v257
    %2799 = vmatprep.subr.mxu0 %v274
    %2800 = vmatpush1.msra.mxu0 %v273
    %2801 = vmatprep.subr.mxu0 %v290
    %2802 = vmatpush1.msra.mxu0 %v289
    %2803 = vmatprep.subr.mxu0 %v306
    %2804 = vmatpush1.msra.mxu0 %v305
    %2805 = vmatprep.subr.mxu0 %v322
    %2806 = vmatpush1.msra.mxu0 %v321
    %2807 = vmatprep.subr.mxu0 %v338
    %2808 = vmatpush1.msra.mxu0 %v337
    %2809 = vmatprep.subr.mxu0 %v354
    %2810 = vmatpush1.msra.mxu0 %v353
    %2811 = vmatprep.subr.mxu0 %v370
    %2812 = vmatpush1.msra.mxu0 %v369
    %2813 = vmatprep.subr.mxu0 %v386
    %2814 = vmatpush1.msra.mxu0 %v385
    %2815 = vmatprep.subr.mxu0 %v402
    %2816 = vmatpush1.msra.mxu0 %v401
    %2817 = vmatprep.subr.mxu0 %v418
    %2818 = vmatpush1.msra.mxu0 %v417
    %2819 = vmatprep.subr.mxu0 %v434
    %2820 = vmatpush1.msra.mxu0 %v433
    %2821 = vmatprep.subr.mxu0 %v450
    %2822 = vmatpush1.msra.mxu0 %v449
    %2823 = vmatprep.subr.mxu0 %v466
    %2824 = vmatpush1.msra.mxu0 %v465
    %2825 = vmatprep.subr.mxu0 %v482
    %2826 = vmatpush1.msra.mxu0 %v481
    %2827 = vmatprep.subr.mxu0 %v498
    %2828 = vmatpush1.msra.mxu0 %v497
    %2829 = vmatprep.subr.mxu0 %v514
    %2830 = vmatpush1.msra.mxu0 %v513
    %2831 = vmatprep.subr.mxu0 %v530
    %2832 = vmatpush1.msra.mxu0 %v529
    %2833 = vmatprep.subr.mxu0 %v546
    %2834 = vmatpush1.msra.mxu0 %v545
    %2835 = vmatprep.subr.mxu0 %v562
    %2836 = vmatpush1.msra.mxu0 %v561
    %2837 = vmatprep.subr.mxu0 %v578
    %2838 = vmatpush1.msra.mxu0 %v577
    %2839 = vmatprep.subr.mxu0 %v594
    %2840 = vmatpush1.msra.mxu0 %v593
    %2841 = vmatprep.subr.mxu0 %v610
    %2842 = vmatpush1.msra.mxu0 %v609
    %2843 = vmatprep.subr.mxu0 %v626
    %2844 = vmatpush1.msra.mxu0 %v625
    %2845 = vmatprep.subr.mxu0 %v642
    %2846 = vmatpush1.msra.mxu0 %v641
    %2847 = vmatprep.subr.mxu0 %v658
    %2848 = vmatpush1.msra.mxu0 %v657
    %2849 = vmatprep.mubr.f32.mxu0 %v1704
    %2850 = vmatmul.mubr.f32.gmra.mrb[0].mxu0 %v1696
    %v2851 = vpop.f32.mrb[0].mxu0
    %v2852 = vadd.f32 0.0, %v2851
    %v2853 = vpop.f32.mrb[0].mxu0
    %v2854 = vadd.f32 0.0, %v2853
    %2855 = vdwg.mxu0
    %2856 = vmatprep.subr.mxu0 %v674
    %2857 = vmatpush1.msra.mxu0 %v673
    %2858 = vmatprep.subr.mxu0 %v690
    %2859 = vmatpush1.msra.mxu0 %v689
    %2860 = vmatprep.subr.mxu0 %v706
    %2861 = vmatpush1.msra.mxu0 %v705
    %2862 = vmatprep.subr.mxu0 %v722
    %2863 = vmatpush1.msra.mxu0 %v721
    %2864 = vmatprep.subr.mxu0 %v738
    %2865 = vmatpush1.msra.mxu0 %v737
    %2866 = vmatprep.subr.mxu0 %v754
    %2867 = vmatpush1.msra.mxu0 %v753
    %2868 = vmatprep.subr.mxu0 %v770
    %2869 = vmatpush1.msra.mxu0 %v769
    %2870 = vmatprep.subr.mxu0 %v786
    %2871 = vmatpush1.msra.mxu0 %v785
    %2872 = vmatprep.subr.mxu0 %v802
    %2873 = vmatpush1.msra.mxu0 %v801
    %2874 = vmatprep.subr.mxu0 %v818
    %2875 = vmatpush1.msra.mxu0 %v817
    %2876 = vmatprep.subr.mxu0 %v834
    %2877 = vmatpush1.msra.mxu0 %v833
    %2878 = vmatprep.subr.mxu0 %v850
    %2879 = vmatpush1.msra.mxu0 %v849
    %2880 = vmatprep.subr.mxu0 %v866
    %2881 = vmatpush1.msra.mxu0 %v865
    %2882 = vmatprep.subr.mxu0 %v882
    %2883 = vmatpush1.msra.mxu0 %v881
    %2884 = vmatprep.subr.mxu0 %v898
    %2885 = vmatpush1.msra.mxu0 %v897
    %2886 = vmatprep.subr.mxu0 %v914
    %2887 = vmatpush1.msra.mxu0 %v913
    %2888 = vmatprep.subr.mxu0 %v930
    %2889 = vmatpush1.msra.mxu0 %v929
    %2890 = vmatprep.subr.mxu0 %v946
    %2891 = vmatpush1.msra.mxu0 %v945
    %2892 = vmatprep.subr.mxu0 %v962
    %2893 = vmatpush1.msra.mxu0 %v961
    %2894 = vmatprep.subr.mxu0 %v978
    %2895 = vmatpush1.msra.mxu0 %v977
    %2896 = vmatprep.subr.mxu0 %v994
    %2897 = vmatpush1.msra.mxu0 %v993
    %2898 = vmatprep.subr.mxu0 %v1010
    %2899 = vmatpush1.msra.mxu0 %v1009
    %2900 = vmatprep.subr.mxu0 %v1026
    %2901 = vmatpush1.msra.mxu0 %v1025
    %2902 = vmatprep.subr.mxu0 %v1042
    %2903 = vmatpush1.msra.mxu0 %v1041
    %2904 = vmatprep.subr.mxu0 %v1058
    %2905 = vmatpush1.msra.mxu0 %v1057
    %2906 = vmatprep.subr.mxu0 %v1074
    %2907 = vmatpush1.msra.mxu0 %v1073
    %2908 = vmatprep.subr.mxu0 %v1090
    %2909 = vmatpush1.msra.mxu0 %v1089
    %2910 = vmatprep.subr.mxu0 %v1106
    %2911 = vmatpush1.msra.mxu0 %v1105
    %2912 = vmatprep.subr.mxu0 %v1122
    %2913 = vmatpush1.msra.mxu0 %v1121
    %2914 = vmatprep.subr.mxu0 %v1138
    %2915 = vmatpush1.msra.mxu0 %v1137
    %2916 = vmatprep.subr.mxu0 %v1154
    %2917 = vmatpush1.msra.mxu0 %v1153
    %2918 = vmatprep.subr.mxu0 %v1170
    %2919 = vmatpush1.msra.mxu0 %v1169
    %2920 = vmatprep.mubr.f32.mxu0 %v1705
    %2921 = vmatmul.mubr.f32.gmra.mrb[0].mxu0 %v1703
    %v2922 = vpop.f32.mrb[0].mxu0
    %v2923 = vadd.f32 %v2852, %v2922
    %v2924 = vpop.f32.mrb[0].mxu0
    %v2925 = vadd.f32 %v2854, %v2924
    %2926 = vdwg.mxu0
    %2927 = vmatprep.subr.mxu0 %v1186
    %2928 = vmatpush1.msra.mxu0 %v1185
    %2929 = vmatprep.subr.mxu0 %v1202
    %2930 = vmatpush1.msra.mxu0 %v1201
    %2931 = vmatprep.subr.mxu0 %v1218
    %2932 = vmatpush1.msra.mxu0 %v1217
    %2933 = vmatprep.subr.mxu0 %v1234
    %2934 = vmatpush1.msra.mxu0 %v1233
    %2935 = vmatprep.subr.mxu0 %v1250
    %2936 = vmatpush1.msra.mxu0 %v1249
    %2937 = vmatprep.subr.mxu0 %v1266
    %2938 = vmatpush1.msra.mxu0 %v1265
    %2939 = vmatprep.subr.mxu0 %v1282
    %2940 = vmatpush1.msra.mxu0 %v1281
    %2941 = vmatprep.subr.mxu0 %v1298
    %2942 = vmatpush1.msra.mxu0 %v1297
    %2943 = vmatprep.subr.mxu0 %v1314
    %2944 = vmatpush1.msra.mxu0 %v1313
    %2945 = vmatprep.subr.mxu0 %v1330
    %2946 = vmatpush1.msra.mxu0 %v1329
    %2947 = vmatprep.subr.mxu0 %v1346
    %2948 = vmatpush1.msra.mxu0 %v1345
    %2949 = vmatprep.subr.mxu0 %v1362
    %2950 = vmatpush1.msra.mxu0 %v1361
    %2951 = vmatprep.subr.mxu0 %v1378
    %2952 = vmatpush1.msra.mxu0 %v1377
    %2953 = vmatprep.subr.mxu0 %v1394
    %2954 = vmatpush1.msra.mxu0 %v1393
    %2955 = vmatprep.subr.mxu0 %v1410
    %2956 = vmatpush1.msra.mxu0 %v1409
    %2957 = vmatprep.subr.mxu0 %v1426
    %2958 = vmatpush1.msra.mxu0 %v1425
    %2959 = vmatprep.subr.mxu0 %v1442
    %2960 = vmatpush1.msra.mxu0 %v1441
    %2961 = vmatprep.subr.mxu0 %v1458
    %2962 = vmatpush1.msra.mxu0 %v1457
    %2963 = vmatprep.subr.mxu0 %v1474
    %2964 = vmatpush1.msra.mxu0 %v1473
    %2965 = vmatprep.subr.mxu0 %v1490
    %2966 = vmatpush1.msra.mxu0 %v1489
    %2967 = vmatprep.subr.mxu0 %v1506
    %2968 = vmatpush1.msra.mxu0 %v1505
    %2969 = vmatprep.subr.mxu0 %v1522
    %2970 = vmatpush1.msra.mxu0 %v1521
    %2971 = vmatprep.subr.mxu0 %v1538
    %2972 = vmatpush1.msra.mxu0 %v1537
    %2973 = vmatprep.subr.mxu0 %v1554
    %2974 = vmatpush1.msra.mxu0 %v1553
    %2975 = vmatprep.subr.mxu0 %v1570
    %2976 = vmatpush1.msra.mxu0 %v1569
    %2977 = vmatprep.subr.mxu0 %v1586
    %2978 = vmatpush1.msra.mxu0 %v1585
    %2979 = vmatprep.subr.mxu0 %v1602
    %2980 = vmatpush1.msra.mxu0 %v1601
    %2981 = vmatprep.subr.mxu0 %v1618
    %2982 = vmatpush1.msra.mxu0 %v1617
    %2983 = vmatprep.subr.mxu0 %v1634
    %2984 = vmatpush1.msra.mxu0 %v1633
    %2985 = vmatprep.subr.mxu0 %v1650
    %2986 = vmatpush1.msra.mxu0 %v1649
    %2987 = vmatprep.subr.mxu0 %v1666
    %2988 = vmatpush1.msra.mxu0 %v1665
    %2989 = vmatprep.subr.mxu0 %v1682
    %2990 = vmatpush1.msra.mxu0 %v1681
    %2991 = vmatprep.mubr.f32.mxu0 %v1713
    %2992 = vmatmul.mubr.f32.gmra.mrb[0].mxu0 %v1712
    %v2993 = vpop.f32.mrb[0].mxu0
    %v2994 = vadd.f32 %v2923, %v2993
    %v2995 = vpop.f32.mrb[0].mxu0
    %v2996 = vadd.f32 %v2925, %v2995
    %2997 = vdwg.mxu0
    %2998 = vmatprep.subr.mxu0 %v164
    %2999 = vmatpush1.msra.mxu0 %v163
    %3000 = vmatprep.subr.mxu0 %v180
    %3001 = vmatpush1.msra.mxu0 %v179
    %3002 = vmatprep.subr.mxu0 %v196
    %3003 = vmatpush1.msra.mxu0 %v195
    %3004 = vmatprep.subr.mxu0 %v212
    %3005 = vmatpush1.msra.mxu0 %v211
    %3006 = vmatprep.subr.mxu0 %v228
    %3007 = vmatpush1.msra.mxu0 %v227
    %3008 = vmatprep.subr.mxu0 %v244
    %3009 = vmatpush1.msra.mxu0 %v243
    %3010 = vmatprep.subr.mxu0 %v260
    %3011 = vmatpush1.msra.mxu0 %v259
    %3012 = vmatprep.subr.mxu0 %v276
    %3013 = vmatpush1.msra.mxu0 %v275
    %3014 = vmatprep.subr.mxu0 %v292
    %3015 = vmatpush1.msra.mxu0 %v291
    %3016 = vmatprep.subr.mxu0 %v308
    %3017 = vmatpush1.msra.mxu0 %v307
    %3018 = vmatprep.subr.mxu0 %v324
    %3019 = vmatpush1.msra.mxu0 %v323
    %3020 = vmatprep.subr.mxu0 %v340
    %3021 = vmatpush1.msra.mxu0 %v339
    %3022 = vmatprep.subr.mxu0 %v356
    %3023 = vmatpush1.msra.mxu0 %v355
    %3024 = vmatprep.subr.mxu0 %v372
    %3025 = vmatpush1.msra.mxu0 %v371
    %3026 = vmatprep.subr.mxu0 %v388
    %3027 = vmatpush1.msra.mxu0 %v387
    %3028 = vmatprep.subr.mxu0 %v404
    %3029 = vmatpush1.msra.mxu0 %v403
    %3030 = vmatprep.subr.mxu0 %v420
    %3031 = vmatpush1.msra.mxu0 %v419
    %3032 = vmatprep.subr.mxu0 %v436
    %3033 = vmatpush1.msra.mxu0 %v435
    %3034 = vmatprep.subr.mxu0 %v452
    %3035 = vmatpush1.msra.mxu0 %v451
    %3036 = vmatprep.subr.mxu0 %v468
    %3037 = vmatpush1.msra.mxu0 %v467
    %3038 = vmatprep.subr.mxu0 %v484
    %3039 = vmatpush1.msra.mxu0 %v483
    %3040 = vmatprep.subr.mxu0 %v500
    %3041 = vmatpush1.msra.mxu0 %v499
    %3042 = vmatprep.subr.mxu0 %v516
    %3043 = vmatpush1.msra.mxu0 %v515
    %3044 = vmatprep.subr.mxu0 %v532
    %3045 = vmatpush1.msra.mxu0 %v531
    %3046 = vmatprep.subr.mxu0 %v548
    %3047 = vmatpush1.msra.mxu0 %v547
    %3048 = vmatprep.subr.mxu0 %v564
    %3049 = vmatpush1.msra.mxu0 %v563
    %3050 = vmatprep.subr.mxu0 %v580
    %3051 = vmatpush1.msra.mxu0 %v579
    %3052 = vmatprep.subr.mxu0 %v596
    %3053 = vmatpush1.msra.mxu0 %v595
    %3054 = vmatprep.subr.mxu0 %v612
    %3055 = vmatpush1.msra.mxu0 %v611
    %3056 = vmatprep.subr.mxu0 %v628
    %3057 = vmatpush1.msra.mxu0 %v627
    %3058 = vmatprep.subr.mxu0 %v644
    %3059 = vmatpush1.msra.mxu0 %v643
    %3060 = vmatprep.subr.mxu0 %v660
    %3061 = vmatpush1.msra.mxu0 %v659
    %3062 = vmatprep.mubr.f32.mxu0 %v1704
    %3063 = vmatmul.mubr.f32.gmra.mrb[0].mxu0 %v1696
    %v3064 = vpop.f32.mrb[0].mxu0
    %v3065 = vadd.f32 0.0, %v3064
    %v3066 = vpop.f32.mrb[0].mxu0
    %v3067 = vadd.f32 0.0, %v3066
    %3068 = vdwg.mxu0
    %3069 = vmatprep.subr.mxu0 %v676
    %3070 = vmatpush1.msra.mxu0 %v675
    %3071 = vmatprep.subr.mxu0 %v692
    %3072 = vmatpush1.msra.mxu0 %v691
    %3073 = vmatprep.subr.mxu0 %v708
    %3074 = vmatpush1.msra.mxu0 %v707
    %3075 = vmatprep.subr.mxu0 %v724
    %3076 = vmatpush1.msra.mxu0 %v723
    %3077 = vmatprep.subr.mxu0 %v740
    %3078 = vmatpush1.msra.mxu0 %v739
    %3079 = vmatprep.subr.mxu0 %v756
    %3080 = vmatpush1.msra.mxu0 %v755
    %3081 = vmatprep.subr.mxu0 %v772
    %3082 = vmatpush1.msra.mxu0 %v771
    %3083 = vmatprep.subr.mxu0 %v788
    %3084 = vmatpush1.msra.mxu0 %v787
    %3085 = vmatprep.subr.mxu0 %v804
    %3086 = vmatpush1.msra.mxu0 %v803
    %3087 = vmatprep.subr.mxu0 %v820
    %3088 = vmatpush1.msra.mxu0 %v819
    %3089 = vmatprep.subr.mxu0 %v836
    %3090 = vmatpush1.msra.mxu0 %v835
    %3091 = vmatprep.subr.mxu0 %v852
    %3092 = vmatpush1.msra.mxu0 %v851
    %3093 = vmatprep.subr.mxu0 %v868
    %3094 = vmatpush1.msra.mxu0 %v867
    %3095 = vmatprep.subr.mxu0 %v884
    %3096 = vmatpush1.msra.mxu0 %v883
    %3097 = vmatprep.subr.mxu0 %v900
    %3098 = vmatpush1.msra.mxu0 %v899
    %3099 = vmatprep.subr.mxu0 %v916
    %3100 = vmatpush1.msra.mxu0 %v915
    %3101 = vmatprep.subr.mxu0 %v932
    %3102 = vmatpush1.msra.mxu0 %v931
    %3103 = vmatprep.subr.mxu0 %v948
    %3104 = vmatpush1.msra.mxu0 %v947
    %3105 = vmatprep.subr.mxu0 %v964
    %3106 = vmatpush1.msra.mxu0 %v963
    %3107 = vmatprep.subr.mxu0 %v980
    %3108 = vmatpush1.msra.mxu0 %v979
    %3109 = vmatprep.subr.mxu0 %v996
    %3110 = vmatpush1.msra.mxu0 %v995
    %3111 = vmatprep.subr.mxu0 %v1012
    %3112 = vmatpush1.msra.mxu0 %v1011
    %3113 = vmatprep.subr.mxu0 %v1028
    %3114 = vmatpush1.msra.mxu0 %v1027
    %3115 = vmatprep.subr.mxu0 %v1044
    %3116 = vmatpush1.msra.mxu0 %v1043
    %3117 = vmatprep.subr.mxu0 %v1060
    %3118 = vmatpush1.msra.mxu0 %v1059
    %3119 = vmatprep.subr.mxu0 %v1076
    %3120 = vmatpush1.msra.mxu0 %v1075
    %3121 = vmatprep.subr.mxu0 %v1092
    %3122 = vmatpush1.msra.mxu0 %v1091
    %3123 = vmatprep.subr.mxu0 %v1108
    %3124 = vmatpush1.msra.mxu0 %v1107
    %3125 = vmatprep.subr.mxu0 %v1124
    %3126 = vmatpush1.msra.mxu0 %v1123
    %3127 = vmatprep.subr.mxu0 %v1140
    %3128 = vmatpush1.msra.mxu0 %v1139
    %3129 = vmatprep.subr.mxu0 %v1156
    %3130 = vmatpush1.msra.mxu0 %v1155
    %3131 = vmatprep.subr.mxu0 %v1172
    %3132 = vmatpush1.msra.mxu0 %v1171
    %3133 = vmatprep.mubr.f32.mxu0 %v1705
    %3134 = vmatmul.mubr.f32.gmra.mrb[0].mxu0 %v1703
    %v3135 = vpop.f32.mrb[0].mxu0
    %v3136 = vadd.f32 %v3065, %v3135
    %v3137 = vpop.f32.mrb[0].mxu0
    %v3138 = vadd.f32 %v3067, %v3137
    %3139 = vdwg.mxu0
    %3140 = vmatprep.subr.mxu0 %v1188
    %3141 = vmatpush1.msra.mxu0 %v1187
    %3142 = vmatprep.subr.mxu0 %v1204
    %3143 = vmatpush1.msra.mxu0 %v1203
    %3144 = vmatprep.subr.mxu0 %v1220
    %3145 = vmatpush1.msra.mxu0 %v1219
    %3146 = vmatprep.subr.mxu0 %v1236
    %3147 = vmatpush1.msra.mxu0 %v1235
    %3148 = vmatprep.subr.mxu0 %v1252
    %3149 = vmatpush1.msra.mxu0 %v1251
    %3150 = vmatprep.subr.mxu0 %v1268
    %3151 = vmatpush1.msra.mxu0 %v1267
    %3152 = vmatprep.subr.mxu0 %v1284
    %3153 = vmatpush1.msra.mxu0 %v1283
    %3154 = vmatprep.subr.mxu0 %v1300
    %3155 = vmatpush1.msra.mxu0 %v1299
    %3156 = vmatprep.subr.mxu0 %v1316
    %3157 = vmatpush1.msra.mxu0 %v1315
    %3158 = vmatprep.subr.mxu0 %v1332
    %3159 = vmatpush1.msra.mxu0 %v1331
    %3160 = vmatprep.subr.mxu0 %v1348
    %3161 = vmatpush1.msra.mxu0 %v1347
    %3162 = vmatprep.subr.mxu0 %v1364
    %3163 = vmatpush1.msra.mxu0 %v1363
    %3164 = vmatprep.subr.mxu0 %v1380
    %3165 = vmatpush1.msra.mxu0 %v1379
    %3166 = vmatprep.subr.mxu0 %v1396
    %3167 = vmatpush1.msra.mxu0 %v1395
    %3168 = vmatprep.subr.mxu0 %v1412
    %3169 = vmatpush1.msra.mxu0 %v1411
    %3170 = vmatprep.subr.mxu0 %v1428
    %3171 = vmatpush1.msra.mxu0 %v1427
    %3172 = vmatprep.subr.mxu0 %v1444
    %3173 = vmatpush1.msra.mxu0 %v1443
    %3174 = vmatprep.subr.mxu0 %v1460
    %3175 = vmatpush1.msra.mxu0 %v1459
    %3176 = vmatprep.subr.mxu0 %v1476
    %3177 = vmatpush1.msra.mxu0 %v1475
    %3178 = vmatprep.subr.mxu0 %v1492
    %3179 = vmatpush1.msra.mxu0 %v1491
    %3180 = vmatprep.subr.mxu0 %v1508
    %3181 = vmatpush1.msra.mxu0 %v1507
    %3182 = vmatprep.subr.mxu0 %v1524
    %3183 = vmatpush1.msra.mxu0 %v1523
    %3184 = vmatprep.subr.mxu0 %v1540
    %3185 = vmatpush1.msra.mxu0 %v1539
    %3186 = vmatprep.subr.mxu0 %v1556
    %3187 = vmatpush1.msra.mxu0 %v1555
    %3188 = vmatprep.subr.mxu0 %v1572
    %3189 = vmatpush1.msra.mxu0 %v1571
    %3190 = vmatprep.subr.mxu0 %v1588
    %3191 = vmatpush1.msra.mxu0 %v1587
    %3192 = vmatprep.subr.mxu0 %v1604
    %3193 = vmatpush1.msra.mxu0 %v1603
    %3194 = vmatprep.subr.mxu0 %v1620
    %3195 = vmatpush1.msra.mxu0 %v1619
    %3196 = vmatprep.subr.mxu0 %v1636
    %3197 = vmatpush1.msra.mxu0 %v1635
    %3198 = vmatprep.subr.mxu0 %v1652
    %3199 = vmatpush1.msra.mxu0 %v1651
    %3200 = vmatprep.subr.mxu0 %v1668
    %3201 = vmatpush1.msra.mxu0 %v1667
    %3202 = vmatprep.subr.mxu0 %v1684
    %3203 = vmatpush1.msra.mxu0 %v1683
    %3204 = vmatprep.mubr.f32.mxu0 %v1713
    %3205 = vmatmul.mubr.f32.gmra.mrb[0].mxu0 %v1712
    %v3206 = vpop.f32.mrb[0].mxu0
    %v3207 = vadd.f32 %v3136, %v3206
    %v3208 = vpop.f32.mrb[0].mxu0
    %v3209 = vadd.f32 %v3138, %v3208
    %3210 = vdwg.mxu0
    %3211 = vmatprep.subr.mxu0 %v166
    %3212 = vmatpush1.msra.mxu0 %v165
    %3213 = vmatprep.subr.mxu0 %v182
    %3214 = vmatpush1.msra.mxu0 %v181
    %3215 = vmatprep.subr.mxu0 %v198
    %3216 = vmatpush1.msra.mxu0 %v197
    %3217 = vmatprep.subr.mxu0 %v214
    %3218 = vmatpush1.msra.mxu0 %v213
    %3219 = vmatprep.subr.mxu0 %v230
    %3220 = vmatpush1.msra.mxu0 %v229
    %3221 = vmatprep.subr.mxu0 %v246
    %3222 = vmatpush1.msra.mxu0 %v245
    %3223 = vmatprep.subr.mxu0 %v262
    %3224 = vmatpush1.msra.mxu0 %v261
    %3225 = vmatprep.subr.mxu0 %v278
    %3226 = vmatpush1.msra.mxu0 %v277
    %3227 = vmatprep.subr.mxu0 %v294
    %3228 = vmatpush1.msra.mxu0 %v293
    %3229 = vmatprep.subr.mxu0 %v310
    %3230 = vmatpush1.msra.mxu0 %v309
    %3231 = vmatprep.subr.mxu0 %v326
    %3232 = vmatpush1.msra.mxu0 %v325
    %3233 = vmatprep.subr.mxu0 %v342
    %3234 = vmatpush1.msra.mxu0 %v341
    %3235 = vmatprep.subr.mxu0 %v358
    %3236 = vmatpush1.msra.mxu0 %v357
    %3237 = vmatprep.subr.mxu0 %v374
    %3238 = vmatpush1.msra.mxu0 %v373
    %3239 = vmatprep.subr.mxu0 %v390
    %3240 = vmatpush1.msra.mxu0 %v389
    %3241 = vmatprep.subr.mxu0 %v406
    %3242 = vmatpush1.msra.mxu0 %v405
    %3243 = vmatprep.subr.mxu0 %v422
    %3244 = vmatpush1.msra.mxu0 %v421
    %3245 = vmatprep.subr.mxu0 %v438
    %3246 = vmatpush1.msra.mxu0 %v437
    %3247 = vmatprep.subr.mxu0 %v454
    %3248 = vmatpush1.msra.mxu0 %v453
    %3249 = vmatprep.subr.mxu0 %v470
    %3250 = vmatpush1.msra.mxu0 %v469
    %3251 = vmatprep.subr.mxu0 %v486
    %3252 = vmatpush1.msra.mxu0 %v485
    %3253 = vmatprep.subr.mxu0 %v502
    %3254 = vmatpush1.msra.mxu0 %v501
    %3255 = vmatprep.subr.mxu0 %v518
    %3256 = vmatpush1.msra.mxu0 %v517
    %3257 = vmatprep.subr.mxu0 %v534
    %3258 = vmatpush1.msra.mxu0 %v533
    %3259 = vmatprep.subr.mxu0 %v550
    %3260 = vmatpush1.msra.mxu0 %v549
    %3261 = vmatprep.subr.mxu0 %v566
    %3262 = vmatpush1.msra.mxu0 %v565
    %3263 = vmatprep.subr.mxu0 %v582
    %3264 = vmatpush1.msra.mxu0 %v581
    %3265 = vmatprep.subr.mxu0 %v598
    %3266 = vmatpush1.msra.mxu0 %v597
    %3267 = vmatprep.subr.mxu0 %v614
    %3268 = vmatpush1.msra.mxu0 %v613
    %3269 = vmatprep.subr.mxu0 %v630
    %3270 = vmatpush1.msra.mxu0 %v629
    %3271 = vmatprep.subr.mxu0 %v646
    %3272 = vmatpush1.msra.mxu0 %v645
    %3273 = vmatprep.subr.mxu0 %v662
    %3274 = vmatpush1.msra.mxu0 %v661
    %3275 = vmatprep.mubr.f32.mxu0 %v1704
    %3276 = vmatmul.mubr.f32.gmra.mrb[0].mxu0 %v1696
    %v3277 = vpop.f32.mrb[0].mxu0
    %v3278 = vadd.f32 0.0, %v3277
    %v3279 = vpop.f32.mrb[0].mxu0
    %v3280 = vadd.f32 0.0, %v3279
    %3281 = vdwg.mxu0
    %3282 = vmatprep.subr.mxu0 %v678
    %3283 = vmatpush1.msra.mxu0 %v677
    %3284 = vmatprep.subr.mxu0 %v694
    %3285 = vmatpush1.msra.mxu0 %v693
    %3286 = vmatprep.subr.mxu0 %v710
    %3287 = vmatpush1.msra.mxu0 %v709
    %3288 = vmatprep.subr.mxu0 %v726
    %3289 = vmatpush1.msra.mxu0 %v725
    %3290 = vmatprep.subr.mxu0 %v742
    %3291 = vmatpush1.msra.mxu0 %v741
    %3292 = vmatprep.subr.mxu0 %v758
    %3293 = vmatpush1.msra.mxu0 %v757
    %3294 = vmatprep.subr.mxu0 %v774
    %3295 = vmatpush1.msra.mxu0 %v773
    %3296 = vmatprep.subr.mxu0 %v790
    %3297 = vmatpush1.msra.mxu0 %v789
    %3298 = vmatprep.subr.mxu0 %v806
    %3299 = vmatpush1.msra.mxu0 %v805
    %3300 = vmatprep.subr.mxu0 %v822
    %3301 = vmatpush1.msra.mxu0 %v821
    %3302 = vmatprep.subr.mxu0 %v838
    %3303 = vmatpush1.msra.mxu0 %v837
    %3304 = vmatprep.subr.mxu0 %v854
    %3305 = vmatpush1.msra.mxu0 %v853
    %3306 = vmatprep.subr.mxu0 %v870
    %3307 = vmatpush1.msra.mxu0 %v869
    %3308 = vmatprep.subr.mxu0 %v886
    %3309 = vmatpush1.msra.mxu0 %v885
    %3310 = vmatprep.subr.mxu0 %v902
    %3311 = vmatpush1.msra.mxu0 %v901
    %3312 = vmatprep.subr.mxu0 %v918
    %3313 = vmatpush1.msra.mxu0 %v917
    %3314 = vmatprep.subr.mxu0 %v934
    %3315 = vmatpush1.msra.mxu0 %v933
    %3316 = vmatprep.subr.mxu0 %v950
    %3317 = vmatpush1.msra.mxu0 %v949
    %3318 = vmatprep.subr.mxu0 %v966
    %3319 = vmatpush1.msra.mxu0 %v965
    %3320 = vmatprep.subr.mxu0 %v982
    %3321 = vmatpush1.msra.mxu0 %v981
    %3322 = vmatprep.subr.mxu0 %v998
    %3323 = vmatpush1.msra.mxu0 %v997
    %3324 = vmatprep.subr.mxu0 %v1014
    %3325 = vmatpush1.msra.mxu0 %v1013
    %3326 = vmatprep.subr.mxu0 %v1030
    %3327 = vmatpush1.msra.mxu0 %v1029
    %3328 = vmatprep.subr.mxu0 %v1046
    %3329 = vmatpush1.msra.mxu0 %v1045
    %3330 = vmatprep.subr.mxu0 %v1062
    %3331 = vmatpush1.msra.mxu0 %v1061
    %3332 = vmatprep.subr.mxu0 %v1078
    %3333 = vmatpush1.msra.mxu0 %v1077
    %3334 = vmatprep.subr.mxu0 %v1094
    %3335 = vmatpush1.msra.mxu0 %v1093
    %3336 = vmatprep.subr.mxu0 %v1110
    %3337 = vmatpush1.msra.mxu0 %v1109
    %3338 = vmatprep.subr.mxu0 %v1126
    %3339 = vmatpush1.msra.mxu0 %v1125
    %3340 = vmatprep.subr.mxu0 %v1142
    %3341 = vmatpush1.msra.mxu0 %v1141
    %3342 = vmatprep.subr.mxu0 %v1158
    %3343 = vmatpush1.msra.mxu0 %v1157
    %3344 = vmatprep.subr.mxu0 %v1174
    %3345 = vmatpush1.msra.mxu0 %v1173
    %3346 = vmatprep.mubr.f32.mxu0 %v1705
    %3347 = vmatmul.mubr.f32.gmra.mrb[0].mxu0 %v1703
    %v3348 = vpop.f32.mrb[0].mxu0
    %v3349 = vadd.f32 %v3278, %v3348
    %v3350 = vpop.f32.mrb[0].mxu0
    %v3351 = vadd.f32 %v3280, %v3350
    %3352 = vdwg.mxu0
    %3353 = vmatprep.subr.mxu0 %v1190
    %3354 = vmatpush1.msra.mxu0 %v1189
    %3355 = vmatprep.subr.mxu0 %v1206
    %3356 = vmatpush1.msra.mxu0 %v1205
    %3357 = vmatprep.subr.mxu0 %v1222
    %3358 = vmatpush1.msra.mxu0 %v1221
    %3359 = vmatprep.subr.mxu0 %v1238
    %3360 = vmatpush1.msra.mxu0 %v1237
    %3361 = vmatprep.subr.mxu0 %v1254
    %3362 = vmatpush1.msra.mxu0 %v1253
    %3363 = vmatprep.subr.mxu0 %v1270
    %3364 = vmatpush1.msra.mxu0 %v1269
    %3365 = vmatprep.subr.mxu0 %v1286
    %3366 = vmatpush1.msra.mxu0 %v1285
    %3367 = vmatprep.subr.mxu0 %v1302
    %3368 = vmatpush1.msra.mxu0 %v1301
    %3369 = vmatprep.subr.mxu0 %v1318
    %3370 = vmatpush1.msra.mxu0 %v1317
    %3371 = vmatprep.subr.mxu0 %v1334
    %3372 = vmatpush1.msra.mxu0 %v1333
    %3373 = vmatprep.subr.mxu0 %v1350
    %3374 = vmatpush1.msra.mxu0 %v1349
    %3375 = vmatprep.subr.mxu0 %v1366
    %3376 = vmatpush1.msra.mxu0 %v1365
    %3377 = vmatprep.subr.mxu0 %v1382
    %3378 = vmatpush1.msra.mxu0 %v1381
    %3379 = vmatprep.subr.mxu0 %v1398
    %3380 = vmatpush1.msra.mxu0 %v1397
    %3381 = vmatprep.subr.mxu0 %v1414
    %3382 = vmatpush1.msra.mxu0 %v1413
    %3383 = vmatprep.subr.mxu0 %v1430
    %3384 = vmatpush1.msra.mxu0 %v1429
    %3385 = vmatprep.subr.mxu0 %v1446
    %3386 = vmatpush1.msra.mxu0 %v1445
    %3387 = vmatprep.subr.mxu0 %v1462
    %3388 = vmatpush1.msra.mxu0 %v1461
    %3389 = vmatprep.subr.mxu0 %v1478
    %3390 = vmatpush1.msra.mxu0 %v1477
    %3391 = vmatprep.subr.mxu0 %v1494
    %3392 = vmatpush1.msra.mxu0 %v1493
    %3393 = vmatprep.subr.mxu0 %v1510
    %3394 = vmatpush1.msra.mxu0 %v1509
    %3395 = vmatprep.subr.mxu0 %v1526
    %3396 = vmatpush1.msra.mxu0 %v1525
    %3397 = vmatprep.subr.mxu0 %v1542
    %3398 = vmatpush1.msra.mxu0 %v1541
    %3399 = vmatprep.subr.mxu0 %v1558
    %3400 = vmatpush1.msra.mxu0 %v1557
    %3401 = vmatprep.subr.mxu0 %v1574
    %3402 = vmatpush1.msra.mxu0 %v1573
    %3403 = vmatprep.subr.mxu0 %v1590
    %3404 = vmatpush1.msra.mxu0 %v1589
    %3405 = vmatprep.subr.mxu0 %v1606
    %3406 = vmatpush1.msra.mxu0 %v1605
    %3407 = vmatprep.subr.mxu0 %v1622
    %3408 = vmatpush1.msra.mxu0 %v1621
    %3409 = vmatprep.subr.mxu0 %v1638
    %3410 = vmatpush1.msra.mxu0 %v1637
    %3411 = vmatprep.subr.mxu0 %v1654
    %3412 = vmatpush1.msra.mxu0 %v1653
    %3413 = vmatprep.subr.mxu0 %v1670
    %3414 = vmatpush1.msra.mxu0 %v1669
    %3415 = vmatprep.subr.mxu0 %v1686
    %3416 = vmatpush1.msra.mxu0 %v1685
    %3417 = vmatprep.mubr.f32.mxu0 %v1713
    %3418 = vmatmul.mubr.f32.gmra.mrb[0].mxu0 %v1712
    %v3419 = vpop.f32.mrb[0].mxu0
    %v3420 = vadd.f32 %v3349, %v3419
    %v3421 = vpop.f32.mrb[0].mxu0
    %v3422 = vadd.f32 %v3351, %v3421
    %3423 = vdwg.mxu0
    %v3424 = vmax.f32 %v1929, %v2355
    %v3425 = vmax.f32 %v1931, %v2357
    %v3426 = vmax.f32 %v2142, %v2568
    %v3427 = vmax.f32 %v2144, %v2570
    %v3428 = vmax.f32 %v2781, %v3207
    %v3429 = vmax.f32 %v2783, %v3209
    %v3430 = vmax.f32 %v2994, %v3420
    %v3431 = vmax.f32 %v2996, %v3422
    %v3432 = vmax.f32 %v3424, %v3428
    %v3433 = vmax.f32 %v3425, %v3429
    %v3434 = vmax.f32 %v3426, %v3430
    %v3435 = vmax.f32 %v3427, %v3431
    %v3436 = vld [vmem:[#allocation5] sm:$0xf]
    %v3438 = vlaneseq
    %v3439 = vshrl.u32 %v3438, 7
    %v3440 = vsub.s32 0, %v3439
    %v3441 = vrot.slane %v3436, %v3440
    %v3442 = vlaneseq
    %v3443 = vshrl.u32 %v3442, 7
    %v3444 = vsub.s32 1, %v3443
    %v3445 = vrot.slane %v3436, %v3444
    %v3446 = vlaneseq
    %v3447 = vshrl.u32 %v3446, 7
    %v3448 = vsub.s32 2, %v3447
    %v3449 = vrot.slane %v3436, %v3448
    %v3450 = vlaneseq
    %v3451 = vshrl.u32 %v3450, 7
    %v3452 = vsub.s32 3, %v3451
    %v3453 = vrot.slane %v3436, %v3452
    %v3458 = vmul.f32 %v3432, %v3441
    %v3459 = vmul.f32 %v3433, %v3445
    %v3460 = vmul.f32 %v3434, %v3449
    %v3461 = vmul.f32 %v3435, %v3453
    %v3462 = vld [vmem:[#allocation7] sm:$0xf]
    %v3464 = vlaneseq
    %v3465 = vshrl.u32 %v3464, 7
    %v3466 = vsub.s32 0, %v3465
    %v3467 = vrot.slane %v3462, %v3466
    %v3468 = vlaneseq
    %v3469 = vshrl.u32 %v3468, 7
    %v3470 = vsub.s32 1, %v3469
    %v3471 = vrot.slane %v3462, %v3470
    %v3472 = vlaneseq
    %v3473 = vshrl.u32 %v3472, 7
    %v3474 = vsub.s32 2, %v3473
    %v3475 = vrot.slane %v3462, %v3474
    %v3476 = vlaneseq
    %v3477 = vshrl.u32 %v3476, 7
    %v3478 = vsub.s32 3, %v3477
    %v3479 = vrot.slane %v3462, %v3478
    %v3484 = vadd.f32 %v3458, %v3467
    %v3485 = vadd.f32 %v3459, %v3471
    %v3486 = vadd.f32 %v3460, %v3475
    %v3487 = vadd.f32 %v3461, %v3479
    %v3488 = vmax.f32 %v3484, 0.0
    %v3489 = vmax.f32 %v3485, 0.0
    %v3490 = vmax.f32 %v3486, 0.0
    %v3491 = vmax.f32 %v3487, 0.0
    %v3492 = vld [vmem:[#allocation8] sm:$0xff]
    %v3493 = vld [vmem:[#allocation8 + $0x8] sm:$0xff]
    %v3494 = vld [vmem:[#allocation8 + $0x10] sm:$0xff]
    %v3495 = vld [vmem:[#allocation8 + $0x18] sm:$0xff]
    %v3496 = vld [vmem:[#allocation8 + $0x20] sm:$0xff]
    %v3497 = vld [vmem:[#allocation8 + $0x28] sm:$0xff]
    %v3498 = vld [vmem:[#allocation8 + $0x30] sm:$0xff]
    %v3499 = vld [vmem:[#allocation8 + $0x38] sm:$0xff]
    %v3500 = vld [vmem:[#allocation8 + $0x40] sm:$0xff]
    %v3501 = vld [vmem:[#allocation8 + $0x48] sm:$0xff]
    %v3502 = vld [vmem:[#allocation8 + $0x50] sm:$0xff]
    %v3503 = vld [vmem:[#allocation8 + $0x58] sm:$0xff]
    %v3504 = vld [vmem:[#allocation8 + $0x60] sm:$0xff]
    %v3505 = vld [vmem:[#allocation8 + $0x68] sm:$0xff]
    %v3506 = vld [vmem:[#allocation8 + $0x70] sm:$0xff]
    %v3507 = vld [vmem:[#allocation8 + $0x78] sm:$0xff]
    %v3508 = vld [vmem:[#allocation8 + $0x80] sm:$0xff]
    %v3509 = vld [vmem:[#allocation8 + $0x88] sm:$0xff]
    %v3510 = vld [vmem:[#allocation8 + $0x90] sm:$0xff]
    %v3511 = vld [vmem:[#allocation8 + $0x98] sm:$0xff]
    %v3512 = vld [vmem:[#allocation8 + $0xa0] sm:$0xff]
    %v3513 = vld [vmem:[#allocation8 + $0xa8] sm:$0xff]
    %v3514 = vld [vmem:[#allocation8 + $0xb0] sm:$0xff]
    %v3515 = vld [vmem:[#allocation8 + $0xb8] sm:$0xff]
    %v3516 = vld [vmem:[#allocation8 + $0xc0] sm:$0xff]
    %v3517 = vld [vmem:[#allocation8 + $0xc8] sm:$0xff]
    %v3518 = vld [vmem:[#allocation8 + $0xd0] sm:$0xff]
    %v3519 = vld [vmem:[#allocation8 + $0xd8] sm:$0xff]
    %v3520 = vld [vmem:[#allocation8 + $0xe0] sm:$0xff]
    %v3521 = vld [vmem:[#allocation8 + $0xe8] sm:$0xff]
    %v3522 = vld [vmem:[#allocation8 + $0xf0] sm:$0xff]
    %v3523 = vld [vmem:[#allocation8 + $0xf8] sm:$0xff]
    %v3524 = vld [vmem:[#allocation8 + $0x100] sm:$0xff]
    %v3525 = vld [vmem:[#allocation8 + $0x108] sm:$0xff]
    %v3526 = vld [vmem:[#allocation8 + $0x110] sm:$0xff]
    %v3527 = vld [vmem:[#allocation8 + $0x118] sm:$0xff]
    %v3528 = vld [vmem:[#allocation8 + $0x120] sm:$0xff]
    %v3529 = vld [vmem:[#allocation8 + $0x128] sm:$0xff]
    %v3530 = vld [vmem:[#allocation8 + $0x130] sm:$0xff]
    %v3531 = vld [vmem:[#allocation8 + $0x138] sm:$0xff]
    %v3532 = vld [vmem:[#allocation8 + $0x140] sm:$0xff]
    %v3533 = vld [vmem:[#allocation8 + $0x148] sm:$0xff]
    %v3534 = vld [vmem:[#allocation8 + $0x150] sm:$0xff]
    %v3535 = vld [vmem:[#allocation8 + $0x158] sm:$0xff]
    %v3536 = vld [vmem:[#allocation8 + $0x160] sm:$0xff]
    %v3537 = vld [vmem:[#allocation8 + $0x168] sm:$0xff]
    %v3538 = vld [vmem:[#allocation8 + $0x170] sm:$0xff]
    %v3539 = vld [vmem:[#allocation8 + $0x178] sm:$0xff]
    %v3540 = vld [vmem:[#allocation8 + $0x180] sm:$0xff]
    %v3541 = vld [vmem:[#allocation8 + $0x188] sm:$0xff]
    %v3542 = vld [vmem:[#allocation8 + $0x190] sm:$0xff]
    %v3543 = vld [vmem:[#allocation8 + $0x198] sm:$0xff]
    %v3544 = vld [vmem:[#allocation8 + $0x1a0] sm:$0xff]
    %v3545 = vld [vmem:[#allocation8 + $0x1a8] sm:$0xff]
    %v3546 = vld [vmem:[#allocation8 + $0x1b0] sm:$0xff]
    %v3547 = vld [vmem:[#allocation8 + $0x1b8] sm:$0xff]
    %v3548 = vld [vmem:[#allocation8 + $0x1c0] sm:$0xff]
    %v3549 = vld [vmem:[#allocation8 + $0x1c8] sm:$0xff]
    %v3550 = vld [vmem:[#allocation8 + $0x1d0] sm:$0xff]
    %v3551 = vld [vmem:[#allocation8 + $0x1d8] sm:$0xff]
    %v3552 = vld [vmem:[#allocation8 + $0x1e0] sm:$0xff]
    %v3553 = vld [vmem:[#allocation8 + $0x1e8] sm:$0xff]
    %v3554 = vld [vmem:[#allocation8 + $0x1f0] sm:$0xff]
    %v3555 = vld [vmem:[#allocation8 + $0x1f8] sm:$0xff]
    %v3556 = vld [vmem:[#allocation8 + $0x200] sm:$0xff]
    %v3557 = vld [vmem:[#allocation8 + $0x208] sm:$0xff]
    %v3558 = vld [vmem:[#allocation8 + $0x210] sm:$0xff]
    %v3559 = vld [vmem:[#allocation8 + $0x218] sm:$0xff]
    %v3560 = vld [vmem:[#allocation8 + $0x220] sm:$0xff]
    %v3561 = vld [vmem:[#allocation8 + $0x228] sm:$0xff]
    %v3562 = vld [vmem:[#allocation8 + $0x230] sm:$0xff]
    %v3563 = vld [vmem:[#allocation8 + $0x238] sm:$0xff]
    %v3564 = vld [vmem:[#allocation8 + $0x240] sm:$0xff]
    %v3565 = vld [vmem:[#allocation8 + $0x248] sm:$0xff]
    %v3566 = vld [vmem:[#allocation8 + $0x250] sm:$0xff]
    %v3567 = vld [vmem:[#allocation8 + $0x258] sm:$0xff]
    %v3568 = vld [vmem:[#allocation8 + $0x260] sm:$0xff]
    %v3569 = vld [vmem:[#allocation8 + $0x268] sm:$0xff]
    %v3570 = vld [vmem:[#allocation8 + $0x270] sm:$0xff]
    %v3571 = vld [vmem:[#allocation8 + $0x278] sm:$0xff]
    %v3572 = vld [vmem:[#allocation8 + $0x280] sm:$0xff]
    %v3573 = vld [vmem:[#allocation8 + $0x288] sm:$0xff]
    %v3574 = vld [vmem:[#allocation8 + $0x290] sm:$0xff]
    %v3575 = vld [vmem:[#allocation8 + $0x298] sm:$0xff]
    %v3576 = vld [vmem:[#allocation8 + $0x2a0] sm:$0xff]
    %v3577 = vld [vmem:[#allocation8 + $0x2a8] sm:$0xff]
    %v3578 = vld [vmem:[#allocation8 + $0x2b0] sm:$0xff]
    %v3579 = vld [vmem:[#allocation8 + $0x2b8] sm:$0xff]
    %v3580 = vld [vmem:[#allocation8 + $0x2c0] sm:$0xff]
    %v3581 = vld [vmem:[#allocation8 + $0x2c8] sm:$0xff]
    %v3582 = vld [vmem:[#allocation8 + $0x2d0] sm:$0xff]
    %v3583 = vld [vmem:[#allocation8 + $0x2d8] sm:$0xff]
    %v3584 = vld [vmem:[#allocation8 + $0x2e0] sm:$0xff]
    %v3585 = vld [vmem:[#allocation8 + $0x2e8] sm:$0xff]
    %v3586 = vld [vmem:[#allocation8 + $0x2f0] sm:$0xff]
    %v3587 = vld [vmem:[#allocation8 + $0x2f8] sm:$0xff]
    %v3588 = vld [vmem:[#allocation8 + $0x300] sm:$0xff]
    %v3589 = vld [vmem:[#allocation8 + $0x308] sm:$0xff]
    %v3590 = vld [vmem:[#allocation8 + $0x310] sm:$0xff]
    %v3591 = vld [vmem:[#allocation8 + $0x318] sm:$0xff]
    %v3592 = vld [vmem:[#allocation8 + $0x320] sm:$0xff]
    %v3593 = vld [vmem:[#allocation8 + $0x328] sm:$0xff]
    %v3594 = vld [vmem:[#allocation8 + $0x330] sm:$0xff]
    %v3595 = vld [vmem:[#allocation8 + $0x338] sm:$0xff]
    %v3596 = vld [vmem:[#allocation8 + $0x340] sm:$0xff]
    %v3597 = vld [vmem:[#allocation8 + $0x348] sm:$0xff]
    %v3598 = vld [vmem:[#allocation8 + $0x350] sm:$0xff]
    %v3599 = vld [vmem:[#allocation8 + $0x358] sm:$0xff]
    %v3600 = vld [vmem:[#allocation8 + $0x360] sm:$0xff]
    %v3601 = vld [vmem:[#allocation8 + $0x368] sm:$0xff]
    %v3602 = vld [vmem:[#allocation8 + $0x370] sm:$0xff]
    %v3603 = vld [vmem:[#allocation8 + $0x378] sm:$0xff]
    %v3604 = vld [vmem:[#allocation8 + $0x380] sm:$0xff]
    %v3605 = vld [vmem:[#allocation8 + $0x388] sm:$0xff]
    %v3606 = vld [vmem:[#allocation8 + $0x390] sm:$0xff]
    %v3607 = vld [vmem:[#allocation8 + $0x398] sm:$0xff]
    %v3608 = vld [vmem:[#allocation8 + $0x3a0] sm:$0xff]
    %v3609 = vld [vmem:[#allocation8 + $0x3a8] sm:$0xff]
    %v3610 = vld [vmem:[#allocation8 + $0x3b0] sm:$0xff]
    %v3611 = vld [vmem:[#allocation8 + $0x3b8] sm:$0xff]
    %v3612 = vld [vmem:[#allocation8 + $0x3c0] sm:$0xff]
    %v3613 = vld [vmem:[#allocation8 + $0x3c8] sm:$0xff]
    %v3614 = vld [vmem:[#allocation8 + $0x3d0] sm:$0xff]
    %v3615 = vld [vmem:[#allocation8 + $0x3d8] sm:$0xff]
    %v3616 = vld [vmem:[#allocation8 + $0x3e0] sm:$0xff]
    %v3617 = vld [vmem:[#allocation8 + $0x3e8] sm:$0xff]
    %v3618 = vld [vmem:[#allocation8 + $0x3f0] sm:$0xff]
    %v3619 = vld [vmem:[#allocation8 + $0x3f8] sm:$0xff]
    %v3620 = vld [vmem:[#allocation8 + $0x400] sm:$0xff]
    %v3621 = vld [vmem:[#allocation8 + $0x408] sm:$0xff]
    %v3622 = vld [vmem:[#allocation8 + $0x410] sm:$0xff]
    %v3623 = vld [vmem:[#allocation8 + $0x418] sm:$0xff]
    %v3624 = vld [vmem:[#allocation8 + $0x420] sm:$0xff]
    %v3625 = vld [vmem:[#allocation8 + $0x428] sm:$0xff]
    %v3626 = vld [vmem:[#allocation8 + $0x430] sm:$0xff]
    %v3627 = vld [vmem:[#allocation8 + $0x438] sm:$0xff]
    %v3628 = vld [vmem:[#allocation8 + $0x440] sm:$0xff]
    %v3629 = vld [vmem:[#allocation8 + $0x448] sm:$0xff]
    %v3630 = vld [vmem:[#allocation8 + $0x450] sm:$0xff]
    %v3631 = vld [vmem:[#allocation8 + $0x458] sm:$0xff]
    %v3632 = vld [vmem:[#allocation8 + $0x460] sm:$0xff]
    %v3633 = vld [vmem:[#allocation8 + $0x468] sm:$0xff]
    %v3634 = vld [vmem:[#allocation8 + $0x470] sm:$0xff]
    %v3635 = vld [vmem:[#allocation8 + $0x478] sm:$0xff]
    %v3636 = vld [vmem:[#allocation8 + $0x480] sm:$0xff]
    %v3637 = vld [vmem:[#allocation8 + $0x488] sm:$0xff]
    %v3638 = vld [vmem:[#allocation8 + $0x490] sm:$0xff]
    %v3639 = vld [vmem:[#allocation8 + $0x498] sm:$0xff]
    %v3640 = vld [vmem:[#allocation8 + $0x4a0] sm:$0xff]
    %v3641 = vld [vmem:[#allocation8 + $0x4a8] sm:$0xff]
    %v3642 = vld [vmem:[#allocation8 + $0x4b0] sm:$0xff]
    %v3643 = vld [vmem:[#allocation8 + $0x4b8] sm:$0xff]
    %v3644 = vld [vmem:[#allocation8 + $0x4c0] sm:$0xff]
    %v3645 = vld [vmem:[#allocation8 + $0x4c8] sm:$0xff]
    %v3646 = vld [vmem:[#allocation8 + $0x4d0] sm:$0xff]
    %v3647 = vld [vmem:[#allocation8 + $0x4d8] sm:$0xff]
    %v3648 = vld [vmem:[#allocation8 + $0x4e0] sm:$0xff]
    %v3649 = vld [vmem:[#allocation8 + $0x4e8] sm:$0xff]
    %v3650 = vld [vmem:[#allocation8 + $0x4f0] sm:$0xff]
    %v3651 = vld [vmem:[#allocation8 + $0x4f8] sm:$0xff]
    %v3652 = vld [vmem:[#allocation8 + $0x500] sm:$0xff]
    %v3653 = vld [vmem:[#allocation8 + $0x508] sm:$0xff]
    %v3654 = vld [vmem:[#allocation8 + $0x510] sm:$0xff]
    %v3655 = vld [vmem:[#allocation8 + $0x518] sm:$0xff]
    %v3656 = vld [vmem:[#allocation8 + $0x520] sm:$0xff]
    %v3657 = vld [vmem:[#allocation8 + $0x528] sm:$0xff]
    %v3658 = vld [vmem:[#allocation8 + $0x530] sm:$0xff]
    %v3659 = vld [vmem:[#allocation8 + $0x538] sm:$0xff]
    %v3660 = vld [vmem:[#allocation8 + $0x540] sm:$0xff]
    %v3661 = vld [vmem:[#allocation8 + $0x548] sm:$0xff]
    %v3662 = vld [vmem:[#allocation8 + $0x550] sm:$0xff]
    %v3663 = vld [vmem:[#allocation8 + $0x558] sm:$0xff]
    %v3664 = vld [vmem:[#allocation8 + $0x560] sm:$0xff]
    %v3665 = vld [vmem:[#allocation8 + $0x568] sm:$0xff]
    %v3666 = vld [vmem:[#allocation8 + $0x570] sm:$0xff]
    %v3667 = vld [vmem:[#allocation8 + $0x578] sm:$0xff]
    %v3668 = vld [vmem:[#allocation8 + $0x580] sm:$0xff]
    %v3669 = vld [vmem:[#allocation8 + $0x588] sm:$0xff]
    %v3670 = vld [vmem:[#allocation8 + $0x590] sm:$0xff]
    %v3671 = vld [vmem:[#allocation8 + $0x598] sm:$0xff]
    %v3672 = vld [vmem:[#allocation8 + $0x5a0] sm:$0xff]
    %v3673 = vld [vmem:[#allocation8 + $0x5a8] sm:$0xff]
    %v3674 = vld [vmem:[#allocation8 + $0x5b0] sm:$0xff]
    %v3675 = vld [vmem:[#allocation8 + $0x5b8] sm:$0xff]
    %v3676 = vld [vmem:[#allocation8 + $0x5c0] sm:$0xff]
    %v3677 = vld [vmem:[#allocation8 + $0x5c8] sm:$0xff]
    %v3678 = vld [vmem:[#allocation8 + $0x5d0] sm:$0xff]
    %v3679 = vld [vmem:[#allocation8 + $0x5d8] sm:$0xff]
    %v3680 = vld [vmem:[#allocation8 + $0x5e0] sm:$0xff]
    %v3681 = vld [vmem:[#allocation8 + $0x5e8] sm:$0xff]
    %v3682 = vld [vmem:[#allocation8 + $0x5f0] sm:$0xff]
    %v3683 = vld [vmem:[#allocation8 + $0x5f8] sm:$0xff]
    %v3684 = vld [vmem:[#allocation8 + $0x600] sm:$0xff]
    %v3685 = vld [vmem:[#allocation8 + $0x608] sm:$0xff]
    %v3686 = vld [vmem:[#allocation8 + $0x610] sm:$0xff]
    %v3687 = vld [vmem:[#allocation8 + $0x618] sm:$0xff]
    %v3688 = vld [vmem:[#allocation8 + $0x620] sm:$0xff]
    %v3689 = vld [vmem:[#allocation8 + $0x628] sm:$0xff]
    %v3690 = vld [vmem:[#allocation8 + $0x630] sm:$0xff]
    %v3691 = vld [vmem:[#allocation8 + $0x638] sm:$0xff]
    %v3692 = vld [vmem:[#allocation8 + $0x640] sm:$0xff]
    %v3693 = vld [vmem:[#allocation8 + $0x648] sm:$0xff]
    %v3694 = vld [vmem:[#allocation8 + $0x650] sm:$0xff]
    %v3695 = vld [vmem:[#allocation8 + $0x658] sm:$0xff]
    %v3696 = vld [vmem:[#allocation8 + $0x660] sm:$0xff]
    %v3697 = vld [vmem:[#allocation8 + $0x668] sm:$0xff]
    %v3698 = vld [vmem:[#allocation8 + $0x670] sm:$0xff]
    %v3699 = vld [vmem:[#allocation8 + $0x678] sm:$0xff]
    %v3700 = vld [vmem:[#allocation8 + $0x680] sm:$0xff]
    %v3701 = vld [vmem:[#allocation8 + $0x688] sm:$0xff]
    %v3702 = vld [vmem:[#allocation8 + $0x690] sm:$0xff]
    %v3703 = vld [vmem:[#allocation8 + $0x698] sm:$0xff]
    %v3704 = vld [vmem:[#allocation8 + $0x6a0] sm:$0xff]
    %v3705 = vld [vmem:[#allocation8 + $0x6a8] sm:$0xff]
    %v3706 = vld [vmem:[#allocation8 + $0x6b0] sm:$0xff]
    %v3707 = vld [vmem:[#allocation8 + $0x6b8] sm:$0xff]
    %v3708 = vld [vmem:[#allocation8 + $0x6c0] sm:$0xff]
    %v3709 = vld [vmem:[#allocation8 + $0x6c8] sm:$0xff]
    %v3710 = vld [vmem:[#allocation8 + $0x6d0] sm:$0xff]
    %v3711 = vld [vmem:[#allocation8 + $0x6d8] sm:$0xff]
    %v3712 = vld [vmem:[#allocation8 + $0x6e0] sm:$0xff]
    %v3713 = vld [vmem:[#allocation8 + $0x6e8] sm:$0xff]
    %v3714 = vld [vmem:[#allocation8 + $0x6f0] sm:$0xff]
    %v3715 = vld [vmem:[#allocation8 + $0x6f8] sm:$0xff]
    %v3716 = vld [vmem:[#allocation8 + $0x700] sm:$0xff]
    %v3717 = vld [vmem:[#allocation8 + $0x708] sm:$0xff]
    %v3718 = vld [vmem:[#allocation8 + $0x710] sm:$0xff]
    %v3719 = vld [vmem:[#allocation8 + $0x718] sm:$0xff]
    %v3720 = vld [vmem:[#allocation8 + $0x720] sm:$0xff]
    %v3721 = vld [vmem:[#allocation8 + $0x728] sm:$0xff]
    %v3722 = vld [vmem:[#allocation8 + $0x730] sm:$0xff]
    %v3723 = vld [vmem:[#allocation8 + $0x738] sm:$0xff]
    %v3724 = vld [vmem:[#allocation8 + $0x740] sm:$0xff]
    %v3725 = vld [vmem:[#allocation8 + $0x748] sm:$0xff]
    %v3726 = vld [vmem:[#allocation8 + $0x750] sm:$0xff]
    %v3727 = vld [vmem:[#allocation8 + $0x758] sm:$0xff]
    %v3728 = vld [vmem:[#allocation8 + $0x760] sm:$0xff]
    %v3729 = vld [vmem:[#allocation8 + $0x768] sm:$0xff]
    %v3730 = vld [vmem:[#allocation8 + $0x770] sm:$0xff]
    %v3731 = vld [vmem:[#allocation8 + $0x778] sm:$0xff]
    %v3732 = vld [vmem:[#allocation8 + $0x780] sm:$0xff]
    %v3733 = vld [vmem:[#allocation8 + $0x788] sm:$0xff]
    %v3734 = vld [vmem:[#allocation8 + $0x790] sm:$0xff]
    %v3735 = vld [vmem:[#allocation8 + $0x798] sm:$0xff]
    %v3736 = vld [vmem:[#allocation8 + $0x7a0] sm:$0xff]
    %v3737 = vld [vmem:[#allocation8 + $0x7a8] sm:$0xff]
    %v3738 = vld [vmem:[#allocation8 + $0x7b0] sm:$0xff]
    %v3739 = vld [vmem:[#allocation8 + $0x7b8] sm:$0xff]
    %v3740 = vld [vmem:[#allocation8 + $0x7c0] sm:$0xff]
    %v3741 = vld [vmem:[#allocation8 + $0x7c8] sm:$0xff]
    %v3742 = vld [vmem:[#allocation8 + $0x7d0] sm:$0xff]
    %v3743 = vld [vmem:[#allocation8 + $0x7d8] sm:$0xff]
    %v3744 = vld [vmem:[#allocation8 + $0x7e0] sm:$0xff]
    %v3745 = vld [vmem:[#allocation8 + $0x7e8] sm:$0xff]
    %v3746 = vld [vmem:[#allocation8 + $0x7f0] sm:$0xff]
    %v3747 = vld [vmem:[#allocation8 + $0x7f8] sm:$0xff]
    %v3748 = vld [vmem:[#allocation8 + $0x800] sm:$0xff]
    %v3749 = vld [vmem:[#allocation8 + $0x808] sm:$0xff]
    %v3750 = vld [vmem:[#allocation8 + $0x810] sm:$0xff]
    %v3751 = vld [vmem:[#allocation8 + $0x818] sm:$0xff]
    %v3752 = vld [vmem:[#allocation8 + $0x820] sm:$0xff]
    %v3753 = vld [vmem:[#allocation8 + $0x828] sm:$0xff]
    %v3754 = vld [vmem:[#allocation8 + $0x830] sm:$0xff]
    %v3755 = vld [vmem:[#allocation8 + $0x838] sm:$0xff]
    %v3756 = vld [vmem:[#allocation8 + $0x840] sm:$0xff]
    %v3757 = vld [vmem:[#allocation8 + $0x848] sm:$0xff]
    %v3758 = vld [vmem:[#allocation8 + $0x850] sm:$0xff]
    %v3759 = vld [vmem:[#allocation8 + $0x858] sm:$0xff]
    %v3760 = vld [vmem:[#allocation8 + $0x860] sm:$0xff]
    %v3761 = vld [vmem:[#allocation8 + $0x868] sm:$0xff]
    %v3762 = vld [vmem:[#allocation8 + $0x870] sm:$0xff]
    %v3763 = vld [vmem:[#allocation8 + $0x878] sm:$0xff]
    %v3764 = vld [vmem:[#allocation8 + $0x880] sm:$0xff]
    %v3765 = vld [vmem:[#allocation8 + $0x888] sm:$0xff]
    %v3766 = vld [vmem:[#allocation8 + $0x890] sm:$0xff]
    %v3767 = vld [vmem:[#allocation8 + $0x898] sm:$0xff]
    %v3768 = vld [vmem:[#allocation8 + $0x8a0] sm:$0xff]
    %v3769 = vld [vmem:[#allocation8 + $0x8a8] sm:$0xff]
    %v3770 = vld [vmem:[#allocation8 + $0x8b0] sm:$0xff]
    %v3771 = vld [vmem:[#allocation8 + $0x8b8] sm:$0xff]
    %v3772 = vld [vmem:[#allocation8 + $0x8c0] sm:$0xff]
    %v3773 = vld [vmem:[#allocation8 + $0x8c8] sm:$0xff]
    %v3774 = vld [vmem:[#allocation8 + $0x8d0] sm:$0xff]
    %v3775 = vld [vmem:[#allocation8 + $0x8d8] sm:$0xff]
    %v3776 = vld [vmem:[#allocation8 + $0x8e0] sm:$0xff]
    %v3777 = vld [vmem:[#allocation8 + $0x8e8] sm:$0xff]
    %v3778 = vld [vmem:[#allocation8 + $0x8f0] sm:$0xff]
    %v3779 = vld [vmem:[#allocation8 + $0x8f8] sm:$0xff]
    %v3780 = vld [vmem:[#allocation8 + $0x900] sm:$0xff]
    %v3781 = vld [vmem:[#allocation8 + $0x908] sm:$0xff]
    %v3782 = vld [vmem:[#allocation8 + $0x910] sm:$0xff]
    %v3783 = vld [vmem:[#allocation8 + $0x918] sm:$0xff]
    %v3784 = vld [vmem:[#allocation8 + $0x920] sm:$0xff]
    %v3785 = vld [vmem:[#allocation8 + $0x928] sm:$0xff]
    %v3786 = vld [vmem:[#allocation8 + $0x930] sm:$0xff]
    %v3787 = vld [vmem:[#allocation8 + $0x938] sm:$0xff]
    %v3788 = vld [vmem:[#allocation8 + $0x940] sm:$0xff]
    %v3789 = vld [vmem:[#allocation8 + $0x948] sm:$0xff]
    %v3790 = vld [vmem:[#allocation8 + $0x950] sm:$0xff]
    %v3791 = vld [vmem:[#allocation8 + $0x958] sm:$0xff]
    %v3792 = vld [vmem:[#allocation8 + $0x960] sm:$0xff]
    %v3793 = vld [vmem:[#allocation8 + $0x968] sm:$0xff]
    %v3794 = vld [vmem:[#allocation8 + $0x970] sm:$0xff]
    %v3795 = vld [vmem:[#allocation8 + $0x978] sm:$0xff]
    %v3796 = vld [vmem:[#allocation8 + $0x980] sm:$0xff]
    %v3797 = vld [vmem:[#allocation8 + $0x988] sm:$0xff]
    %v3798 = vld [vmem:[#allocation8 + $0x990] sm:$0xff]
    %v3799 = vld [vmem:[#allocation8 + $0x998] sm:$0xff]
    %v3800 = vld [vmem:[#allocation8 + $0x9a0] sm:$0xff]
    %v3801 = vld [vmem:[#allocation8 + $0x9a8] sm:$0xff]
    %v3802 = vld [vmem:[#allocation8 + $0x9b0] sm:$0xff]
    %v3803 = vld [vmem:[#allocation8 + $0x9b8] sm:$0xff]
    %v3804 = vld [vmem:[#allocation8 + $0x9c0] sm:$0xff]
    %v3805 = vld [vmem:[#allocation8 + $0x9c8] sm:$0xff]
    %v3806 = vld [vmem:[#allocation8 + $0x9d0] sm:$0xff]
    %v3807 = vld [vmem:[#allocation8 + $0x9d8] sm:$0xff]
    %v3808 = vld [vmem:[#allocation8 + $0x9e0] sm:$0xff]
    %v3809 = vld [vmem:[#allocation8 + $0x9e8] sm:$0xff]
    %v3810 = vld [vmem:[#allocation8 + $0x9f0] sm:$0xff]
    %v3811 = vld [vmem:[#allocation8 + $0x9f8] sm:$0xff]
    %v3812 = vld [vmem:[#allocation8 + $0xa00] sm:$0xff]
    %v3813 = vld [vmem:[#allocation8 + $0xa08] sm:$0xff]
    %v3814 = vld [vmem:[#allocation8 + $0xa10] sm:$0xff]
    %v3815 = vld [vmem:[#allocation8 + $0xa18] sm:$0xff]
    %v3816 = vld [vmem:[#allocation8 + $0xa20] sm:$0xff]
    %v3817 = vld [vmem:[#allocation8 + $0xa28] sm:$0xff]
    %v3818 = vld [vmem:[#allocation8 + $0xa30] sm:$0xff]
    %v3819 = vld [vmem:[#allocation8 + $0xa38] sm:$0xff]
    %v3820 = vld [vmem:[#allocation8 + $0xa40] sm:$0xff]
    %v3821 = vld [vmem:[#allocation8 + $0xa48] sm:$0xff]
    %v3822 = vld [vmem:[#allocation8 + $0xa50] sm:$0xff]
    %v3823 = vld [vmem:[#allocation8 + $0xa58] sm:$0xff]
    %v3824 = vld [vmem:[#allocation8 + $0xa60] sm:$0xff]
    %v3825 = vld [vmem:[#allocation8 + $0xa68] sm:$0xff]
    %v3826 = vld [vmem:[#allocation8 + $0xa70] sm:$0xff]
    %v3827 = vld [vmem:[#allocation8 + $0xa78] sm:$0xff]
    %v3828 = vld [vmem:[#allocation8 + $0xa80] sm:$0xff]
    %v3829 = vld [vmem:[#allocation8 + $0xa88] sm:$0xff]
    %v3830 = vld [vmem:[#allocation8 + $0xa90] sm:$0xff]
    %v3831 = vld [vmem:[#allocation8 + $0xa98] sm:$0xff]
    %v3832 = vld [vmem:[#allocation8 + $0xaa0] sm:$0xff]
    %v3833 = vld [vmem:[#allocation8 + $0xaa8] sm:$0xff]
    %v3834 = vld [vmem:[#allocation8 + $0xab0] sm:$0xff]
    %v3835 = vld [vmem:[#allocation8 + $0xab8] sm:$0xff]
    %v3836 = vld [vmem:[#allocation8 + $0xac0] sm:$0xff]
    %v3837 = vld [vmem:[#allocation8 + $0xac8] sm:$0xff]
    %v3838 = vld [vmem:[#allocation8 + $0xad0] sm:$0xff]
    %v3839 = vld [vmem:[#allocation8 + $0xad8] sm:$0xff]
    %v3840 = vld [vmem:[#allocation8 + $0xae0] sm:$0xff]
    %v3841 = vld [vmem:[#allocation8 + $0xae8] sm:$0xff]
    %v3842 = vld [vmem:[#allocation8 + $0xaf0] sm:$0xff]
    %v3843 = vld [vmem:[#allocation8 + $0xaf8] sm:$0xff]
    %v3844 = vld [vmem:[#allocation8 + $0xb00] sm:$0xff]
    %v3845 = vld [vmem:[#allocation8 + $0xb08] sm:$0xff]
    %v3846 = vld [vmem:[#allocation8 + $0xb10] sm:$0xff]
    %v3847 = vld [vmem:[#allocation8 + $0xb18] sm:$0xff]
    %v3848 = vld [vmem:[#allocation8 + $0xb20] sm:$0xff]
    %v3849 = vld [vmem:[#allocation8 + $0xb28] sm:$0xff]
    %v3850 = vld [vmem:[#allocation8 + $0xb30] sm:$0xff]
    %v3851 = vld [vmem:[#allocation8 + $0xb38] sm:$0xff]
    %v3852 = vld [vmem:[#allocation8 + $0xb40] sm:$0xff]
    %v3853 = vld [vmem:[#allocation8 + $0xb48] sm:$0xff]
    %v3854 = vld [vmem:[#allocation8 + $0xb50] sm:$0xff]
    %v3855 = vld [vmem:[#allocation8 + $0xb58] sm:$0xff]
    %v3856 = vld [vmem:[#allocation8 + $0xb60] sm:$0xff]
    %v3857 = vld [vmem:[#allocation8 + $0xb68] sm:$0xff]
    %v3858 = vld [vmem:[#allocation8 + $0xb70] sm:$0xff]
    %v3859 = vld [vmem:[#allocation8 + $0xb78] sm:$0xff]
    %v3860 = vld [vmem:[#allocation8 + $0xb80] sm:$0xff]
    %v3861 = vld [vmem:[#allocation8 + $0xb88] sm:$0xff]
    %v3862 = vld [vmem:[#allocation8 + $0xb90] sm:$0xff]
    %v3863 = vld [vmem:[#allocation8 + $0xb98] sm:$0xff]
    %v3864 = vld [vmem:[#allocation8 + $0xba0] sm:$0xff]
    %v3865 = vld [vmem:[#allocation8 + $0xba8] sm:$0xff]
    %v3866 = vld [vmem:[#allocation8 + $0xbb0] sm:$0xff]
    %v3867 = vld [vmem:[#allocation8 + $0xbb8] sm:$0xff]
    %v3868 = vld [vmem:[#allocation8 + $0xbc0] sm:$0xff]
    %v3869 = vld [vmem:[#allocation8 + $0xbc8] sm:$0xff]
    %v3870 = vld [vmem:[#allocation8 + $0xbd0] sm:$0xff]
    %v3871 = vld [vmem:[#allocation8 + $0xbd8] sm:$0xff]
    %v3872 = vld [vmem:[#allocation8 + $0xbe0] sm:$0xff]
    %v3873 = vld [vmem:[#allocation8 + $0xbe8] sm:$0xff]
    %v3874 = vld [vmem:[#allocation8 + $0xbf0] sm:$0xff]
    %v3875 = vld [vmem:[#allocation8 + $0xbf8] sm:$0xff]
    %v3876 = vld [vmem:[#allocation8 + $0xc00] sm:$0xff]
    %v3877 = vld [vmem:[#allocation8 + $0xc08] sm:$0xff]
    %v3878 = vld [vmem:[#allocation8 + $0xc10] sm:$0xff]
    %v3879 = vld [vmem:[#allocation8 + $0xc18] sm:$0xff]
    %v3880 = vld [vmem:[#allocation8 + $0xc20] sm:$0xff]
    %v3881 = vld [vmem:[#allocation8 + $0xc28] sm:$0xff]
    %v3882 = vld [vmem:[#allocation8 + $0xc30] sm:$0xff]
    %v3883 = vld [vmem:[#allocation8 + $0xc38] sm:$0xff]
    %v3884 = vld [vmem:[#allocation8 + $0xc40] sm:$0xff]
    %v3885 = vld [vmem:[#allocation8 + $0xc48] sm:$0xff]
    %v3886 = vld [vmem:[#allocation8 + $0xc50] sm:$0xff]
    %v3887 = vld [vmem:[#allocation8 + $0xc58] sm:$0xff]
    %v3888 = vld [vmem:[#allocation8 + $0xc60] sm:$0xff]
    %v3889 = vld [vmem:[#allocation8 + $0xc68] sm:$0xff]
    %v3890 = vld [vmem:[#allocation8 + $0xc70] sm:$0xff]
    %v3891 = vld [vmem:[#allocation8 + $0xc78] sm:$0xff]
    %v3892 = vld [vmem:[#allocation8 + $0xc80] sm:$0xff]
    %v3893 = vld [vmem:[#allocation8 + $0xc88] sm:$0xff]
    %v3894 = vld [vmem:[#allocation8 + $0xc90] sm:$0xff]
    %v3895 = vld [vmem:[#allocation8 + $0xc98] sm:$0xff]
    %v3896 = vld [vmem:[#allocation8 + $0xca0] sm:$0xff]
    %v3897 = vld [vmem:[#allocation8 + $0xca8] sm:$0xff]
    %v3898 = vld [vmem:[#allocation8 + $0xcb0] sm:$0xff]
    %v3899 = vld [vmem:[#allocation8 + $0xcb8] sm:$0xff]
    %v3900 = vld [vmem:[#allocation8 + $0xcc0] sm:$0xff]
    %v3901 = vld [vmem:[#allocation8 + $0xcc8] sm:$0xff]
    %v3902 = vld [vmem:[#allocation8 + $0xcd0] sm:$0xff]
    %v3903 = vld [vmem:[#allocation8 + $0xcd8] sm:$0xff]
    %v3904 = vld [vmem:[#allocation8 + $0xce0] sm:$0xff]
    %v3905 = vld [vmem:[#allocation8 + $0xce8] sm:$0xff]
    %v3906 = vld [vmem:[#allocation8 + $0xcf0] sm:$0xff]
    %v3907 = vld [vmem:[#allocation8 + $0xcf8] sm:$0xff]
    %v3908 = vld [vmem:[#allocation8 + $0xd00] sm:$0xff]
    %v3909 = vld [vmem:[#allocation8 + $0xd08] sm:$0xff]
    %v3910 = vld [vmem:[#allocation8 + $0xd10] sm:$0xff]
    %v3911 = vld [vmem:[#allocation8 + $0xd18] sm:$0xff]
    %v3912 = vld [vmem:[#allocation8 + $0xd20] sm:$0xff]
    %v3913 = vld [vmem:[#allocation8 + $0xd28] sm:$0xff]
    %v3914 = vld [vmem:[#allocation8 + $0xd30] sm:$0xff]
    %v3915 = vld [vmem:[#allocation8 + $0xd38] sm:$0xff]
    %v3916 = vld [vmem:[#allocation8 + $0xd40] sm:$0xff]
    %v3917 = vld [vmem:[#allocation8 + $0xd48] sm:$0xff]
    %v3918 = vld [vmem:[#allocation8 + $0xd50] sm:$0xff]
    %v3919 = vld [vmem:[#allocation8 + $0xd58] sm:$0xff]
    %v3920 = vld [vmem:[#allocation8 + $0xd60] sm:$0xff]
    %v3921 = vld [vmem:[#allocation8 + $0xd68] sm:$0xff]
    %v3922 = vld [vmem:[#allocation8 + $0xd70] sm:$0xff]
    %v3923 = vld [vmem:[#allocation8 + $0xd78] sm:$0xff]
    %v3924 = vld [vmem:[#allocation8 + $0xd80] sm:$0xff]
    %v3925 = vld [vmem:[#allocation8 + $0xd88] sm:$0xff]
    %v3926 = vld [vmem:[#allocation8 + $0xd90] sm:$0xff]
    %v3927 = vld [vmem:[#allocation8 + $0xd98] sm:$0xff]
    %v3928 = vld [vmem:[#allocation8 + $0xda0] sm:$0xff]
    %v3929 = vld [vmem:[#allocation8 + $0xda8] sm:$0xff]
    %v3930 = vld [vmem:[#allocation8 + $0xdb0] sm:$0xff]
    %v3931 = vld [vmem:[#allocation8 + $0xdb8] sm:$0xff]
    %v3932 = vld [vmem:[#allocation8 + $0xdc0] sm:$0xff]
    %v3933 = vld [vmem:[#allocation8 + $0xdc8] sm:$0xff]
    %v3934 = vld [vmem:[#allocation8 + $0xdd0] sm:$0xff]
    %v3935 = vld [vmem:[#allocation8 + $0xdd8] sm:$0xff]
    %v3936 = vld [vmem:[#allocation8 + $0xde0] sm:$0xff]
    %v3937 = vld [vmem:[#allocation8 + $0xde8] sm:$0xff]
    %v3938 = vld [vmem:[#allocation8 + $0xdf0] sm:$0xff]
    %v3939 = vld [vmem:[#allocation8 + $0xdf8] sm:$0xff]
    %v3940 = vld [vmem:[#allocation8 + $0xe00] sm:$0xff]
    %v3941 = vld [vmem:[#allocation8 + $0xe08] sm:$0xff]
    %v3942 = vld [vmem:[#allocation8 + $0xe10] sm:$0xff]
    %v3943 = vld [vmem:[#allocation8 + $0xe18] sm:$0xff]
    %v3944 = vld [vmem:[#allocation8 + $0xe20] sm:$0xff]
    %v3945 = vld [vmem:[#allocation8 + $0xe28] sm:$0xff]
    %v3946 = vld [vmem:[#allocation8 + $0xe30] sm:$0xff]
    %v3947 = vld [vmem:[#allocation8 + $0xe38] sm:$0xff]
    %v3948 = vld [vmem:[#allocation8 + $0xe40] sm:$0xff]
    %v3949 = vld [vmem:[#allocation8 + $0xe48] sm:$0xff]
    %v3950 = vld [vmem:[#allocation8 + $0xe50] sm:$0xff]
    %v3951 = vld [vmem:[#allocation8 + $0xe58] sm:$0xff]
    %v3952 = vld [vmem:[#allocation8 + $0xe60] sm:$0xff]
    %v3953 = vld [vmem:[#allocation8 + $0xe68] sm:$0xff]
    %v3954 = vld [vmem:[#allocation8 + $0xe70] sm:$0xff]
    %v3955 = vld [vmem:[#allocation8 + $0xe78] sm:$0xff]
    %v3956 = vld [vmem:[#allocation8 + $0xe80] sm:$0xff]
    %v3957 = vld [vmem:[#allocation8 + $0xe88] sm:$0xff]
    %v3958 = vld [vmem:[#allocation8 + $0xe90] sm:$0xff]
    %v3959 = vld [vmem:[#allocation8 + $0xe98] sm:$0xff]
    %v3960 = vld [vmem:[#allocation8 + $0xea0] sm:$0xff]
    %v3961 = vld [vmem:[#allocation8 + $0xea8] sm:$0xff]
    %v3962 = vld [vmem:[#allocation8 + $0xeb0] sm:$0xff]
    %v3963 = vld [vmem:[#allocation8 + $0xeb8] sm:$0xff]
    %v3964 = vld [vmem:[#allocation8 + $0xec0] sm:$0xff]
    %v3965 = vld [vmem:[#allocation8 + $0xec8] sm:$0xff]
    %v3966 = vld [vmem:[#allocation8 + $0xed0] sm:$0xff]
    %v3967 = vld [vmem:[#allocation8 + $0xed8] sm:$0xff]
    %v3968 = vld [vmem:[#allocation8 + $0xee0] sm:$0xff]
    %v3969 = vld [vmem:[#allocation8 + $0xee8] sm:$0xff]
    %v3970 = vld [vmem:[#allocation8 + $0xef0] sm:$0xff]
    %v3971 = vld [vmem:[#allocation8 + $0xef8] sm:$0xff]
    %v3972 = vld [vmem:[#allocation8 + $0xf00] sm:$0xff]
    %v3973 = vld [vmem:[#allocation8 + $0xf08] sm:$0xff]
    %v3974 = vld [vmem:[#allocation8 + $0xf10] sm:$0xff]
    %v3975 = vld [vmem:[#allocation8 + $0xf18] sm:$0xff]
    %v3976 = vld [vmem:[#allocation8 + $0xf20] sm:$0xff]
    %v3977 = vld [vmem:[#allocation8 + $0xf28] sm:$0xff]
    %v3978 = vld [vmem:[#allocation8 + $0xf30] sm:$0xff]
    %v3979 = vld [vmem:[#allocation8 + $0xf38] sm:$0xff]
    %v3980 = vld [vmem:[#allocation8 + $0xf40] sm:$0xff]
    %v3981 = vld [vmem:[#allocation8 + $0xf48] sm:$0xff]
    %v3982 = vld [vmem:[#allocation8 + $0xf50] sm:$0xff]
    %v3983 = vld [vmem:[#allocation8 + $0xf58] sm:$0xff]
    %v3984 = vld [vmem:[#allocation8 + $0xf60] sm:$0xff]
    %v3985 = vld [vmem:[#allocation8 + $0xf68] sm:$0xff]
    %v3986 = vld [vmem:[#allocation8 + $0xf70] sm:$0xff]
    %v3987 = vld [vmem:[#allocation8 + $0xf78] sm:$0xff]
    %v3988 = vld [vmem:[#allocation8 + $0xf80] sm:$0xff]
    %v3989 = vld [vmem:[#allocation8 + $0xf88] sm:$0xff]
    %v3990 = vld [vmem:[#allocation8 + $0xf90] sm:$0xff]
    %v3991 = vld [vmem:[#allocation8 + $0xf98] sm:$0xff]
    %v3992 = vld [vmem:[#allocation8 + $0xfa0] sm:$0xff]
    %v3993 = vld [vmem:[#allocation8 + $0xfa8] sm:$0xff]
    %v3994 = vld [vmem:[#allocation8 + $0xfb0] sm:$0xff]
    %v3995 = vld [vmem:[#allocation8 + $0xfb8] sm:$0xff]
    %v3996 = vld [vmem:[#allocation8 + $0xfc0] sm:$0xff]
    %v3997 = vld [vmem:[#allocation8 + $0xfc8] sm:$0xff]
    %v3998 = vld [vmem:[#allocation8 + $0xfd0] sm:$0xff]
    %v3999 = vld [vmem:[#allocation8 + $0xfd8] sm:$0xff]
    %v4000 = vld [vmem:[#allocation8 + $0xfe0] sm:$0xff]
    %v4001 = vld [vmem:[#allocation8 + $0xfe8] sm:$0xff]
    %v4002 = vld [vmem:[#allocation8 + $0xff0] sm:$0xff]
    %v4003 = vld [vmem:[#allocation8 + $0xff8] sm:$0xff]
    %4004 = vmatprep.subr.mxu0 %v3493
    %4005 = vmatpush1.msra.mxu0 %v3492
    %4006 = vmatprep.subr.mxu0 %v3501
    %4007 = vmatpush1.msra.mxu0 %v3500
    %4008 = vmatprep.subr.mxu0 %v3509
    %4009 = vmatpush1.msra.mxu0 %v3508
    %4010 = vmatprep.subr.mxu0 %v3517
    %4011 = vmatpush1.msra.mxu0 %v3516
    %4012 = vmatprep.subr.mxu0 %v3525
    %4013 = vmatpush1.msra.mxu0 %v3524
    %4014 = vmatprep.subr.mxu0 %v3533
    %4015 = vmatpush1.msra.mxu0 %v3532
    %4016 = vmatprep.subr.mxu0 %v3541
    %4017 = vmatpush1.msra.mxu0 %v3540
    %4018 = vmatprep.subr.mxu0 %v3549
    %4019 = vmatpush1.msra.mxu0 %v3548
    %4020 = vmatprep.subr.mxu0 %v3557
    %4021 = vmatpush1.msra.mxu0 %v3556
    %4022 = vmatprep.subr.mxu0 %v3565
    %4023 = vmatpush1.msra.mxu0 %v3564
    %4024 = vmatprep.subr.mxu0 %v3573
    %4025 = vmatpush1.msra.mxu0 %v3572
    %4026 = vmatprep.subr.mxu0 %v3581
    %4027 = vmatpush1.msra.mxu0 %v3580
    %4028 = vmatprep.subr.mxu0 %v3589
    %4029 = vmatpush1.msra.mxu0 %v3588
    %4030 = vmatprep.subr.mxu0 %v3597
    %4031 = vmatpush1.msra.mxu0 %v3596
    %4032 = vmatprep.subr.mxu0 %v3605
    %4033 = vmatpush1.msra.mxu0 %v3604
    %4034 = vmatprep.subr.mxu0 %v3613
    %4035 = vmatpush1.msra.mxu0 %v3612
    %4036 = vmatprep.subr.mxu0 %v3621
    %4037 = vmatpush1.msra.mxu0 %v3620
    %4038 = vmatprep.subr.mxu0 %v3629
    %4039 = vmatpush1.msra.mxu0 %v3628
    %4040 = vmatprep.subr.mxu0 %v3637
    %4041 = vmatpush1.msra.mxu0 %v3636
    %4042 = vmatprep.subr.mxu0 %v3645
    %4043 = vmatpush1.msra.mxu0 %v3644
    %4044 = vmatprep.subr.mxu0 %v3653
    %4045 = vmatpush1.msra.mxu0 %v3652
    %4046 = vmatprep.subr.mxu0 %v3661
    %4047 = vmatpush1.msra.mxu0 %v3660
    %4048 = vmatprep.subr.mxu0 %v3669
    %4049 = vmatpush1.msra.mxu0 %v3668
    %4050 = vmatprep.subr.mxu0 %v3677
    %4051 = vmatpush1.msra.mxu0 %v3676
    %4052 = vmatprep.subr.mxu0 %v3685
    %4053 = vmatpush1.msra.mxu0 %v3684
    %4054 = vmatprep.subr.mxu0 %v3693
    %4055 = vmatpush1.msra.mxu0 %v3692
    %4056 = vmatprep.subr.mxu0 %v3701
    %4057 = vmatpush1.msra.mxu0 %v3700
    %4058 = vmatprep.subr.mxu0 %v3709
    %4059 = vmatpush1.msra.mxu0 %v3708
    %4060 = vmatprep.subr.mxu0 %v3717
    %4061 = vmatpush1.msra.mxu0 %v3716
    %4062 = vmatprep.subr.mxu0 %v3725
    %4063 = vmatpush1.msra.mxu0 %v3724
    %4064 = vmatprep.subr.mxu0 %v3733
    %4065 = vmatpush1.msra.mxu0 %v3732
    %4066 = vmatprep.subr.mxu0 %v3741
    %4067 = vmatpush1.msra.mxu0 %v3740
    %4068 = vmatprep.mubr.f32.mxu0 %v3489
    %4069 = vmatmul.mubr.f32.gmra.mrb[0].mxu0 %v3488
    %v4070 = vpop.f32.mrb[0].mxu0
    %v4071 = vadd.f32 0.0, %v4070
    %v4072 = vpop.f32.mrb[0].mxu0
    %v4073 = vadd.f32 0.0, %v4072
    %4074 = vdwg.mxu0
    %4075 = vmatprep.subr.mxu0 %v3749
    %4076 = vmatpush1.msra.mxu0 %v3748
    %4077 = vmatprep.subr.mxu0 %v3757
    %4078 = vmatpush1.msra.mxu0 %v3756
    %4079 = vmatprep.subr.mxu0 %v3765
    %4080 = vmatpush1.msra.mxu0 %v3764
    %4081 = vmatprep.subr.mxu0 %v3773
    %4082 = vmatpush1.msra.mxu0 %v3772
    %4083 = vmatprep.subr.mxu0 %v3781
    %4084 = vmatpush1.msra.mxu0 %v3780
    %4085 = vmatprep.subr.mxu0 %v3789
    %4086 = vmatpush1.msra.mxu0 %v3788
    %4087 = vmatprep.subr.mxu0 %v3797
    %4088 = vmatpush1.msra.mxu0 %v3796
    %4089 = vmatprep.subr.mxu0 %v3805
    %4090 = vmatpush1.msra.mxu0 %v3804
    %4091 = vmatprep.subr.mxu0 %v3813
    %4092 = vmatpush1.msra.mxu0 %v3812
    %4093 = vmatprep.subr.mxu0 %v3821
    %4094 = vmatpush1.msra.mxu0 %v3820
    %4095 = vmatprep.subr.mxu0 %v3829
    %4096 = vmatpush1.msra.mxu0 %v3828
    %4097 = vmatprep.subr.mxu0 %v3837
    %4098 = vmatpush1.msra.mxu0 %v3836
    %4099 = vmatprep.subr.mxu0 %v3845
    %4100 = vmatpush1.msra.mxu0 %v3844
    %4101 = vmatprep.subr.mxu0 %v3853
    %4102 = vmatpush1.msra.mxu0 %v3852
    %4103 = vmatprep.subr.mxu0 %v3861
    %4104 = vmatpush1.msra.mxu0 %v3860
    %4105 = vmatprep.subr.mxu0 %v3869
    %4106 = vmatpush1.msra.mxu0 %v3868
    %4107 = vmatprep.subr.mxu0 %v3877
    %4108 = vmatpush1.msra.mxu0 %v3876
    %4109 = vmatprep.subr.mxu0 %v3885
    %4110 = vmatpush1.msra.mxu0 %v3884
    %4111 = vmatprep.subr.mxu0 %v3893
    %4112 = vmatpush1.msra.mxu0 %v3892
    %4113 = vmatprep.subr.mxu0 %v3901
    %4114 = vmatpush1.msra.mxu0 %v3900
    %4115 = vmatprep.subr.mxu0 %v3909
    %4116 = vmatpush1.msra.mxu0 %v3908
    %4117 = vmatprep.subr.mxu0 %v3917
    %4118 = vmatpush1.msra.mxu0 %v3916
    %4119 = vmatprep.subr.mxu0 %v3925
    %4120 = vmatpush1.msra.mxu0 %v3924
    %4121 = vmatprep.subr.mxu0 %v3933
    %4122 = vmatpush1.msra.mxu0 %v3932
    %4123 = vmatprep.subr.mxu0 %v3941
    %4124 = vmatpush1.msra.mxu0 %v3940
    %4125 = vmatprep.subr.mxu0 %v3949
    %4126 = vmatpush1.msra.mxu0 %v3948
    %4127 = vmatprep.subr.mxu0 %v3957
    %4128 = vmatpush1.msra.mxu0 %v3956
    %4129 = vmatprep.subr.mxu0 %v3965
    %4130 = vmatpush1.msra.mxu0 %v3964
    %4131 = vmatprep.subr.mxu0 %v3973
    %4132 = vmatpush1.msra.mxu0 %v3972
    %4133 = vmatprep.subr.mxu0 %v3981
    %4134 = vmatpush1.msra.mxu0 %v3980
    %4135 = vmatprep.subr.mxu0 %v3989
    %4136 = vmatpush1.msra.mxu0 %v3988
    %4137 = vmatprep.subr.mxu0 %v3997
    %4138 = vmatpush1.msra.mxu0 %v3996
    %4139 = vmatprep.mubr.f32.mxu0 %v3491
    %4140 = vmatmul.mubr.f32.gmra.mrb[0].mxu0 %v3490
    %v4141 = vpop.f32.mrb[0].mxu0
    %v4142 = vadd.f32 %v4071, %v4141
    %v4143 = vpop.f32.mrb[0].mxu0
    %v4144 = vadd.f32 %v4073, %v4143
    %4145 = vdwg.mxu0
    %4146 = vmatprep.subr.mxu0 %v3495
    %4147 = vmatpush1.msra.mxu0 %v3494
    %4148 = vmatprep.subr.mxu0 %v3503
    %4149 = vmatpush1.msra.mxu0 %v3502
    %4150 = vmatprep.subr.mxu0 %v3511
    %4151 = vmatpush1.msra.mxu0 %v3510
    %4152 = vmatprep.subr.mxu0 %v3519
    %4153 = vmatpush1.msra.mxu0 %v3518
    %4154 = vmatprep.subr.mxu0 %v3527
    %4155 = vmatpush1.msra.mxu0 %v3526
    %4156 = vmatprep.subr.mxu0 %v3535
    %4157 = vmatpush1.msra.mxu0 %v3534
    %4158 = vmatprep.subr.mxu0 %v3543
    %4159 = vmatpush1.msra.mxu0 %v3542
    %4160 = vmatprep.subr.mxu0 %v3551
    %4161 = vmatpush1.msra.mxu0 %v3550
    %4162 = vmatprep.subr.mxu0 %v3559
    %4163 = vmatpush1.msra.mxu0 %v3558
    %4164 = vmatprep.subr.mxu0 %v3567
    %4165 = vmatpush1.msra.mxu0 %v3566
    %4166 = vmatprep.subr.mxu0 %v3575
    %4167 = vmatpush1.msra.mxu0 %v3574
    %4168 = vmatprep.subr.mxu0 %v3583
    %4169 = vmatpush1.msra.mxu0 %v3582
    %4170 = vmatprep.subr.mxu0 %v3591
    %4171 = vmatpush1.msra.mxu0 %v3590
    %4172 = vmatprep.subr.mxu0 %v3599
    %4173 = vmatpush1.msra.mxu0 %v3598
    %4174 = vmatprep.subr.mxu0 %v3607
    %4175 = vmatpush1.msra.mxu0 %v3606
    %4176 = vmatprep.subr.mxu0 %v3615
    %4177 = vmatpush1.msra.mxu0 %v3614
    %4178 = vmatprep.subr.mxu0 %v3623
    %4179 = vmatpush1.msra.mxu0 %v3622
    %4180 = vmatprep.subr.mxu0 %v3631
    %4181 = vmatpush1.msra.mxu0 %v3630
    %4182 = vmatprep.subr.mxu0 %v3639
    %4183 = vmatpush1.msra.mxu0 %v3638
    %4184 = vmatprep.subr.mxu0 %v3647
    %4185 = vmatpush1.msra.mxu0 %v3646
    %4186 = vmatprep.subr.mxu0 %v3655
    %4187 = vmatpush1.msra.mxu0 %v3654
    %4188 = vmatprep.subr.mxu0 %v3663
    %4189 = vmatpush1.msra.mxu0 %v3662
    %4190 = vmatprep.subr.mxu0 %v3671
    %4191 = vmatpush1.msra.mxu0 %v3670
    %4192 = vmatprep.subr.mxu0 %v3679
    %4193 = vmatpush1.msra.mxu0 %v3678
    %4194 = vmatprep.subr.mxu0 %v3687
    %4195 = vmatpush1.msra.mxu0 %v3686
    %4196 = vmatprep.subr.mxu0 %v3695
    %4197 = vmatpush1.msra.mxu0 %v3694
    %4198 = vmatprep.subr.mxu0 %v3703
    %4199 = vmatpush1.msra.mxu0 %v3702
    %4200 = vmatprep.subr.mxu0 %v3711
    %4201 = vmatpush1.msra.mxu0 %v3710
    %4202 = vmatprep.subr.mxu0 %v3719
    %4203 = vmatpush1.msra.mxu0 %v3718
    %4204 = vmatprep.subr.mxu0 %v3727
    %4205 = vmatpush1.msra.mxu0 %v3726
    %4206 = vmatprep.subr.mxu0 %v3735
    %4207 = vmatpush1.msra.mxu0 %v3734
    %4208 = vmatprep.subr.mxu0 %v3743
    %4209 = vmatpush1.msra.mxu0 %v3742
    %4210 = vmatprep.mubr.f32.mxu0 %v3489
    %4211 = vmatmul.mubr.f32.gmra.mrb[0].mxu0 %v3488
    %v4212 = vpop.f32.mrb[0].mxu0
    %v4213 = vadd.f32 0.0, %v4212
    %v4214 = vpop.f32.mrb[0].mxu0
    %v4215 = vadd.f32 0.0, %v4214
    %4216 = vdwg.mxu0
    %4217 = vmatprep.subr.mxu0 %v3751
    %4218 = vmatpush1.msra.mxu0 %v3750
    %4219 = vmatprep.subr.mxu0 %v3759
    %4220 = vmatpush1.msra.mxu0 %v3758
    %4221 = vmatprep.subr.mxu0 %v3767
    %4222 = vmatpush1.msra.mxu0 %v3766
    %4223 = vmatprep.subr.mxu0 %v3775
    %4224 = vmatpush1.msra.mxu0 %v3774
    %4225 = vmatprep.subr.mxu0 %v3783
    %4226 = vmatpush1.msra.mxu0 %v3782
    %4227 = vmatprep.subr.mxu0 %v3791
    %4228 = vmatpush1.msra.mxu0 %v3790
    %4229 = vmatprep.subr.mxu0 %v3799
    %4230 = vmatpush1.msra.mxu0 %v3798
    %4231 = vmatprep.subr.mxu0 %v3807
    %4232 = vmatpush1.msra.mxu0 %v3806
    %4233 = vmatprep.subr.mxu0 %v3815
    %4234 = vmatpush1.msra.mxu0 %v3814
    %4235 = vmatprep.subr.mxu0 %v3823
    %4236 = vmatpush1.msra.mxu0 %v3822
    %4237 = vmatprep.subr.mxu0 %v3831
    %4238 = vmatpush1.msra.mxu0 %v3830
    %4239 = vmatprep.subr.mxu0 %v3839
    %4240 = vmatpush1.msra.mxu0 %v3838
    %4241 = vmatprep.subr.mxu0 %v3847
    %4242 = vmatpush1.msra.mxu0 %v3846
    %4243 = vmatprep.subr.mxu0 %v3855
    %4244 = vmatpush1.msra.mxu0 %v3854
    %4245 = vmatprep.subr.mxu0 %v3863
    %4246 = vmatpush1.msra.mxu0 %v3862
    %4247 = vmatprep.subr.mxu0 %v3871
    %4248 = vmatpush1.msra.mxu0 %v3870
    %4249 = vmatprep.subr.mxu0 %v3879
    %4250 = vmatpush1.msra.mxu0 %v3878
    %4251 = vmatprep.subr.mxu0 %v3887
    %4252 = vmatpush1.msra.mxu0 %v3886
    %4253 = vmatprep.subr.mxu0 %v3895
    %4254 = vmatpush1.msra.mxu0 %v3894
    %4255 = vmatprep.subr.mxu0 %v3903
    %4256 = vmatpush1.msra.mxu0 %v3902
    %4257 = vmatprep.subr.mxu0 %v3911
    %4258 = vmatpush1.msra.mxu0 %v3910
    %4259 = vmatprep.subr.mxu0 %v3919
    %4260 = vmatpush1.msra.mxu0 %v3918
    %4261 = vmatprep.subr.mxu0 %v3927
    %4262 = vmatpush1.msra.mxu0 %v3926
    %4263 = vmatprep.subr.mxu0 %v3935
    %4264 = vmatpush1.msra.mxu0 %v3934
    %4265 = vmatprep.subr.mxu0 %v3943
    %4266 = vmatpush1.msra.mxu0 %v3942
    %4267 = vmatprep.subr.mxu0 %v3951
    %4268 = vmatpush1.msra.mxu0 %v3950
    %4269 = vmatprep.subr.mxu0 %v3959
    %4270 = vmatpush1.msra.mxu0 %v3958
    %4271 = vmatprep.subr.mxu0 %v3967
    %4272 = vmatpush1.msra.mxu0 %v3966
    %4273 = vmatprep.subr.mxu0 %v3975
    %4274 = vmatpush1.msra.mxu0 %v3974
    %4275 = vmatprep.subr.mxu0 %v3983
    %4276 = vmatpush1.msra.mxu0 %v3982
    %4277 = vmatprep.subr.mxu0 %v3991
    %4278 = vmatpush1.msra.mxu0 %v3990
    %4279 = vmatprep.subr.mxu0 %v3999
    %4280 = vmatpush1.msra.mxu0 %v3998
    %4281 = vmatprep.mubr.f32.mxu0 %v3491
    %4282 = vmatmul.mubr.f32.gmra.mrb[0].mxu0 %v3490
    %v4283 = vpop.f32.mrb[0].mxu0
    %v4284 = vadd.f32 %v4213, %v4283
    %v4285 = vpop.f32.mrb[0].mxu0
    %v4286 = vadd.f32 %v4215, %v4285
    %4287 = vdwg.mxu0
    %4288 = vmatprep.subr.mxu0 %v3497
    %4289 = vmatpush1.msra.mxu0 %v3496
    %4290 = vmatprep.subr.mxu0 %v3505
    %4291 = vmatpush1.msra.mxu0 %v3504
    %4292 = vmatprep.subr.mxu0 %v3513
    %4293 = vmatpush1.msra.mxu0 %v3512
    %4294 = vmatprep.subr.mxu0 %v3521
    %4295 = vmatpush1.msra.mxu0 %v3520
    %4296 = vmatprep.subr.mxu0 %v3529
    %4297 = vmatpush1.msra.mxu0 %v3528
    %4298 = vmatprep.subr.mxu0 %v3537
    %4299 = vmatpush1.msra.mxu0 %v3536
    %4300 = vmatprep.subr.mxu0 %v3545
    %4301 = vmatpush1.msra.mxu0 %v3544
    %4302 = vmatprep.subr.mxu0 %v3553
    %4303 = vmatpush1.msra.mxu0 %v3552
    %4304 = vmatprep.subr.mxu0 %v3561
    %4305 = vmatpush1.msra.mxu0 %v3560
    %4306 = vmatprep.subr.mxu0 %v3569
    %4307 = vmatpush1.msra.mxu0 %v3568
    %4308 = vmatprep.subr.mxu0 %v3577
    %4309 = vmatpush1.msra.mxu0 %v3576
    %4310 = vmatprep.subr.mxu0 %v3585
    %4311 = vmatpush1.msra.mxu0 %v3584
    %4312 = vmatprep.subr.mxu0 %v3593
    %4313 = vmatpush1.msra.mxu0 %v3592
    %4314 = vmatprep.subr.mxu0 %v3601
    %4315 = vmatpush1.msra.mxu0 %v3600
    %4316 = vmatprep.subr.mxu0 %v3609
    %4317 = vmatpush1.msra.mxu0 %v3608
    %4318 = vmatprep.subr.mxu0 %v3617
    %4319 = vmatpush1.msra.mxu0 %v3616
    %4320 = vmatprep.subr.mxu0 %v3625
    %4321 = vmatpush1.msra.mxu0 %v3624
    %4322 = vmatprep.subr.mxu0 %v3633
    %4323 = vmatpush1.msra.mxu0 %v3632
    %4324 = vmatprep.subr.mxu0 %v3641
    %4325 = vmatpush1.msra.mxu0 %v3640
    %4326 = vmatprep.subr.mxu0 %v3649
    %4327 = vmatpush1.msra.mxu0 %v3648
    %4328 = vmatprep.subr.mxu0 %v3657
    %4329 = vmatpush1.msra.mxu0 %v3656
    %4330 = vmatprep.subr.mxu0 %v3665
    %4331 = vmatpush1.msra.mxu0 %v3664
    %4332 = vmatprep.subr.mxu0 %v3673
    %4333 = vmatpush1.msra.mxu0 %v3672
    %4334 = vmatprep.subr.mxu0 %v3681
    %4335 = vmatpush1.msra.mxu0 %v3680
    %4336 = vmatprep.subr.mxu0 %v3689
    %4337 = vmatpush1.msra.mxu0 %v3688
    %4338 = vmatprep.subr.mxu0 %v3697
    %4339 = vmatpush1.msra.mxu0 %v3696
    %4340 = vmatprep.subr.mxu0 %v3705
    %4341 = vmatpush1.msra.mxu0 %v3704
    %4342 = vmatprep.subr.mxu0 %v3713
    %4343 = vmatpush1.msra.mxu0 %v3712
    %4344 = vmatprep.subr.mxu0 %v3721
    %4345 = vmatpush1.msra.mxu0 %v3720
    %4346 = vmatprep.subr.mxu0 %v3729
    %4347 = vmatpush1.msra.mxu0 %v3728
    %4348 = vmatprep.subr.mxu0 %v3737
    %4349 = vmatpush1.msra.mxu0 %v3736
    %4350 = vmatprep.subr.mxu0 %v3745
    %4351 = vmatpush1.msra.mxu0 %v3744
    %4352 = vmatprep.mubr.f32.mxu0 %v3489
    %4353 = vmatmul.mubr.f32.gmra.mrb[0].mxu0 %v3488
    %v4354 = vpop.f32.mrb[0].mxu0
    %v4355 = vadd.f32 0.0, %v4354
    %v4356 = vpop.f32.mrb[0].mxu0
    %v4357 = vadd.f32 0.0, %v4356
    %4358 = vdwg.mxu0
    %4359 = vmatprep.subr.mxu0 %v3753
    %4360 = vmatpush1.msra.mxu0 %v3752
    %4361 = vmatprep.subr.mxu0 %v3761
    %4362 = vmatpush1.msra.mxu0 %v3760
    %4363 = vmatprep.subr.mxu0 %v3769
    %4364 = vmatpush1.msra.mxu0 %v3768
    %4365 = vmatprep.subr.mxu0 %v3777
    %4366 = vmatpush1.msra.mxu0 %v3776
    %4367 = vmatprep.subr.mxu0 %v3785
    %4368 = vmatpush1.msra.mxu0 %v3784
    %4369 = vmatprep.subr.mxu0 %v3793
    %4370 = vmatpush1.msra.mxu0 %v3792
    %4371 = vmatprep.subr.mxu0 %v3801
    %4372 = vmatpush1.msra.mxu0 %v3800
    %4373 = vmatprep.subr.mxu0 %v3809
    %4374 = vmatpush1.msra.mxu0 %v3808
    %4375 = vmatprep.subr.mxu0 %v3817
    %4376 = vmatpush1.msra.mxu0 %v3816
    %4377 = vmatprep.subr.mxu0 %v3825
    %4378 = vmatpush1.msra.mxu0 %v3824
    %4379 = vmatprep.subr.mxu0 %v3833
    %4380 = vmatpush1.msra.mxu0 %v3832
    %4381 = vmatprep.subr.mxu0 %v3841
    %4382 = vmatpush1.msra.mxu0 %v3840
    %4383 = vmatprep.subr.mxu0 %v3849
    %4384 = vmatpush1.msra.mxu0 %v3848
    %4385 = vmatprep.subr.mxu0 %v3857
    %4386 = vmatpush1.msra.mxu0 %v3856
    %4387 = vmatprep.subr.mxu0 %v3865
    %4388 = vmatpush1.msra.mxu0 %v3864
    %4389 = vmatprep.subr.mxu0 %v3873
    %4390 = vmatpush1.msra.mxu0 %v3872
    %4391 = vmatprep.subr.mxu0 %v3881
    %4392 = vmatpush1.msra.mxu0 %v3880
    %4393 = vmatprep.subr.mxu0 %v3889
    %4394 = vmatpush1.msra.mxu0 %v3888
    %4395 = vmatprep.subr.mxu0 %v3897
    %4396 = vmatpush1.msra.mxu0 %v3896
    %4397 = vmatprep.subr.mxu0 %v3905
    %4398 = vmatpush1.msra.mxu0 %v3904
    %4399 = vmatprep.subr.mxu0 %v3913
    %4400 = vmatpush1.msra.mxu0 %v3912
    %4401 = vmatprep.subr.mxu0 %v3921
    %4402 = vmatpush1.msra.mxu0 %v3920
    %4403 = vmatprep.subr.mxu0 %v3929
    %4404 = vmatpush1.msra.mxu0 %v3928
    %4405 = vmatprep.subr.mxu0 %v3937
    %4406 = vmatpush1.msra.mxu0 %v3936
    %4407 = vmatprep.subr.mxu0 %v3945
    %4408 = vmatpush1.msra.mxu0 %v3944
    %4409 = vmatprep.subr.mxu0 %v3953
    %4410 = vmatpush1.msra.mxu0 %v3952
    %4411 = vmatprep.subr.mxu0 %v3961
    %4412 = vmatpush1.msra.mxu0 %v3960
    %4413 = vmatprep.subr.mxu0 %v3969
    %4414 = vmatpush1.msra.mxu0 %v3968
    %4415 = vmatprep.subr.mxu0 %v3977
    %4416 = vmatpush1.msra.mxu0 %v3976
    %4417 = vmatprep.subr.mxu0 %v3985
    %4418 = vmatpush1.msra.mxu0 %v3984
    %4419 = vmatprep.subr.mxu0 %v3993
    %4420 = vmatpush1.msra.mxu0 %v3992
    %4421 = vmatprep.subr.mxu0 %v4001
    %4422 = vmatpush1.msra.mxu0 %v4000
    %4423 = vmatprep.mubr.f32.mxu0 %v3491
    %4424 = vmatmul.mubr.f32.gmra.mrb[0].mxu0 %v3490
    %v4425 = vpop.f32.mrb[0].mxu0
    %v4426 = vadd.f32 %v4355, %v4425
    %v4427 = vpop.f32.mrb[0].mxu0
    %v4428 = vadd.f32 %v4357, %v4427
    %4429 = vdwg.mxu0
    %4430 = vmatprep.subr.mxu0 %v3499
    %4431 = vmatpush1.msra.mxu0 %v3498
    %4432 = vmatprep.subr.mxu0 %v3507
    %4433 = vmatpush1.msra.mxu0 %v3506
    %4434 = vmatprep.subr.mxu0 %v3515
    %4435 = vmatpush1.msra.mxu0 %v3514
    %4436 = vmatprep.subr.mxu0 %v3523
    %4437 = vmatpush1.msra.mxu0 %v3522
    %4438 = vmatprep.subr.mxu0 %v3531
    %4439 = vmatpush1.msra.mxu0 %v3530
    %4440 = vmatprep.subr.mxu0 %v3539
    %4441 = vmatpush1.msra.mxu0 %v3538
    %4442 = vmatprep.subr.mxu0 %v3547
    %4443 = vmatpush1.msra.mxu0 %v3546
    %4444 = vmatprep.subr.mxu0 %v3555
    %4445 = vmatpush1.msra.mxu0 %v3554
    %4446 = vmatprep.subr.mxu0 %v3563
    %4447 = vmatpush1.msra.mxu0 %v3562
    %4448 = vmatprep.subr.mxu0 %v3571
    %4449 = vmatpush1.msra.mxu0 %v3570
    %4450 = vmatprep.subr.mxu0 %v3579
    %4451 = vmatpush1.msra.mxu0 %v3578
    %4452 = vmatprep.subr.mxu0 %v3587
    %4453 = vmatpush1.msra.mxu0 %v3586
    %4454 = vmatprep.subr.mxu0 %v3595
    %4455 = vmatpush1.msra.mxu0 %v3594
    %4456 = vmatprep.subr.mxu0 %v3603
    %4457 = vmatpush1.msra.mxu0 %v3602
    %4458 = vmatprep.subr.mxu0 %v3611
    %4459 = vmatpush1.msra.mxu0 %v3610
    %4460 = vmatprep.subr.mxu0 %v3619
    %4461 = vmatpush1.msra.mxu0 %v3618
    %4462 = vmatprep.subr.mxu0 %v3627
    %4463 = vmatpush1.msra.mxu0 %v3626
    %4464 = vmatprep.subr.mxu0 %v3635
    %4465 = vmatpush1.msra.mxu0 %v3634
    %4466 = vmatprep.subr.mxu0 %v3643
    %4467 = vmatpush1.msra.mxu0 %v3642
    %4468 = vmatprep.subr.mxu0 %v3651
    %4469 = vmatpush1.msra.mxu0 %v3650
    %4470 = vmatprep.subr.mxu0 %v3659
    %4471 = vmatpush1.msra.mxu0 %v3658
    %4472 = vmatprep.subr.mxu0 %v3667
    %4473 = vmatpush1.msra.mxu0 %v3666
    %4474 = vmatprep.subr.mxu0 %v3675
    %4475 = vmatpush1.msra.mxu0 %v3674
    %4476 = vmatprep.subr.mxu0 %v3683
    %4477 = vmatpush1.msra.mxu0 %v3682
    %4478 = vmatprep.subr.mxu0 %v3691
    %4479 = vmatpush1.msra.mxu0 %v3690
    %4480 = vmatprep.subr.mxu0 %v3699
    %4481 = vmatpush1.msra.mxu0 %v3698
    %4482 = vmatprep.subr.mxu0 %v3707
    %4483 = vmatpush1.msra.mxu0 %v3706
    %4484 = vmatprep.subr.mxu0 %v3715
    %4485 = vmatpush1.msra.mxu0 %v3714
    %4486 = vmatprep.subr.mxu0 %v3723
    %4487 = vmatpush1.msra.mxu0 %v3722
    %4488 = vmatprep.subr.mxu0 %v3731
    %4489 = vmatpush1.msra.mxu0 %v3730
    %4490 = vmatprep.subr.mxu0 %v3739
    %4491 = vmatpush1.msra.mxu0 %v3738
    %4492 = vmatprep.subr.mxu0 %v3747
    %4493 = vmatpush1.msra.mxu0 %v3746
    %4494 = vmatprep.mubr.f32.mxu0 %v3489
    %4495 = vmatmul.mubr.f32.gmra.mrb[0].mxu0 %v3488
    %v4496 = vpop.f32.mrb[0].mxu0
    %v4497 = vadd.f32 0.0, %v4496
    %v4498 = vpop.f32.mrb[0].mxu0
    %v4499 = vadd.f32 0.0, %v4498
    %4500 = vdwg.mxu0
    %4501 = vmatprep.subr.mxu0 %v3755
    %4502 = vmatpush1.msra.mxu0 %v3754
    %4503 = vmatprep.subr.mxu0 %v3763
    %4504 = vmatpush1.msra.mxu0 %v3762
    %4505 = vmatprep.subr.mxu0 %v3771
    %4506 = vmatpush1.msra.mxu0 %v3770
    %4507 = vmatprep.subr.mxu0 %v3779
    %4508 = vmatpush1.msra.mxu0 %v3778
    %4509 = vmatprep.subr.mxu0 %v3787
    %4510 = vmatpush1.msra.mxu0 %v3786
    %4511 = vmatprep.subr.mxu0 %v3795
    %4512 = vmatpush1.msra.mxu0 %v3794
    %4513 = vmatprep.subr.mxu0 %v3803
    %4514 = vmatpush1.msra.mxu0 %v3802
    %4515 = vmatprep.subr.mxu0 %v3811
    %4516 = vmatpush1.msra.mxu0 %v3810
    %4517 = vmatprep.subr.mxu0 %v3819
    %4518 = vmatpush1.msra.mxu0 %v3818
    %4519 = vmatprep.subr.mxu0 %v3827
    %4520 = vmatpush1.msra.mxu0 %v3826
    %4521 = vmatprep.subr.mxu0 %v3835
    %4522 = vmatpush1.msra.mxu0 %v3834
    %4523 = vmatprep.subr.mxu0 %v3843
    %4524 = vmatpush1.msra.mxu0 %v3842
    %4525 = vmatprep.subr.mxu0 %v3851
    %4526 = vmatpush1.msra.mxu0 %v3850
    %4527 = vmatprep.subr.mxu0 %v3859
    %4528 = vmatpush1.msra.mxu0 %v3858
    %4529 = vmatprep.subr.mxu0 %v3867
    %4530 = vmatpush1.msra.mxu0 %v3866
    %4531 = vmatprep.subr.mxu0 %v3875
    %4532 = vmatpush1.msra.mxu0 %v3874
    %4533 = vmatprep.subr.mxu0 %v3883
    %4534 = vmatpush1.msra.mxu0 %v3882
    %4535 = vmatprep.subr.mxu0 %v3891
    %4536 = vmatpush1.msra.mxu0 %v3890
    %4537 = vmatprep.subr.mxu0 %v3899
    %4538 = vmatpush1.msra.mxu0 %v3898
    %4539 = vmatprep.subr.mxu0 %v3907
    %4540 = vmatpush1.msra.mxu0 %v3906
    %4541 = vmatprep.subr.mxu0 %v3915
    %4542 = vmatpush1.msra.mxu0 %v3914
    %4543 = vmatprep.subr.mxu0 %v3923
    %4544 = vmatpush1.msra.mxu0 %v3922
    %4545 = vmatprep.subr.mxu0 %v3931
    %4546 = vmatpush1.msra.mxu0 %v3930
    %4547 = vmatprep.subr.mxu0 %v3939
    %4548 = vmatpush1.msra.mxu0 %v3938
    %4549 = vmatprep.subr.mxu0 %v3947
    %4550 = vmatpush1.msra.mxu0 %v3946
    %4551 = vmatprep.subr.mxu0 %v3955
    %4552 = vmatpush1.msra.mxu0 %v3954
    %4553 = vmatprep.subr.mxu0 %v3963
    %4554 = vmatpush1.msra.mxu0 %v3962
    %4555 = vmatprep.subr.mxu0 %v3971
    %4556 = vmatpush1.msra.mxu0 %v3970
    %4557 = vmatprep.subr.mxu0 %v3979
    %4558 = vmatpush1.msra.mxu0 %v3978
    %4559 = vmatprep.subr.mxu0 %v3987
    %4560 = vmatpush1.msra.mxu0 %v3986
    %4561 = vmatprep.subr.mxu0 %v3995
    %4562 = vmatpush1.msra.mxu0 %v3994
    %4563 = vmatprep.subr.mxu0 %v4003
    %4564 = vmatpush1.msra.mxu0 %v4002
    %4565 = vmatprep.mubr.f32.mxu0 %v3491
    %4566 = vmatmul.mubr.f32.gmra.mrb[0].mxu0 %v3490
    %v4567 = vpop.f32.mrb[0].mxu0
    %v4568 = vadd.f32 %v4497, %v4567
    %v4569 = vpop.f32.mrb[0].mxu0
    %v4570 = vadd.f32 %v4499, %v4569
    %4571 = vdwg.mxu0
    %v4572 = vmax.f32 %v4142, %v4284
    %v4573 = vmax.f32 %v4144, %v4286
    %v4574 = vmax.f32 %v4426, %v4568
    %v4575 = vmax.f32 %v4428, %v4570
    %v4576 = vmax.f32 %v4572, %v4574
    %v4577 = vmax.f32 %v4573, %v4575
    %v4578 = vld [vmem:[#allocation10] sm:$0x3]
    %v4580 = vlaneseq
    %v4581 = vshrl.u32 %v4580, 7
    %v4582 = vsub.s32 0, %v4581
    %v4583 = vrot.slane %v4578, %v4582
    %v4584 = vlaneseq
    %v4585 = vshrl.u32 %v4584, 7
    %v4586 = vsub.s32 1, %v4585
    %v4587 = vrot.slane %v4578, %v4586
    %v4590 = vmul.f32 %v4576, %v4583
    %v4591 = vmul.f32 %v4577, %v4587
    %v4592 = vld [vmem:[#allocation11] sm:$0x3]
    %v4594 = vlaneseq
    %v4595 = vshrl.u32 %v4594, 7
    %v4596 = vsub.s32 0, %v4595
    %v4597 = vrot.slane %v4592, %v4596
    %v4598 = vlaneseq
    %v4599 = vshrl.u32 %v4598, 7
    %v4600 = vsub.s32 1, %v4599
    %v4601 = vrot.slane %v4592, %v4600
    %v4604 = vadd.f32 %v4590, %v4597
    %v4605 = vadd.f32 %v4591, %v4601
    %v4606 = vmax.f32 %v4604, 0.0
    %v4607 = vmax.f32 %v4605, 0.0
    %v4608 = vld [vmem:[%s7] sm:$0xff]
    %v4609 = vld [vmem:[%s7 + $0x8] sm:$0xff]
    %v4610 = vld [vmem:[%s7 + $0x10] sm:$0xff]
    %v4611 = vld [vmem:[%s7 + $0x18] sm:$0xff]
    %v4612 = vld [vmem:[%s7 + $0x20] sm:$0xff]
    %v4613 = vld [vmem:[%s7 + $0x28] sm:$0xff]
    %v4614 = vld [vmem:[%s7 + $0x30] sm:$0xff]
    %v4615 = vld [vmem:[%s7 + $0x38] sm:$0xff]
    %v4616 = vld [vmem:[%s7 + $0x40] sm:$0xff]
    %v4617 = vld [vmem:[%s7 + $0x48] sm:$0xff]
    %v4618 = vld [vmem:[%s7 + $0x50] sm:$0xff]
    %v4619 = vld [vmem:[%s7 + $0x58] sm:$0xff]
    %v4620 = vld [vmem:[%s7 + $0x60] sm:$0xff]
    %v4621 = vld [vmem:[%s7 + $0x68] sm:$0xff]
    %v4622 = vld [vmem:[%s7 + $0x70] sm:$0xff]
    %v4623 = vld [vmem:[%s7 + $0x78] sm:$0xff]
    %v4624 = vld [vmem:[%s7 + $0x80] sm:$0xff]
    %v4625 = vld [vmem:[%s7 + $0x88] sm:$0xff]
    %v4626 = vld [vmem:[%s7 + $0x90] sm:$0xff]
    %v4627 = vld [vmem:[%s7 + $0x98] sm:$0xff]
    %v4628 = vld [vmem:[%s7 + $0xa0] sm:$0xff]
    %v4629 = vld [vmem:[%s7 + $0xa8] sm:$0xff]
    %v4630 = vld [vmem:[%s7 + $0xb0] sm:$0xff]
    %v4631 = vld [vmem:[%s7 + $0xb8] sm:$0xff]
    %v4632 = vld [vmem:[%s7 + $0xc0] sm:$0xff]
    %v4633 = vld [vmem:[%s7 + $0xc8] sm:$0xff]
    %v4634 = vld [vmem:[%s7 + $0xd0] sm:$0xff]
    %v4635 = vld [vmem:[%s7 + $0xd8] sm:$0xff]
    %v4636 = vld [vmem:[%s7 + $0xe0] sm:$0xff]
    %v4637 = vld [vmem:[%s7 + $0xe8] sm:$0xff]
    %v4638 = vld [vmem:[%s7 + $0xf0] sm:$0xff]
    %v4639 = vld [vmem:[%s7 + $0xf8] sm:$0xff]
    %v4640 = vld [vmem:[#allocation13] sm:$0x1]
    %v4642 = vlaneseq
    %v4643 = vshrl.u32 %v4642, 7
    %v4644 = vsub.s32 0, %v4643
    %v4645 = vrot.slane %v4640, %v4644
    %4647 = vmatprep.subr.mxu0 0.0
    %4648 = vmatpush1.msra.mxu0 %v4608
    %4649 = vmatprep.subr.mxu0 0.0
    %4650 = vmatpush1.msra.mxu0 %v4609
    %4651 = vmatprep.subr.mxu0 0.0
    %4652 = vmatpush1.msra.mxu0 %v4610
    %4653 = vmatprep.subr.mxu0 0.0
    %4654 = vmatpush1.msra.mxu0 %v4611
    %4655 = vmatprep.subr.mxu0 0.0
    %4656 = vmatpush1.msra.mxu0 %v4612
    %4657 = vmatprep.subr.mxu0 0.0
    %4658 = vmatpush1.msra.mxu0 %v4613
    %4659 = vmatprep.subr.mxu0 0.0
    %4660 = vmatpush1.msra.mxu0 %v4614
    %4661 = vmatprep.subr.mxu0 0.0
    %4662 = vmatpush1.msra.mxu0 %v4615
    %4663 = vmatprep.subr.mxu0 0.0
    %4664 = vmatpush1.msra.mxu0 %v4616
    %4665 = vmatprep.subr.mxu0 0.0
    %4666 = vmatpush1.msra.mxu0 %v4617
    %4667 = vmatprep.subr.mxu0 0.0
    %4668 = vmatpush1.msra.mxu0 %v4618
    %4669 = vmatprep.subr.mxu0 0.0
    %4670 = vmatpush1.msra.mxu0 %v4619
    %4671 = vmatprep.subr.mxu0 0.0
    %4672 = vmatpush1.msra.mxu0 %v4620
    %4673 = vmatprep.subr.mxu0 0.0
    %4674 = vmatpush1.msra.mxu0 %v4621
    %4675 = vmatprep.subr.mxu0 0.0
    %4676 = vmatpush1.msra.mxu0 %v4622
    %4677 = vmatprep.subr.mxu0 0.0
    %4678 = vmatpush1.msra.mxu0 %v4623
    %4679 = vmatprep.subr.mxu0 0.0
    %4680 = vmatpush1.msra.mxu0 %v4624
    %4681 = vmatprep.subr.mxu0 0.0
    %4682 = vmatpush1.msra.mxu0 %v4625
    %4683 = vmatprep.subr.mxu0 0.0
    %4684 = vmatpush1.msra.mxu0 %v4626
    %4685 = vmatprep.subr.mxu0 0.0
    %4686 = vmatpush1.msra.mxu0 %v4627
    %4687 = vmatprep.subr.mxu0 0.0
    %4688 = vmatpush1.msra.mxu0 %v4628
    %4689 = vmatprep.subr.mxu0 0.0
    %4690 = vmatpush1.msra.mxu0 %v4629
    %4691 = vmatprep.subr.mxu0 0.0
    %4692 = vmatpush1.msra.mxu0 %v4630
    %4693 = vmatprep.subr.mxu0 0.0
    %4694 = vmatpush1.msra.mxu0 %v4631
    %4695 = vmatprep.subr.mxu0 0.0
    %4696 = vmatpush1.msra.mxu0 %v4632
    %4697 = vmatprep.subr.mxu0 0.0
    %4698 = vmatpush1.msra.mxu0 %v4633
    %4699 = vmatprep.subr.mxu0 0.0
    %4700 = vmatpush1.msra.mxu0 %v4634
    %4701 = vmatprep.subr.mxu0 0.0
    %4702 = vmatpush1.msra.mxu0 %v4635
    %4703 = vmatprep.subr.mxu0 0.0
    %4704 = vmatpush1.msra.mxu0 %v4636
    %4705 = vmatprep.subr.mxu0 0.0
    %4706 = vmatpush1.msra.mxu0 %v4637
    %4707 = vmatprep.subr.mxu0 0.0
    %4708 = vmatpush1.msra.mxu0 %v4638
    %4709 = vmatprep.subr.mxu0 0.0
    %4710 = vmatpush1.msra.mxu0 %v4639
    %4711 = vmatprep.mubr.f32.mxu0 %v4607
    %4712 = vmatmul.mubr.f32.gmra.mrb[0].mxu0 %v4606
    %v4713 = vpop.f32.mrb[0].mxu0
    %v4714 = vadd.f32 %v4645, %v4713
    %v4715 = vpop.f32.mrb[0].mxu0
    %4716 = vdwg.mxu0
    %v4717 = vmax.f32 %v4714, 0.0
    %v4718 = vld [vmem:[#allocation14] sm:$0xff]
    %v4719 = vld [vmem:[#allocation14 + $0x8] sm:$0xff]
    %v4720 = vld [vmem:[#allocation14 + $0x10] sm:$0xff]
    %v4721 = vld [vmem:[#allocation14 + $0x18] sm:$0xff]
    %v4722 = vld [vmem:[#allocation16] sm:$0x1]
    %v4724 = vlaneseq
    %v4725 = vshrl.u32 %v4724, 7
    %v4726 = vsub.s32 0, %v4725
    %v4727 = vrot.slane %v4722, %v4726
    %vm4729 = vcmask 261120
    %v4731 = vsel %vm4729, %v4717, 0
    %4733 = vmatprep.subr.mxu0 0.0
    %4734 = vmatpush1.msra.mxu0 %v4718
    %4735 = vmatprep.subr.mxu0 0.0
    %4736 = vmatpush1.msra.mxu0 %v4719
    %4737 = vmatprep.subr.mxu0 0.0
    %4738 = vmatpush1.msra.mxu0 %v4720
    %4739 = vmatprep.subr.mxu0 0.0
    %4740 = vmatpush1.msra.mxu0 %v4721
    %4741 = vmatprep.subr.mxu0 0.0
    %4742 = vmatpush1.msra.mxu0 0.0
    %4743 = vmatprep.subr.mxu0 0.0
    %4744 = vmatpush1.msra.mxu0 0.0
    %4745 = vmatprep.subr.mxu0 0.0
    %4746 = vmatpush1.msra.mxu0 0.0
    %4747 = vmatprep.subr.mxu0 0.0
    %4748 = vmatpush1.msra.mxu0 0.0
    %4749 = vmatprep.subr.mxu0 0.0
    %4750 = vmatpush1.msra.mxu0 0.0
    %4751 = vmatprep.subr.mxu0 0.0
    %4752 = vmatpush1.msra.mxu0 0.0
    %4753 = vmatprep.subr.mxu0 0.0
    %4754 = vmatpush1.msra.mxu0 0.0
    %4755 = vmatprep.subr.mxu0 0.0
    %4756 = vmatpush1.msra.mxu0 0.0
    %4757 = vmatprep.subr.mxu0 0.0
    %4758 = vmatpush1.msra.mxu0 0.0
    %4759 = vmatprep.subr.mxu0 0.0
    %4760 = vmatpush1.msra.mxu0 0.0
    %4761 = vmatprep.subr.mxu0 0.0
    %4762 = vmatpush1.msra.mxu0 0.0
    %4763 = vmatprep.subr.mxu0 0.0
    %4764 = vmatpush1.msra.mxu0 0.0
    %4765 = vmatprep.subr.mxu0 0.0
    %4766 = vmatpush1.msra.mxu0 0.0
    %4767 = vmatprep.subr.mxu0 0.0
    %4768 = vmatpush1.msra.mxu0 0.0
    %4769 = vmatprep.subr.mxu0 0.0
    %4770 = vmatpush1.msra.mxu0 0.0
    %4771 = vmatprep.subr.mxu0 0.0
    %4772 = vmatpush1.msra.mxu0 0.0
    %4773 = vmatprep.subr.mxu0 0.0
    %4774 = vmatpush1.msra.mxu0 0.0
    %4775 = vmatprep.subr.mxu0 0.0
    %4776 = vmatpush1.msra.mxu0 0.0
    %4777 = vmatprep.subr.mxu0 0.0
    %4778 = vmatpush1.msra.mxu0 0.0
    %4779 = vmatprep.subr.mxu0 0.0
    %4780 = vmatpush1.msra.mxu0 0.0
    %4781 = vmatprep.subr.mxu0 0.0
    %4782 = vmatpush1.msra.mxu0 0.0
    %4783 = vmatprep.subr.mxu0 0.0
    %4784 = vmatpush1.msra.mxu0 0.0
    %4785 = vmatprep.subr.mxu0 0.0
    %4786 = vmatpush1.msra.mxu0 0.0
    %4787 = vmatprep.subr.mxu0 0.0
    %4788 = vmatpush1.msra.mxu0 0.0
    %4789 = vmatprep.subr.mxu0 0.0
    %4790 = vmatpush1.msra.mxu0 0.0
    %4791 = vmatprep.subr.mxu0 0.0
    %4792 = vmatpush1.msra.mxu0 0.0
    %4793 = vmatprep.subr.mxu0 0.0
    %4794 = vmatpush1.msra.mxu0 0.0
    %4795 = vmatprep.subr.mxu0 0.0
    %4796 = vmatpush1.msra.mxu0 0.0
    %4797 = vmatprep.mubr.f32.mxu0 0.0
    %4798 = vmatmul.mubr.f32.gmra.mrb[0].mxu0 %v4731
    %v4799 = vpop.f32.mrb[0].mxu0
    %v4800 = vadd.f32 %v4727, %v4799
    %v4801 = vpop.f32.mrb[0].mxu0
    %4802 = vdwg.mxu0
    %4803 = vst [vmem:[#allocation17] sm:$0x3] %v4800
    // Predicated region
    $region82: #{forward.1} parent=1 // pred_check
      _
    $region83: #{forward.1} parent=1 // pred_check_branch
      %4805 = sbr.rel (0) target = $region85
    $region84: #{forward.1} parent=1 // pred_region
      %s4807 = ssub.s32 32, 32
      %4808 = vsyncadd [#allocation4], %s4807
      %s4810 = sshll.u32 [#allocation17], 4
      %s4811 = int_to_ptr.vmem [resolvable:$true] %s4810
      %4813 = dma.vmem_to_hbm [thread:$0]  %s4811, 32, %s11, [#allocation4]
    $region85: #{forward.1} parent=1 // pred_fallthru
      _
    // Predicated region
    $region86: #{forward.1} parent=1 // pred_check
      _
    $region87: #{forward.1} parent=1 // pred_check_branch
      %4815 = sbr.rel (0) target = $region89
    $region88: #{forward.1} parent=1 // pred_region
      %4816 = dma.done [#allocation4], 32
    $region89: #{forward.1} parent=1 // pred_fallthru
      _
    %4817 = vsyncpa [#allocation3], 1
    %4818 = vsyncpa [#allocation6], 1
    %4819 = vsyncpa [#allocation9], 1
    %4820 = vsyncpa [#allocation12], 1
    %4821 = vsyncpa [#allocation15], 1
    %4822 = vsyncpa [#allocation4], 1

</llo_original>
